<compile_context>
chip_gen: v6e
topology: v6e:2x2x1
jax: 0.10.0
libtpu: 0.0.40
codegen_flags: <defaults>
</compile_context>

<pallas_src>
import numpy as np

import jax
import jax.numpy as jnp
from jax.experimental import pallas as pl
from jax.experimental.pallas import tpu as pltpu


# --------------------------------------------------------------------------- #
# Fused whole-network kernel
# --------------------------------------------------------------------------- #

def _convnet_kernel(p1_ref, g2_ref, g3_ref,
                    w1_ref, b1_ref, w2_ref, b2_ref, w3_ref, b3_ref,
                    wf1_ref, bf1_ref, wf2_ref, bf2_ref, o_ref):
    """Whole ConvNetMaxPooling forward; all intermediates stay on-chip."""
    B = o_ref.shape[1]
    m2 = 16 * B          # conv2-block pooled grid size: B * 4 * 4
    tw2 = 4 * m2         # per-tap slab width for conv2 (4 pool positions)
    tw3 = 4 * B          # per-tap slab width for conv3 (4 pool positions)

    # ---- Block 1: conv1(3->4, k3 s2 p1) + ReLU + maxpool2x2 ------------------
    w1 = w1_ref[...]                         # (4, 27) bf16
    b1 = b1_ref[...]                         # (4, 1)  f32
    d1 = None
    for g in range(4):                       # g = pool-window position (i1, j1)
        a = jnp.dot(w1, p1_ref[g], preferred_element_type=jnp.float32) + b1
        a = jnp.maximum(a, 0.0)
        d1 = a if d1 is None else jnp.maximum(d1, a)
    d1 = d1.astype(jnp.bfloat16)             # (4, B*256), cols = (b, ph, pw) of pooled1

    # ---- Block 1 -> 2: im2col as a 0/1 selection matmul (stays in VMEM) ------
    pat2 = jnp.dot(d1, g2_ref[...], preferred_element_type=jnp.float32)
    pat2 = pat2.astype(jnp.bfloat16)         # (4, 9*4*m2), cols = (tap, pool-pos, b, ph2, pw2)

    # ---- Block 2: conv2(4->16) + ReLU + maxpool2x2 ---------------------------
    b2 = b2_ref[...]                         # (16, 1) f32
    acc2 = None
    for t in range(9):                       # tap accumulation over (kh, kw)
        s = pat2[:, t * tw2:(t + 1) * tw2]
        c = jnp.dot(w2_ref[t], s, preferred_element_type=jnp.float32)
        acc2 = c if acc2 is None else acc2 + c
    acc2 = jnp.maximum(acc2 + b2, 0.0)       # (16, 4*m2)
    pooled2 = None
    for g in range(4):
        sl = acc2[:, g * m2:(g + 1) * m2]
        pooled2 = sl if pooled2 is None else jnp.maximum(pooled2, sl)
    pooled2 = pooled2.astype(jnp.bfloat16)   # (16, m2), cols = (b, ph2, pw2)

    # ---- Block 2 -> 3: im2col selection matmul -------------------------------
    pat3 = jnp.dot(pooled2, g3_ref[...], preferred_element_type=jnp.float32)
    pat3 = pat3.astype(jnp.bfloat16)         # (16, 9*4*B), cols = (tap, pos, b)

    # ---- Block 3: conv3(16->32) + ReLU + maxpool2x2 (1x1 spatial out) --------
    b3 = b3_ref[...]                         # (32, 1) f32
    acc3 = None
    for t in range(9):
        s = pat3[:, t * tw3:(t + 1) * tw3]
        c = jnp.dot(w3_ref[t], s, preferred_element_type=jnp.float32)
        acc3 = c if acc3 is None else acc3 + c
    acc3 = jnp.maximum(acc3 + b3, 0.0)       # (32, 4*B)
    d3 = None
    for p in range(4):
        sl = acc3[:, p * B:(p + 1) * B]
        d3 = sl if d3 is None else jnp.maximum(d3, sl)   # (32, B) == flatten^T

    # ---- MLP head: fc1 -> ReLU -> fc2 (computed transposed, columns = batch) -
    h = jnp.dot(wf1_ref[...], d3.astype(jnp.bfloat16),
                preferred_element_type=jnp.float32) + bf1_ref[...]
    h = jnp.maximum(h, 0.0)                  # (1024, B), never leaves VMEM
    out = jnp.dot(wf2_ref[...], h.astype(jnp.bfloat16),
                  preferred_element_type=jnp.float32) + bf2_ref[...]
    o_ref[...] = out                         # (4, B) f32 logits^T


# --------------------------------------------------------------------------- #
# XLA-side prep (only the raw-input patch gather) and compile-time constants
# --------------------------------------------------------------------------- #

def _conv1_patches(x):
    """Pool-grouped im2col for conv1 on the raw input (the only XLA glue).

    Returns (4, 27, B*256) bf16 where axis 0 is the 2x2 pool-window position,
    axis 1 is cin*9 + kh*3 + kw (matches w1.reshape(4, 27)), and columns are
    ordered (b, ph, pw) over the 16x16 pooled grid.
    """
    B = x.shape[0]
    xp = jnp.pad(jnp.transpose(x, (0, 2, 3, 1)).astype(jnp.bfloat16),
                 ((0, 0), (1, 1), (1, 1), (0, 0)))            # (B, 66, 66, 3) NHWC
    # 25 distinct stride-4 taps; conv stride(2) x pool stride(2) => offsets 2*i + k.
    base = {}
    for a in range(5):
        for c in range(5):
            base[(a, c)] = xp[:, a:a + 61:4, c:c + 61:4, :]   # (B, 16, 16, 3)
    taps = []
    for i1 in range(2):
        for j1 in range(2):
            for kh in range(3):
                for kw in range(3):
                    taps.append(base[(2 * i1 + kh, 2 * j1 + kw)])
    p1 = jnp.stack(taps, axis=0)                              # (36, B, 16, 16, 3)
    p1 = p1.reshape(4, 9, B, 16, 16, 3)
    p1 = jnp.transpose(p1, (0, 5, 1, 2, 3, 4))                # (4, 3, 9, B, 16, 16)
    return p1.reshape(4, 27, B * 256)


def _gather_constants(B):
    """0/1 selection matrices implementing conv2/conv3 im2col (zero-padding via
    all-zero columns).  Built with numpy -> baked as compile-time constants."""
    g2 = np.zeros((B * 256, 9 * 4 * B * 16), np.float32)
    col = 0
    for kh in range(3):
        for kw in range(3):
            for i2 in range(2):
                for j2 in range(2):
                    for b in range(B):
                        for ph in range(4):
                            for pw in range(4):
                                r = 4 * ph + 2 * i2 + kh - 1
                                c = 4 * pw + 2 * j2 + kw - 1
                                if 0 <= r < 16 and 0 <= c < 16:
                                    g2[b * 256 + r * 16 + c, col] = 1.0
                                col += 1
    g3 = np.zeros((B * 16, 9 * 4 * B), np.float32)
    col = 0
    for kh in range(3):
        for kw in range(3):
            for oh in range(2):
                for ow in range(2):
                    for b in range(B):
                        r = 2 * oh + kh - 1
                        c = 2 * ow + kw - 1
                        if 0 <= r < 4 and 0 <= c < 4:
                            g3[b * 16 + r * 4 + c, col] = 1.0
                        col += 1
    return jnp.asarray(g2, jnp.bfloat16), jnp.asarray(g3, jnp.bfloat16)


def _full_spec(shape):
    n = len(shape)
    return pl.BlockSpec(shape, lambda i, _n=n: (0,) * _n)


# --------------------------------------------------------------------------- #
# Parameters (deterministic PyTorch-style init, pre-packed for the kernel)
# --------------------------------------------------------------------------- #

def init_params(key):
    def uniform(k, shape, fan_in):
        bound = 1.0 / np.sqrt(fan_in)
        return jax.random.uniform(k, shape, jnp.float32, -bound, bound)

    ks = jax.random.split(key, 10)
    w1 = uniform(ks[0], (4, 3, 3, 3), 27)
    b1 = uniform(ks[1], (4,), 27)
    w2 = uniform(ks[2], (16, 4, 3, 3), 36)
    b2 = uniform(ks[3], (16,), 36)
    w3 = uniform(ks[4], (32, 16, 3, 3), 144)
    b3 = uniform(ks[5], (32,), 144)
    wf1 = uniform(ks[6], (1024, 32), 32)      # PyTorch layout (out, in)
    bf1 = uniform(ks[7], (1024,), 32)
    wf2 = uniform(ks[8], (4, 1024), 1024)
    bf2 = uniform(ks[9], (4,), 1024)

    # Pre-pack into kernel-friendly layouts (hoisted out of the forward pass).
    return {
        "w1": w1.reshape(4, 27).astype(jnp.bfloat16),
        "b1": b1.reshape(4, 1),
        "w2": jnp.transpose(w2, (2, 3, 0, 1)).reshape(9, 16, 4).astype(jnp.bfloat16),
        "b2": b2.reshape(16, 1),
        "w3": jnp.transpose(w3, (2, 3, 0, 1)).reshape(9, 32, 16).astype(jnp.bfloat16),
        "b3": b3.reshape(32, 1),
        "wf1": wf1.astype(jnp.bfloat16),
        "bf1": bf1.reshape(1024, 1),
        "wf2": wf2.astype(jnp.bfloat16),
        "bf2": bf2.reshape(4, 1),
    }


# --------------------------------------------------------------------------- #
# Forward
# --------------------------------------------------------------------------- #

@jax.jit
def convnet_forward(x, params):
    B, C, H, W = x.shape
    assert (C, H, W) == (3, 64, 64), "fc1(32->1024) implies a 3x64x64 input"

    p1 = _conv1_patches(x)                       # (4, 27, B*256) bf16
    g2, g3 = _gather_constants(B)                # compile-time constants

    args = (p1, g2, g3,
            params["w1"], params["b1"], params["w2"], params["b2"],
            params["w3"], params["b3"],
            params["wf1"], params["bf1"], params["wf2"], params["bf2"])

    out_t = pl.pallas_call(
        _convnet_kernel,
        out_shape=jax.ShapeDtypeStruct((4, B), jnp.float32),
        grid=(1,),
        in_specs=[_full_spec(a.shape) for a in args],
        out_specs=_full_spec((4, B)),
        compiler_params=pltpu.CompilerParams(
            dimension_semantics=("arbitrary",)),
    )(*args)
    return out_t.T                               # (B, num_classes)


if __name__ == "__main__":
    key = jax.random.PRNGKey(0)
    k_params, k_x = jax.random.split(key)

    params = init_params(k_params)
    # 64x64 color input is implied by the module: 3 (conv s2 + pool 2) blocks take
    # 64 -> 1 spatially, giving 32 flattened features = fc1.in_features.
    x = jax.random.normal(k_x, (2, 3, 64, 64), dtype=jnp.float32)

    out = convnet_forward(x, params)
    out = jax.block_until_ready(out)
    assert out.shape == (2, 4), out.shape
    print("KERNEL_OK")
</pallas_src>

<mosaic_0001>
module attributes {stable_mosaic.version = 11 : i64} {
  func.func @_convnet_kernel(%arg0: i32, %arg1: memref<4x27x512xbf16, #tpu.memory_space<vmem>>, %arg2: memref<512x1152xbf16, #tpu.memory_space<vmem>>, %arg3: memref<32x72xbf16, #tpu.memory_space<vmem>>, %arg4: memref<4x27xbf16, #tpu.memory_space<vmem>>, %arg5: memref<4x1xf32, #tpu.memory_space<vmem>>, %arg6: memref<9x16x4xbf16, #tpu.memory_space<vmem>>, %arg7: memref<16x1xf32, #tpu.memory_space<vmem>>, %arg8: memref<9x32x16xbf16, #tpu.memory_space<vmem>>, %arg9: memref<32x1xf32, #tpu.memory_space<vmem>>, %arg10: memref<1024x32xbf16, #tpu.memory_space<vmem>>, %arg11: memref<1024x1xf32, #tpu.memory_space<vmem>>, %arg12: memref<4x1024xbf16, #tpu.memory_space<vmem>>, %arg13: memref<4x1xf32, #tpu.memory_space<vmem>>, %arg14: memref<4x2xf32, #tpu.memory_space<vmem>>) attributes {dimension_semantics = [#tpu.dimension_semantics<arbitrary>], iteration_bounds = array<i64: 1>, scalar_prefetch = 0 : i64, scratch_operands = 0 : i64, tpu.core_type = #tpu.core_type<tc>, window_params = [{pipeline_mode = #tpu.pipeline_mode<synchronous>, transform_indices = @transform_0, window_bounds = array<i64: 4, 27, 512>}, {pipeline_mode = #tpu.pipeline_mode<synchronous>, transform_indices = @transform_1, window_bounds = array<i64: 512, 1152>}, {pipeline_mode = #tpu.pipeline_mode<synchronous>, transform_indices = @transform_2, window_bounds = array<i64: 32, 72>}, {pipeline_mode = #tpu.pipeline_mode<synchronous>, transform_indices = @transform_3, window_bounds = array<i64: 4, 27>}, {pipeline_mode = #tpu.pipeline_mode<synchronous>, transform_indices = @transform_4, window_bounds = array<i64: 4, 1>}, {pipeline_mode = #tpu.pipeline_mode<synchronous>, transform_indices = @transform_5, window_bounds = array<i64: 9, 16, 4>}, {pipeline_mode = #tpu.pipeline_mode<synchronous>, transform_indices = @transform_6, window_bounds = array<i64: 16, 1>}, {pipeline_mode = #tpu.pipeline_mode<synchronous>, transform_indices = @transform_7, window_bounds = array<i64: 9, 32, 16>}, {pipeline_mode = #tpu.pipeline_mode<synchronous>, transform_indices = @transform_8, window_bounds = array<i64: 32, 1>}, {pipeline_mode = #tpu.pipeline_mode<synchronous>, transform_indices = @transform_9, window_bounds = array<i64: 1024, 32>}, {pipeline_mode = #tpu.pipeline_mode<synchronous>, transform_indices = @transform_10, window_bounds = array<i64: 1024, 1>}, {pipeline_mode = #tpu.pipeline_mode<synchronous>, transform_indices = @transform_11, window_bounds = array<i64: 4, 1024>}, {pipeline_mode = #tpu.pipeline_mode<synchronous>, transform_indices = @transform_12, window_bounds = array<i64: 4, 1>}, {pipeline_mode = #tpu.pipeline_mode<synchronous>, transform_indices = @transform_13, window_bounds = array<i64: 4, 2>}]} {
    %c0 = arith.constant 0 : index
    %c0_0 = arith.constant 0 : index
    %0 = vector.load %arg4[%c0, %c0_0] : memref<4x27xbf16, #tpu.memory_space<vmem>>, vector<4x27xbf16>
    %c0_1 = arith.constant 0 : index
    %c0_2 = arith.constant 0 : index
    %1 = vector.load %arg5[%c0_1, %c0_2] : memref<4x1xf32, #tpu.memory_space<vmem>>, vector<4x1xf32>
    %c0_3 = arith.constant 0 : index
    %c0_4 = arith.constant 0 : index
    %c0_5 = arith.constant 0 : index
    %2 = vector.load %arg1[%c0_3, %c0_4, %c0_5] : memref<4x27x512xbf16, #tpu.memory_space<vmem>>, vector<1x27x512xbf16>
    %3 = vector.shape_cast %2 : vector<1x27x512xbf16> to vector<27x512xbf16>
    %cst = arith.constant dense<0.000000e+00> : vector<4x512xf32>
    %4 = tpu.matmul %0, %3, %cst {dimension_numbers = #tpu.dot_dimension_numbers<[1], [0], [0], [1], [0, 0, 1, 1], [], []>} : vector<4x27xbf16>, vector<27x512xbf16>, vector<4x512xf32> -> vector<4x512xf32>
    %5 = vector.broadcast %1 : vector<4x1xf32> to vector<4x512xf32>
    %6 = arith.addf %4, %5 : vector<4x512xf32>
    %cst_6 = arith.constant 0.000000e+00 : f32
    %7 = vector.broadcast %cst_6 : f32 to vector<4x512xf32>
    %8 = arith.maximumf %6, %7 : vector<4x512xf32>
    %c1 = arith.constant 1 : index
    %c0_7 = arith.constant 0 : index
    %c0_8 = arith.constant 0 : index
    %9 = vector.load %arg1[%c1, %c0_7, %c0_8] : memref<4x27x512xbf16, #tpu.memory_space<vmem>>, vector<1x27x512xbf16>
    %10 = vector.shape_cast %9 : vector<1x27x512xbf16> to vector<27x512xbf16>
    %cst_9 = arith.constant dense<0.000000e+00> : vector<4x512xf32>
    %11 = tpu.matmul %0, %10, %cst_9 {dimension_numbers = #tpu.dot_dimension_numbers<[1], [0], [0], [1], [0, 0, 1, 1], [], []>} : vector<4x27xbf16>, vector<27x512xbf16>, vector<4x512xf32> -> vector<4x512xf32>
    %12 = vector.broadcast %1 : vector<4x1xf32> to vector<4x512xf32>
    %13 = arith.addf %11, %12 : vector<4x512xf32>
    %cst_10 = arith.constant 0.000000e+00 : f32
    %14 = vector.broadcast %cst_10 : f32 to vector<4x512xf32>
    %15 = arith.maximumf %13, %14 : vector<4x512xf32>
    %16 = arith.maximumf %8, %15 : vector<4x512xf32>
    %c2 = arith.constant 2 : index
    %c0_11 = arith.constant 0 : index
    %c0_12 = arith.constant 0 : index
    %17 = vector.load %arg1[%c2, %c0_11, %c0_12] : memref<4x27x512xbf16, #tpu.memory_space<vmem>>, vector<1x27x512xbf16>
    %18 = vector.shape_cast %17 : vector<1x27x512xbf16> to vector<27x512xbf16>
    %cst_13 = arith.constant dense<0.000000e+00> : vector<4x512xf32>
    %19 = tpu.matmul %0, %18, %cst_13 {dimension_numbers = #tpu.dot_dimension_numbers<[1], [0], [0], [1], [0, 0, 1, 1], [], []>} : vector<4x27xbf16>, vector<27x512xbf16>, vector<4x512xf32> -> vector<4x512xf32>
    %20 = vector.broadcast %1 : vector<4x1xf32> to vector<4x512xf32>
    %21 = arith.addf %19, %20 : vector<4x512xf32>
    %cst_14 = arith.constant 0.000000e+00 : f32
    %22 = vector.broadcast %cst_14 : f32 to vector<4x512xf32>
    %23 = arith.maximumf %21, %22 : vector<4x512xf32>
    %24 = arith.maximumf %16, %23 : vector<4x512xf32>
    %c3 = arith.constant 3 : index
    %c0_15 = arith.constant 0 : index
    %c0_16 = arith.constant 0 : index
    %25 = vector.load %arg1[%c3, %c0_15, %c0_16] : memref<4x27x512xbf16, #tpu.memory_space<vmem>>, vector<1x27x512xbf16>
    %26 = vector.shape_cast %25 : vector<1x27x512xbf16> to vector<27x512xbf16>
    %cst_17 = arith.constant dense<0.000000e+00> : vector<4x512xf32>
    %27 = tpu.matmul %0, %26, %cst_17 {dimension_numbers = #tpu.dot_dimension_numbers<[1], [0], [0], [1], [0, 0, 1, 1], [], []>} : vector<4x27xbf16>, vector<27x512xbf16>, vector<4x512xf32> -> vector<4x512xf32>
    %28 = vector.broadcast %1 : vector<4x1xf32> to vector<4x512xf32>
    %29 = arith.addf %27, %28 : vector<4x512xf32>
    %cst_18 = arith.constant 0.000000e+00 : f32
    %30 = vector.broadcast %cst_18 : f32 to vector<4x512xf32>
    %31 = arith.maximumf %29, %30 : vector<4x512xf32>
    %32 = arith.maximumf %24, %31 : vector<4x512xf32>
    %33 = arith.truncf %32 : vector<4x512xf32> to vector<4x512xbf16>
    %c0_19 = arith.constant 0 : index
    %c0_20 = arith.constant 0 : index
    %34 = vector.load %arg2[%c0_19, %c0_20] : memref<512x1152xbf16, #tpu.memory_space<vmem>>, vector<512x1152xbf16>
    %cst_21 = arith.constant dense<0.000000e+00> : vector<4x1152xf32>
    %35 = tpu.matmul %33, %34, %cst_21 {dimension_numbers = #tpu.dot_dimension_numbers<[1], [0], [0], [1], [0, 0, 1, 1], [], []>} : vector<4x512xbf16>, vector<512x1152xbf16>, vector<4x1152xf32> -> vector<4x1152xf32>
    %36 = arith.truncf %35 : vector<4x1152xf32> to vector<4x1152xbf16>
    %c0_22 = arith.constant 0 : index
    %c0_23 = arith.constant 0 : index
    %37 = vector.load %arg7[%c0_22, %c0_23] : memref<16x1xf32, #tpu.memory_space<vmem>>, vector<16x1xf32>
    %38 = vector.extract_strided_slice %36 {offsets = [0, 0], sizes = [4, 128], strides = [1, 1]} : vector<4x1152xbf16> to vector<4x128xbf16>
    %c0_24 = arith.constant 0 : index
    %c0_25 = arith.constant 0 : index
    %c0_26 = arith.constant 0 : index
    %39 = vector.load %arg6[%c0_24, %c0_25, %c0_26] : memref<9x16x4xbf16, #tpu.memory_space<vmem>>, vector<1x16x4xbf16>
    %40 = vector.shape_cast %39 : vector<1x16x4xbf16> to vector<16x4xbf16>
    %cst_27 = arith.constant dense<0.000000e+00> : vector<16x128xf32>
    %41 = tpu.matmul %40, %38, %cst_27 {dimension_numbers = #tpu.dot_dimension_numbers<[1], [0], [0], [1], [0, 0, 1, 1], [], []>} : vector<16x4xbf16>, vector<4x128xbf16>, vector<16x128xf32> -> vector<16x128xf32>
    %42 = vector.extract_strided_slice %36 {offsets = [0, 128], sizes = [4, 128], strides = [1, 1]} : vector<4x1152xbf16> to vector<4x128xbf16>
    %c1_28 = arith.constant 1 : index
    %c0_29 = arith.constant 0 : index
    %c0_30 = arith.constant 0 : index
    %43 = vector.load %arg6[%c1_28, %c0_29, %c0_30] : memref<9x16x4xbf16, #tpu.memory_space<vmem>>, vector<1x16x4xbf16>
    %44 = vector.shape_cast %43 : vector<1x16x4xbf16> to vector<16x4xbf16>
    %cst_31 = arith.constant dense<0.000000e+00> : vector<16x128xf32>
    %45 = tpu.matmul %44, %42, %cst_31 {dimension_numbers = #tpu.dot_dimension_numbers<[1], [0], [0], [1], [0, 0, 1, 1], [], []>} : vector<16x4xbf16>, vector<4x128xbf16>, vector<16x128xf32> -> vector<16x128xf32>
    %46 = arith.addf %41, %45 : vector<16x128xf32>
    %47 = vector.extract_strided_slice %36 {offsets = [0, 256], sizes = [4, 128], strides = [1, 1]} : vector<4x1152xbf16> to vector<4x128xbf16>
    %c2_32 = arith.constant 2 : index
    %c0_33 = arith.constant 0 : index
    %c0_34 = arith.constant 0 : index
    %48 = vector.load %arg6[%c2_32, %c0_33, %c0_34] : memref<9x16x4xbf16, #tpu.memory_space<vmem>>, vector<1x16x4xbf16>
    %49 = vector.shape_cast %48 : vector<1x16x4xbf16> to vector<16x4xbf16>
    %cst_35 = arith.constant dense<0.000000e+00> : vector<16x128xf32>
    %50 = tpu.matmul %49, %47, %cst_35 {dimension_numbers = #tpu.dot_dimension_numbers<[1], [0], [0], [1], [0, 0, 1, 1], [], []>} : vector<16x4xbf16>, vector<4x128xbf16>, vector<16x128xf32> -> vector<16x128xf32>
    %51 = arith.addf %46, %50 : vector<16x128xf32>
    %52 = vector.extract_strided_slice %36 {offsets = [0, 384], sizes = [4, 128], strides = [1, 1]} : vector<4x1152xbf16> to vector<4x128xbf16>
    %c3_36 = arith.constant 3 : index
    %c0_37 = arith.constant 0 : index
    %c0_38 = arith.constant 0 : index
    %53 = vector.load %arg6[%c3_36, %c0_37, %c0_38] : memref<9x16x4xbf16, #tpu.memory_space<vmem>>, vector<1x16x4xbf16>
    %54 = vector.shape_cast %53 : vector<1x16x4xbf16> to vector<16x4xbf16>
    %cst_39 = arith.constant dense<0.000000e+00> : vector<16x128xf32>
    %55 = tpu.matmul %54, %52, %cst_39 {dimension_numbers = #tpu.dot_dimension_numbers<[1], [0], [0], [1], [0, 0, 1, 1], [], []>} : vector<16x4xbf16>, vector<4x128xbf16>, vector<16x128xf32> -> vector<16x128xf32>
    %56 = arith.addf %51, %55 : vector<16x128xf32>
    %57 = vector.extract_strided_slice %36 {offsets = [0, 512], sizes = [4, 128], strides = [1, 1]} : vector<4x1152xbf16> to vector<4x128xbf16>
    %c4 = arith.constant 4 : index
    %c0_40 = arith.constant 0 : index
    %c0_41 = arith.constant 0 : index
    %58 = vector.load %arg6[%c4, %c0_40, %c0_41] : memref<9x16x4xbf16, #tpu.memory_space<vmem>>, vector<1x16x4xbf16>
    %59 = vector.shape_cast %58 : vector<1x16x4xbf16> to vector<16x4xbf16>
    %cst_42 = arith.constant dense<0.000000e+00> : vector<16x128xf32>
    %60 = tpu.matmul %59, %57, %cst_42 {dimension_numbers = #tpu.dot_dimension_numbers<[1], [0], [0], [1], [0, 0, 1, 1], [], []>} : vector<16x4xbf16>, vector<4x128xbf16>, vector<16x128xf32> -> vector<16x128xf32>
    %61 = arith.addf %56, %60 : vector<16x128xf32>
    %62 = vector.extract_strided_slice %36 {offsets = [0, 640], sizes = [4, 128], strides = [1, 1]} : vector<4x1152xbf16> to vector<4x128xbf16>
    %c5 = arith.constant 5 : index
    %c0_43 = arith.constant 0 : index
    %c0_44 = arith.constant 0 : index
    %63 = vector.load %arg6[%c5, %c0_43, %c0_44] : memref<9x16x4xbf16, #tpu.memory_space<vmem>>, vector<1x16x4xbf16>
    %64 = vector.shape_cast %63 : vector<1x16x4xbf16> to vector<16x4xbf16>
    %cst_45 = arith.constant dense<0.000000e+00> : vector<16x128xf32>
    %65 = tpu.matmul %64, %62, %cst_45 {dimension_numbers = #tpu.dot_dimension_numbers<[1], [0], [0], [1], [0, 0, 1, 1], [], []>} : vector<16x4xbf16>, vector<4x128xbf16>, vector<16x128xf32> -> vector<16x128xf32>
    %66 = arith.addf %61, %65 : vector<16x128xf32>
    %67 = vector.extract_strided_slice %36 {offsets = [0, 768], sizes = [4, 128], strides = [1, 1]} : vector<4x1152xbf16> to vector<4x128xbf16>
    %c6 = arith.constant 6 : index
    %c0_46 = arith.constant 0 : index
    %c0_47 = arith.constant 0 : index
    %68 = vector.load %arg6[%c6, %c0_46, %c0_47] : memref<9x16x4xbf16, #tpu.memory_space<vmem>>, vector<1x16x4xbf16>
    %69 = vector.shape_cast %68 : vector<1x16x4xbf16> to vector<16x4xbf16>
    %cst_48 = arith.constant dense<0.000000e+00> : vector<16x128xf32>
    %70 = tpu.matmul %69, %67, %cst_48 {dimension_numbers = #tpu.dot_dimension_numbers<[1], [0], [0], [1], [0, 0, 1, 1], [], []>} : vector<16x4xbf16>, vector<4x128xbf16>, vector<16x128xf32> -> vector<16x128xf32>
    %71 = arith.addf %66, %70 : vector<16x128xf32>
    %72 = vector.extract_strided_slice %36 {offsets = [0, 896], sizes = [4, 128], strides = [1, 1]} : vector<4x1152xbf16> to vector<4x128xbf16>
    %c7 = arith.constant 7 : index
    %c0_49 = arith.constant 0 : index
    %c0_50 = arith.constant 0 : index
    %73 = vector.load %arg6[%c7, %c0_49, %c0_50] : memref<9x16x4xbf16, #tpu.memory_space<vmem>>, vector<1x16x4xbf16>
    %74 = vector.shape_cast %73 : vector<1x16x4xbf16> to vector<16x4xbf16>
    %cst_51 = arith.constant dense<0.000000e+00> : vector<16x128xf32>
    %75 = tpu.matmul %74, %72, %cst_51 {dimension_numbers = #tpu.dot_dimension_numbers<[1], [0], [0], [1], [0, 0, 1, 1], [], []>} : vector<16x4xbf16>, vector<4x128xbf16>, vector<16x128xf32> -> vector<16x128xf32>
    %76 = arith.addf %71, %75 : vector<16x128xf32>
    %77 = vector.extract_strided_slice %36 {offsets = [0, 1024], sizes = [4, 128], strides = [1, 1]} : vector<4x1152xbf16> to vector<4x128xbf16>
    %c8 = arith.constant 8 : index
    %c0_52 = arith.constant 0 : index
    %c0_53 = arith.constant 0 : index
    %78 = vector.load %arg6[%c8, %c0_52, %c0_53] : memref<9x16x4xbf16, #tpu.memory_space<vmem>>, vector<1x16x4xbf16>
    %79 = vector.shape_cast %78 : vector<1x16x4xbf16> to vector<16x4xbf16>
    %cst_54 = arith.constant dense<0.000000e+00> : vector<16x128xf32>
    %80 = tpu.matmul %79, %77, %cst_54 {dimension_numbers = #tpu.dot_dimension_numbers<[1], [0], [0], [1], [0, 0, 1, 1], [], []>} : vector<16x4xbf16>, vector<4x128xbf16>, vector<16x128xf32> -> vector<16x128xf32>
    %81 = arith.addf %76, %80 : vector<16x128xf32>
    %82 = vector.broadcast %37 : vector<16x1xf32> to vector<16x128xf32>
    %83 = arith.addf %81, %82 : vector<16x128xf32>
    %cst_55 = arith.constant 0.000000e+00 : f32
    %84 = vector.broadcast %cst_55 : f32 to vector<16x128xf32>
    %85 = arith.maximumf %83, %84 : vector<16x128xf32>
    %86 = vector.extract_strided_slice %85 {offsets = [0, 0], sizes = [16, 32], strides = [1, 1]} : vector<16x128xf32> to vector<16x32xf32>
    %87 = vector.extract_strided_slice %85 {offsets = [0, 32], sizes = [16, 32], strides = [1, 1]} : vector<16x128xf32> to vector<16x32xf32>
    %88 = arith.maximumf %86, %87 : vector<16x32xf32>
    %89 = vector.extract_strided_slice %85 {offsets = [0, 64], sizes = [16, 32], strides = [1, 1]} : vector<16x128xf32> to vector<16x32xf32>
    %90 = arith.maximumf %88, %89 : vector<16x32xf32>
    %91 = vector.extract_strided_slice %85 {offsets = [0, 96], sizes = [16, 32], strides = [1, 1]} : vector<16x128xf32> to vector<16x32xf32>
    %92 = arith.maximumf %90, %91 : vector<16x32xf32>
    %93 = arith.truncf %92 : vector<16x32xf32> to vector<16x32xbf16>
    %c0_56 = arith.constant 0 : index
    %c0_57 = arith.constant 0 : index
    %94 = vector.load %arg3[%c0_56, %c0_57] : memref<32x72xbf16, #tpu.memory_space<vmem>>, vector<32x72xbf16>
    %cst_58 = arith.constant dense<0.000000e+00> : vector<16x72xf32>
    %95 = tpu.matmul %93, %94, %cst_58 {dimension_numbers = #tpu.dot_dimension_numbers<[1], [0], [0], [1], [0, 0, 1, 1], [], []>} : vector<16x32xbf16>, vector<32x72xbf16>, vector<16x72xf32> -> vector<16x72xf32>
    %96 = arith.truncf %95 : vector<16x72xf32> to vector<16x72xbf16>
    %c0_59 = arith.constant 0 : index
    %c0_60 = arith.constant 0 : index
    %97 = vector.load %arg9[%c0_59, %c0_60] : memref<32x1xf32, #tpu.memory_space<vmem>>, vector<32x1xf32>
    %98 = vector.extract_strided_slice %96 {offsets = [0, 0], sizes = [16, 8], strides = [1, 1]} : vector<16x72xbf16> to vector<16x8xbf16>
    %c0_61 = arith.constant 0 : index
    %c0_62 = arith.constant 0 : index
    %c0_63 = arith.constant 0 : index
    %99 = vector.load %arg8[%c0_61, %c0_62, %c0_63] : memref<9x32x16xbf16, #tpu.memory_space<vmem>>, vector<1x32x16xbf16>
    %100 = vector.shape_cast %99 : vector<1x32x16xbf16> to vector<32x16xbf16>
    %cst_64 = arith.constant dense<0.000000e+00> : vector<32x8xf32>
    %101 = tpu.matmul %100, %98, %cst_64 {dimension_numbers = #tpu.dot_dimension_numbers<[1], [0], [0], [1], [0, 0, 1, 1], [], []>} : vector<32x16xbf16>, vector<16x8xbf16>, vector<32x8xf32> -> vector<32x8xf32>
    %102 = vector.extract_strided_slice %96 {offsets = [0, 8], sizes = [16, 8], strides = [1, 1]} : vector<16x72xbf16> to vector<16x8xbf16>
    %c1_65 = arith.constant 1 : index
    %c0_66 = arith.constant 0 : index
    %c0_67 = arith.constant 0 : index
    %103 = vector.load %arg8[%c1_65, %c0_66, %c0_67] : memref<9x32x16xbf16, #tpu.memory_space<vmem>>, vector<1x32x16xbf16>
    %104 = vector.shape_cast %103 : vector<1x32x16xbf16> to vector<32x16xbf16>
    %cst_68 = arith.constant dense<0.000000e+00> : vector<32x8xf32>
    %105 = tpu.matmul %104, %102, %cst_68 {dimension_numbers = #tpu.dot_dimension_numbers<[1], [0], [0], [1], [0, 0, 1, 1], [], []>} : vector<32x16xbf16>, vector<16x8xbf16>, vector<32x8xf32> -> vector<32x8xf32>
    %106 = arith.addf %101, %105 : vector<32x8xf32>
    %107 = vector.extract_strided_slice %96 {offsets = [0, 16], sizes = [16, 8], strides = [1, 1]} : vector<16x72xbf16> to vector<16x8xbf16>
    %c2_69 = arith.constant 2 : index
    %c0_70 = arith.constant 0 : index
    %c0_71 = arith.constant 0 : index
    %108 = vector.load %arg8[%c2_69, %c0_70, %c0_71] : memref<9x32x16xbf16, #tpu.memory_space<vmem>>, vector<1x32x16xbf16>
    %109 = vector.shape_cast %108 : vector<1x32x16xbf16> to vector<32x16xbf16>
    %cst_72 = arith.constant dense<0.000000e+00> : vector<32x8xf32>
    %110 = tpu.matmul %109, %107, %cst_72 {dimension_numbers = #tpu.dot_dimension_numbers<[1], [0], [0], [1], [0, 0, 1, 1], [], []>} : vector<32x16xbf16>, vector<16x8xbf16>, vector<32x8xf32> -> vector<32x8xf32>
    %111 = arith.addf %106, %110 : vector<32x8xf32>
    %112 = vector.extract_strided_slice %96 {offsets = [0, 24], sizes = [16, 8], strides = [1, 1]} : vector<16x72xbf16> to vector<16x8xbf16>
    %c3_73 = arith.constant 3 : index
    %c0_74 = arith.constant 0 : index
    %c0_75 = arith.constant 0 : index
    %113 = vector.load %arg8[%c3_73, %c0_74, %c0_75] : memref<9x32x16xbf16, #tpu.memory_space<vmem>>, vector<1x32x16xbf16>
    %114 = vector.shape_cast %113 : vector<1x32x16xbf16> to vector<32x16xbf16>
    %cst_76 = arith.constant dense<0.000000e+00> : vector<32x8xf32>
    %115 = tpu.matmul %114, %112, %cst_76 {dimension_numbers = #tpu.dot_dimension_numbers<[1], [0], [0], [1], [0, 0, 1, 1], [], []>} : vector<32x16xbf16>, vector<16x8xbf16>, vector<32x8xf32> -> vector<32x8xf32>
    %116 = arith.addf %111, %115 : vector<32x8xf32>
    %117 = vector.extract_strided_slice %96 {offsets = [0, 32], sizes = [16, 8], strides = [1, 1]} : vector<16x72xbf16> to vector<16x8xbf16>
    %c4_77 = arith.constant 4 : index
    %c0_78 = arith.constant 0 : index
    %c0_79 = arith.constant 0 : index
    %118 = vector.load %arg8[%c4_77, %c0_78, %c0_79] : memref<9x32x16xbf16, #tpu.memory_space<vmem>>, vector<1x32x16xbf16>
    %119 = vector.shape_cast %118 : vector<1x32x16xbf16> to vector<32x16xbf16>
    %cst_80 = arith.constant dense<0.000000e+00> : vector<32x8xf32>
    %120 = tpu.matmul %119, %117, %cst_80 {dimension_numbers = #tpu.dot_dimension_numbers<[1], [0], [0], [1], [0, 0, 1, 1], [], []>} : vector<32x16xbf16>, vector<16x8xbf16>, vector<32x8xf32> -> vector<32x8xf32>
    %121 = arith.addf %116, %120 : vector<32x8xf32>
    %122 = vector.extract_strided_slice %96 {offsets = [0, 40], sizes = [16, 8], strides = [1, 1]} : vector<16x72xbf16> to vector<16x8xbf16>
    %c5_81 = arith.constant 5 : index
    %c0_82 = arith.constant 0 : index
    %c0_83 = arith.constant 0 : index
    %123 = vector.load %arg8[%c5_81, %c0_82, %c0_83] : memref<9x32x16xbf16, #tpu.memory_space<vmem>>, vector<1x32x16xbf16>
    %124 = vector.shape_cast %123 : vector<1x32x16xbf16> to vector<32x16xbf16>
    %cst_84 = arith.constant dense<0.000000e+00> : vector<32x8xf32>
    %125 = tpu.matmul %124, %122, %cst_84 {dimension_numbers = #tpu.dot_dimension_numbers<[1], [0], [0], [1], [0, 0, 1, 1], [], []>} : vector<32x16xbf16>, vector<16x8xbf16>, vector<32x8xf32> -> vector<32x8xf32>
    %126 = arith.addf %121, %125 : vector<32x8xf32>
    %127 = vector.extract_strided_slice %96 {offsets = [0, 48], sizes = [16, 8], strides = [1, 1]} : vector<16x72xbf16> to vector<16x8xbf16>
    %c6_85 = arith.constant 6 : index
    %c0_86 = arith.constant 0 : index
    %c0_87 = arith.constant 0 : index
    %128 = vector.load %arg8[%c6_85, %c0_86, %c0_87] : memref<9x32x16xbf16, #tpu.memory_space<vmem>>, vector<1x32x16xbf16>
    %129 = vector.shape_cast %128 : vector<1x32x16xbf16> to vector<32x16xbf16>
    %cst_88 = arith.constant dense<0.000000e+00> : vector<32x8xf32>
    %130 = tpu.matmul %129, %127, %cst_88 {dimension_numbers = #tpu.dot_dimension_numbers<[1], [0], [0], [1], [0, 0, 1, 1], [], []>} : vector<32x16xbf16>, vector<16x8xbf16>, vector<32x8xf32> -> vector<32x8xf32>
    %131 = arith.addf %126, %130 : vector<32x8xf32>
    %132 = vector.extract_strided_slice %96 {offsets = [0, 56], sizes = [16, 8], strides = [1, 1]} : vector<16x72xbf16> to vector<16x8xbf16>
    %c7_89 = arith.constant 7 : index
    %c0_90 = arith.constant 0 : index
    %c0_91 = arith.constant 0 : index
    %133 = vector.load %arg8[%c7_89, %c0_90, %c0_91] : memref<9x32x16xbf16, #tpu.memory_space<vmem>>, vector<1x32x16xbf16>
    %134 = vector.shape_cast %133 : vector<1x32x16xbf16> to vector<32x16xbf16>
    %cst_92 = arith.constant dense<0.000000e+00> : vector<32x8xf32>
    %135 = tpu.matmul %134, %132, %cst_92 {dimension_numbers = #tpu.dot_dimension_numbers<[1], [0], [0], [1], [0, 0, 1, 1], [], []>} : vector<32x16xbf16>, vector<16x8xbf16>, vector<32x8xf32> -> vector<32x8xf32>
    %136 = arith.addf %131, %135 : vector<32x8xf32>
    %137 = vector.extract_strided_slice %96 {offsets = [0, 64], sizes = [16, 8], strides = [1, 1]} : vector<16x72xbf16> to vector<16x8xbf16>
    %c8_93 = arith.constant 8 : index
    %c0_94 = arith.constant 0 : index
    %c0_95 = arith.constant 0 : index
    %138 = vector.load %arg8[%c8_93, %c0_94, %c0_95] : memref<9x32x16xbf16, #tpu.memory_space<vmem>>, vector<1x32x16xbf16>
    %139 = vector.shape_cast %138 : vector<1x32x16xbf16> to vector<32x16xbf16>
    %cst_96 = arith.constant dense<0.000000e+00> : vector<32x8xf32>
    %140 = tpu.matmul %139, %137, %cst_96 {dimension_numbers = #tpu.dot_dimension_numbers<[1], [0], [0], [1], [0, 0, 1, 1], [], []>} : vector<32x16xbf16>, vector<16x8xbf16>, vector<32x8xf32> -> vector<32x8xf32>
    %141 = arith.addf %136, %140 : vector<32x8xf32>
    %142 = vector.broadcast %97 : vector<32x1xf32> to vector<32x8xf32>
    %143 = arith.addf %141, %142 : vector<32x8xf32>
    %cst_97 = arith.constant 0.000000e+00 : f32
    %144 = vector.broadcast %cst_97 : f32 to vector<32x8xf32>
    %145 = arith.maximumf %143, %144 : vector<32x8xf32>
    %146 = vector.extract_strided_slice %145 {offsets = [0, 0], sizes = [32, 2], strides = [1, 1]} : vector<32x8xf32> to vector<32x2xf32>
    %147 = vector.extract_strided_slice %145 {offsets = [0, 2], sizes = [32, 2], strides = [1, 1]} : vector<32x8xf32> to vector<32x2xf32>
    %148 = arith.maximumf %146, %147 : vector<32x2xf32>
    %149 = vector.extract_strided_slice %145 {offsets = [0, 4], sizes = [32, 2], strides = [1, 1]} : vector<32x8xf32> to vector<32x2xf32>
    %150 = arith.maximumf %148, %149 : vector<32x2xf32>
    %151 = vector.extract_strided_slice %145 {offsets = [0, 6], sizes = [32, 2], strides = [1, 1]} : vector<32x8xf32> to vector<32x2xf32>
    %152 = arith.maximumf %150, %151 : vector<32x2xf32>
    %c0_98 = arith.constant 0 : index
    %c0_99 = arith.constant 0 : index
    %153 = vector.load %arg10[%c0_98, %c0_99] : memref<1024x32xbf16, #tpu.memory_space<vmem>>, vector<1024x32xbf16>
    %154 = arith.truncf %152 : vector<32x2xf32> to vector<32x2xbf16>
    %cst_100 = arith.constant dense<0.000000e+00> : vector<1024x2xf32>
    %155 = tpu.matmul %153, %154, %cst_100 {dimension_numbers = #tpu.dot_dimension_numbers<[1], [0], [0], [1], [0, 0, 1, 1], [], []>} : vector<1024x32xbf16>, vector<32x2xbf16>, vector<1024x2xf32> -> vector<1024x2xf32>
    %c0_101 = arith.constant 0 : index
    %c0_102 = arith.constant 0 : index
    %156 = vector.load %arg11[%c0_101, %c0_102] : memref<1024x1xf32, #tpu.memory_space<vmem>>, vector<1024x1xf32>
    %157 = vector.broadcast %156 : vector<1024x1xf32> to vector<1024x2xf32>
    %158 = arith.addf %155, %157 : vector<1024x2xf32>
    %cst_103 = arith.constant 0.000000e+00 : f32
    %159 = vector.broadcast %cst_103 : f32 to vector<1024x2xf32>
    %160 = arith.maximumf %158, %159 : vector<1024x2xf32>
    %c0_104 = arith.constant 0 : index
    %c0_105 = arith.constant 0 : index
    %161 = vector.load %arg12[%c0_104, %c0_105] : memref<4x1024xbf16, #tpu.memory_space<vmem>>, vector<4x1024xbf16>
    %162 = arith.truncf %160 : vector<1024x2xf32> to vector<1024x2xbf16>
    %cst_106 = arith.constant dense<0.000000e+00> : vector<4x2xf32>
    %163 = tpu.matmul %161, %162, %cst_106 {dimension_numbers = #tpu.dot_dimension_numbers<[1], [0], [0], [1], [0, 0, 1, 1], [], []>} : vector<4x1024xbf16>, vector<1024x2xbf16>, vector<4x2xf32> -> vector<4x2xf32>
    %c0_107 = arith.constant 0 : index
    %c0_108 = arith.constant 0 : index
    %164 = vector.load %arg13[%c0_107, %c0_108] : memref<4x1xf32, #tpu.memory_space<vmem>>, vector<4x1xf32>
    %165 = vector.broadcast %164 : vector<4x1xf32> to vector<4x2xf32>
    %166 = arith.addf %163, %165 : vector<4x2xf32>
    %c0_109 = arith.constant 0 : index
    %c0_110 = arith.constant 0 : index
    %167 = vector.load %arg14[%c0_109, %c0_110] : memref<4x2xf32, #tpu.memory_space<vmem>>, vector<4x2xf32>
    tpu.vector_store %arg14[%c0_109, %c0_110], %166 {strides = array<i32>} : memref<4x2xf32, #tpu.memory_space<vmem>>, vector<4x2xf32>,
    return
  }
  func.func @transform_0(%arg0: i32) -> (i32, i32, i32) {
    %c0_i32 = arith.constant 0 : i32
    %c0_i32_0 = arith.constant 0 : i32
    %c0_i32_1 = arith.constant 0 : i32
    %c0_i32_2 = arith.constant 0 : i32
    return %c0_i32, %c0_i32_0, %c0_i32_1 : i32, i32, i32
  }
  func.func @transform_1(%arg0: i32) -> (i32, i32) {
    %c0_i32 = arith.constant 0 : i32
    %c0_i32_0 = arith.constant 0 : i32
    %c0_i32_1 = arith.constant 0 : i32
    return %c0_i32, %c0_i32_0 : i32, i32
  }
  func.func @transform_2(%arg0: i32) -> (i32, i32) {
    %c0_i32 = arith.constant 0 : i32
    %c0_i32_0 = arith.constant 0 : i32
    %c0_i32_1 = arith.constant 0 : i32
    return %c0_i32, %c0_i32_0 : i32, i32
  }
  func.func @transform_3(%arg0: i32) -> (i32, i32) {
    %c0_i32 = arith.constant 0 : i32
    %c0_i32_0 = arith.constant 0 : i32
    %c0_i32_1 = arith.constant 0 : i32
    return %c0_i32, %c0_i32_0 : i32, i32
  }
  func.func @transform_4(%arg0: i32) -> (i32, i32) {
    %c0_i32 = arith.constant 0 : i32
    %c0_i32_0 = arith.constant 0 : i32
    %c0_i32_1 = arith.constant 0 : i32
    return %c0_i32, %c0_i32_0 : i32, i32
  }
  func.func @transform_5(%arg0: i32) -> (i32, i32, i32) {
    %c0_i32 = arith.constant 0 : i32
    %c0_i32_0 = arith.constant 0 : i32
    %c0_i32_1 = arith.constant 0 : i32
    %c0_i32_2 = arith.constant 0 : i32
    return %c0_i32, %c0_i32_0, %c0_i32_1 : i32, i32, i32
  }
  func.func @transform_6(%arg0: i32) -> (i32, i32) {
    %c0_i32 = arith.constant 0 : i32
    %c0_i32_0 = arith.constant 0 : i32
    %c0_i32_1 = arith.constant 0 : i32
    return %c0_i32, %c0_i32_0 : i32, i32
  }
  func.func @transform_7(%arg0: i32) -> (i32, i32, i32) {
    %c0_i32 = arith.constant 0 : i32
    %c0_i32_0 = arith.constant 0 : i32
    %c0_i32_1 = arith.constant 0 : i32
    %c0_i32_2 = arith.constant 0 : i32
    return %c0_i32, %c0_i32_0, %c0_i32_1 : i32, i32, i32
  }
  func.func @transform_8(%arg0: i32) -> (i32, i32) {
    %c0_i32 = arith.constant 0 : i32
    %c0_i32_0 = arith.constant 0 : i32
    %c0_i32_1 = arith.constant 0 : i32
    return %c0_i32, %c0_i32_0 : i32, i32
  }
  func.func @transform_9(%arg0: i32) -> (i32, i32) {
    %c0_i32 = arith.constant 0 : i32
    %c0_i32_0 = arith.constant 0 : i32
    %c0_i32_1 = arith.constant 0 : i32
    return %c0_i32, %c0_i32_0 : i32, i32
  }
  func.func @transform_10(%arg0: i32) -> (i32, i32) {
    %c0_i32 = arith.constant 0 : i32
    %c0_i32_0 = arith.constant 0 : i32
    %c0_i32_1 = arith.constant 0 : i32
    return %c0_i32, %c0_i32_0 : i32, i32
  }
  func.func @transform_11(%arg0: i32) -> (i32, i32) {
    %c0_i32 = arith.constant 0 : i32
    %c0_i32_0 = arith.constant 0 : i32
    %c0_i32_1 = arith.constant 0 : i32
    return %c0_i32, %c0_i32_0 : i32, i32
  }
  func.func @transform_12(%arg0: i32) -> (i32, i32) {
    %c0_i32 = arith.constant 0 : i32
    %c0_i32_0 = arith.constant 0 : i32
    %c0_i32_1 = arith.constant 0 : i32
    return %c0_i32, %c0_i32_0 : i32, i32
  }
  func.func @transform_13(%arg0: i32) -> (i32, i32) {
    %c0_i32 = arith.constant 0 : i32
    %c0_i32_0 = arith.constant 0 : i32
    %c0_i32_1 = arith.constant 0 : i32
    return %c0_i32, %c0_i32_0 : i32, i32
  }
}

</mosaic_0001>

<llo_original>
// kernel: convnet_forward.1
$region0: #{convnet_forward.1}
  #allocation0 [shape = 'u32[]', space=smem, size = 0x4, offset = 0x4, fixed_abs, tag = 'smem constant byte address 0x4 - core index']
  #allocation1 [shape = 'u32[144,128]{1,0:T(1,128)}', space=vmem, size = 0x12000, scoped, tag = 'internal scratch']
  %s0 = inlined_call_operand.vmem [shape: bf16[4,27,512], index: 0, kind: input, shape index: {}]
  %s1 = inlined_call_operand.vmem [shape: bf16[512,1152], index: 1, kind: input, shape index: {}]
  %s2 = inlined_call_operand.vmem [shape: bf16[32,72], index: 2, kind: input, shape index: {}]
  %s3 = inlined_call_operand.vmem [shape: bf16[4,27], index: 3, kind: input, shape index: {}]
  %s4 = inlined_call_operand.vmem [shape: f32[4,1], index: 4, kind: input, shape index: {}]
  %s5 = inlined_call_operand.vmem [shape: bf16[9,16,4], index: 5, kind: input, shape index: {}]
  %s6 = inlined_call_operand.vmem [shape: f32[16,1], index: 6, kind: input, shape index: {}]
  %s7 = inlined_call_operand.vmem [shape: bf16[9,32,16], index: 7, kind: input, shape index: {}]
  %s8 = inlined_call_operand.vmem [shape: f32[32,1], index: 8, kind: input, shape index: {}]
  %s9 = inlined_call_operand.vmem [shape: bf16[1024,32], index: 9, kind: input, shape index: {}]
  %s10 = inlined_call_operand.vmem [shape: f32[1024,1], index: 10, kind: input, shape index: {}]
  %s11 = inlined_call_operand.vmem [shape: bf16[4,1024], index: 11, kind: input, shape index: {}]
  %s12 = inlined_call_operand.vmem [shape: f32[4,1], index: 12, kind: input, shape index: {}]
  %s13 = inlined_call_operand.vmem [shape: f32[4,2], index: 13, kind: output, shape index: {}]
  %s14 = sld [smem:[#allocation0]]
  $region62: #{convnet_forward.1} parent=0
    _
  %s16 = ssub.s32 1, %s14
  %s17 = scalar_select 0, %s16, %s14
  // Predicated region
  $region2: #{convnet_forward.1} parent=0 // pred_check
    _
  $region3: #{convnet_forward.1} parent=0 // pred_check_branch
    %19 = sbr.rel (0) target = $region5
  $region4: #{convnet_forward.1} parent=0 // pred_region
    _
  $region5: #{convnet_forward.1} parent=0 // pred_fallthru
    _
  // Predicated region
  $region6: #{convnet_forward.1} parent=0 // pred_check
    _
  $region7: #{convnet_forward.1} parent=0 // pred_check_branch
    %21 = sbr.rel (0) target = $region9
  $region8: #{convnet_forward.1} parent=0 // pred_region
    _
  $region9: #{convnet_forward.1} parent=0 // pred_fallthru
    _
  // Predicated region
  $region10: #{convnet_forward.1} parent=0 // pred_check
    _
  $region11: #{convnet_forward.1} parent=0 // pred_check_branch
    %23 = sbr.rel (0) target = $region13
  $region12: #{convnet_forward.1} parent=0 // pred_region
    _
  $region13: #{convnet_forward.1} parent=0 // pred_fallthru
    _
  // Predicated region
  $region14: #{convnet_forward.1} parent=0 // pred_check
    _
  $region15: #{convnet_forward.1} parent=0 // pred_check_branch
    %25 = sbr.rel (0) target = $region17
  $region16: #{convnet_forward.1} parent=0 // pred_region
    _
  $region17: #{convnet_forward.1} parent=0 // pred_fallthru
    _
  // Predicated region
  $region18: #{convnet_forward.1} parent=0 // pred_check
    _
  $region19: #{convnet_forward.1} parent=0 // pred_check_branch
    %27 = sbr.rel (0) target = $region21
  $region20: #{convnet_forward.1} parent=0 // pred_region
    _
  $region21: #{convnet_forward.1} parent=0 // pred_fallthru
    _
  // Predicated region
  $region22: #{convnet_forward.1} parent=0 // pred_check
    _
  $region23: #{convnet_forward.1} parent=0 // pred_check_branch
    %29 = sbr.rel (0) target = $region25
  $region24: #{convnet_forward.1} parent=0 // pred_region
    _
  $region25: #{convnet_forward.1} parent=0 // pred_fallthru
    _
  // Predicated region
  $region26: #{convnet_forward.1} parent=0 // pred_check
    _
  $region27: #{convnet_forward.1} parent=0 // pred_check_branch
    %31 = sbr.rel (0) target = $region29
  $region28: #{convnet_forward.1} parent=0 // pred_region
    _
  $region29: #{convnet_forward.1} parent=0 // pred_fallthru
    _
  // Predicated region
  $region30: #{convnet_forward.1} parent=0 // pred_check
    _
  $region31: #{convnet_forward.1} parent=0 // pred_check_branch
    %33 = sbr.rel (0) target = $region33
  $region32: #{convnet_forward.1} parent=0 // pred_region
    _
  $region33: #{convnet_forward.1} parent=0 // pred_fallthru
    _
  // Predicated region
  $region34: #{convnet_forward.1} parent=0 // pred_check
    _
  $region35: #{convnet_forward.1} parent=0 // pred_check_branch
    %35 = sbr.rel (0) target = $region37
  $region36: #{convnet_forward.1} parent=0 // pred_region
    _
  $region37: #{convnet_forward.1} parent=0 // pred_fallthru
    _
  // Predicated region
  $region38: #{convnet_forward.1} parent=0 // pred_check
    _
  $region39: #{convnet_forward.1} parent=0 // pred_check_branch
    %37 = sbr.rel (0) target = $region41
  $region40: #{convnet_forward.1} parent=0 // pred_region
    _
  $region41: #{convnet_forward.1} parent=0 // pred_fallthru
    _
  // Predicated region
  $region42: #{convnet_forward.1} parent=0 // pred_check
    _
  $region43: #{convnet_forward.1} parent=0 // pred_check_branch
    %39 = sbr.rel (0) target = $region45
  $region44: #{convnet_forward.1} parent=0 // pred_region
    _
  $region45: #{convnet_forward.1} parent=0 // pred_fallthru
    _
  // Predicated region
  $region46: #{convnet_forward.1} parent=0 // pred_check
    _
  $region47: #{convnet_forward.1} parent=0 // pred_check_branch
    %41 = sbr.rel (0) target = $region49
  $region48: #{convnet_forward.1} parent=0 // pred_region
    _
  $region49: #{convnet_forward.1} parent=0 // pred_fallthru
    _
  // Predicated region
  $region50: #{convnet_forward.1} parent=0 // pred_check
    _
  $region51: #{convnet_forward.1} parent=0 // pred_check_branch
    %43 = sbr.rel (0) target = $region53
  $region52: #{convnet_forward.1} parent=0 // pred_region
    _
  $region53: #{convnet_forward.1} parent=0 // pred_fallthru
    _
  %v45 = vld [vmem:[%s3] sm:$0x3]
  %v46 = vld [vmem:[%s4] sm:$0xf]
  %v47 = vld [vmem:[%s0] sm:$0xff]
  %v48 = vld [vmem:[%s0 + $0x8] sm:$0xff]
  %v49 = vld [vmem:[%s0 + $0x10] sm:$0xff]
  %v50 = vld [vmem:[%s0 + $0x18] sm:$0xff]
  %v51 = vld [vmem:[%s0 + $0x20] sm:$0xff]
  %v52 = vld [vmem:[%s0 + $0x28] sm:$0xff]
  %v53 = vld [vmem:[%s0 + $0x30] sm:$0x33]
  %v54 = vld [vmem:[%s0 + $0x38] sm:$0x33]
  %56 = vset.pattern.permute.xlu0 0
  %57 = vperm.xlu0 %56, %v46
  %v58 = vpop.permute.xlu0 %57
  %v68 = vunpack.c.l.b16 %v47
  %v69 = vunpack.c.h.b16 %v47
  %v70 = vunpack.c.l.b16 %v48
  %v71 = vunpack.c.h.b16 %v48
  %v72 = vunpack.c.l.b16 %v49
  %v73 = vunpack.c.h.b16 %v49
  %v74 = vunpack.c.l.b16 %v50
  %v75 = vunpack.c.h.b16 %v50
  %v76 = vunpack.c.l.b16 %v51
  %v77 = vunpack.c.h.b16 %v51
  %v78 = vunpack.c.l.b16 %v52
  %v79 = vunpack.c.h.b16 %v52
  %v80 = vunpack.c.l.b16 %v53
  %v81 = vunpack.c.h.b16 %v53
  %v82 = vunpack.c.l.b16 %v54
  %v83 = vunpack.c.h.b16 %v54
  %v84 = vpack.c.b16 %v72, %v68
  %v85 = vpack.c.b16 %v73, %v69
  %v86 = vpack.c.b16 %v74, %v70
  %v87 = vpack.c.b16 %v75, %v71
  %v88 = vpack.c.b16 %v80, %v76
  %v89 = vpack.c.b16 %v81, %v77
  %v90 = vpack.c.b16 %v82, %v78
  %v91 = vpack.c.b16 %v83, %v79
  %vm96 = vcmask 220160
  %v98 = vsel %vm96, %v45, 0
  %vm100 = vcmask 1044480
  %vm101 = vcmask 1045504
  %v102 = vsel %vm100, 4294967295, 65535
  %v103 = vsel %vm101, %v102, 0
  %v105 = vand.u32 %v88, %v103
  %v108 = vand.u32 %v89, %v103
  %v111 = vand.u32 %v90, %v103
  %v114 = vand.u32 %v91, %v103
  %116 = vmatprep.subr.bf16.mxu0 0
  %117 = vmatpush1.bf16.msra.mxu0 0
  %118 = vmatprep.subr.bf16.mxu0 0
  %119 = vmatpush1.bf16.msra.mxu0 0
  %120 = vmatprep.subr.bf16.mxu0 0
  %121 = vmatpush1.bf16.msra.mxu0 0
  %122 = vmatprep.subr.bf16.mxu0 0
  %123 = vmatpush1.bf16.msra.mxu0 0
  %124 = vmatprep.subr.bf16.mxu0 0
  %125 = vmatpush1.bf16.msra.mxu0 0
  %126 = vmatprep.subr.bf16.mxu0 0
  %127 = vmatpush1.bf16.msra.mxu0 0
  %128 = vmatprep.subr.bf16.mxu0 %v108
  %129 = vmatpush1.bf16.msra.mxu0 %v105
  %130 = vmatprep.subr.bf16.mxu0 %v85
  %131 = vmatpush1.bf16.msra.mxu0 %v84
  %132 = vmatprep.subr.bf16.mxu0 0
  %133 = vmatpush2.bf16.msra.mxu0 0
  %134 = vmatprep.subr.bf16.mxu0 0
  %135 = vmatpush2.bf16.msra.mxu0 0
  %136 = vmatprep.subr.bf16.mxu0 0
  %137 = vmatpush2.bf16.msra.mxu0 0
  %138 = vmatprep.subr.bf16.mxu0 0
  %139 = vmatpush2.bf16.msra.mxu0 0
  %140 = vmatprep.subr.bf16.mxu0 0
  %141 = vmatpush2.bf16.msra.mxu0 0
  %142 = vmatprep.subr.bf16.mxu0 0
  %143 = vmatpush2.bf16.msra.mxu0 0
  %144 = vmatprep.subr.bf16.mxu0 0
  %145 = vmatpush2.bf16.msra.mxu0 0
  %146 = vmatprep.subr.bf16.mxu0 0
  %147 = vmatpush2.bf16.msra.mxu0 0
  %148 = vmatprep.mubr.bf16.mxu0 0
  %149 = vmatmul.mubr.bf16.gmra.mxu0 %v98
  %v150 = vpop.f32.mrf.mxu0
  %v151 = vadd.f32 %v58, %v150
  %v152 = vpop.f32.mrf.mxu0
  %v153 = vadd.f32 %v58, %v152
  %v154 = vpop.f32.mrf.mxu0
  %v155 = vpop.f32.mrf.mxu0
  %156 = vdwg.mxu0
  %157 = vmatprep.subr.bf16.mxu0 0
  %158 = vmatpush1.bf16.msra.mxu0 0
  %159 = vmatprep.subr.bf16.mxu0 0
  %160 = vmatpush1.bf16.msra.mxu0 0
  %161 = vmatprep.subr.bf16.mxu0 0
  %162 = vmatpush1.bf16.msra.mxu0 0
  %163 = vmatprep.subr.bf16.mxu0 0
  %164 = vmatpush1.bf16.msra.mxu0 0
  %165 = vmatprep.subr.bf16.mxu0 0
  %166 = vmatpush1.bf16.msra.mxu0 0
  %167 = vmatprep.subr.bf16.mxu0 0
  %168 = vmatpush1.bf16.msra.mxu0 0
  %169 = vmatprep.subr.bf16.mxu0 %v114
  %170 = vmatpush1.bf16.msra.mxu0 %v111
  %171 = vmatprep.subr.bf16.mxu0 %v87
  %172 = vmatpush1.bf16.msra.mxu0 %v86
  %173 = vmatprep.subr.bf16.mxu0 0
  %174 = vmatpush2.bf16.msra.mxu0 0
  %175 = vmatprep.subr.bf16.mxu0 0
  %176 = vmatpush2.bf16.msra.mxu0 0
  %177 = vmatprep.subr.bf16.mxu0 0
  %178 = vmatpush2.bf16.msra.mxu0 0
  %179 = vmatprep.subr.bf16.mxu0 0
  %180 = vmatpush2.bf16.msra.mxu0 0
  %181 = vmatprep.subr.bf16.mxu0 0
  %182 = vmatpush2.bf16.msra.mxu0 0
  %183 = vmatprep.subr.bf16.mxu0 0
  %184 = vmatpush2.bf16.msra.mxu0 0
  %185 = vmatprep.subr.bf16.mxu0 0
  %186 = vmatpush2.bf16.msra.mxu0 0
  %187 = vmatprep.subr.bf16.mxu0 0
  %188 = vmatpush2.bf16.msra.mxu0 0
  %189 = vmatprep.mubr.bf16.mxu0 0
  %190 = vmatmul.mubr.bf16.gmra.mxu0 %v98
  %v191 = vpop.f32.mrf.mxu0
  %v192 = vadd.f32 %v58, %v191
  %v193 = vpop.f32.mrf.mxu0
  %v194 = vadd.f32 %v58, %v193
  %v195 = vpop.f32.mrf.mxu0
  %v196 = vpop.f32.mrf.mxu0
  %197 = vdwg.mxu0
  %v198 = vmax.f32 %v151, 0.0
  %v199 = vmax.f32 %v153, 0.0
  %v200 = vmax.f32 %v192, 0.0
  %v201 = vmax.f32 %v194, 0.0
  %s202 = scalar_lea.vmem %s0, 64
  %v203 = vld [vmem:[%s202] sm:$0xff]
  %v204 = vld [vmem:[%s202 + $0x8] sm:$0xff]
  %v205 = vld [vmem:[%s202 + $0x10] sm:$0xff]
  %v206 = vld [vmem:[%s202 + $0x18] sm:$0xff]
  %v207 = vld [vmem:[%s202 + $0x20] sm:$0xff]
  %v208 = vld [vmem:[%s202 + $0x28] sm:$0xff]
  %v209 = vld [vmem:[%s202 + $0x30] sm:$0x33]
  %v210 = vld [vmem:[%s202 + $0x38] sm:$0x33]
  %v219 = vunpack.c.l.b16 %v203
  %v220 = vunpack.c.h.b16 %v203
  %v221 = vunpack.c.l.b16 %v204
  %v222 = vunpack.c.h.b16 %v204
  %v223 = vunpack.c.l.b16 %v205
  %v224 = vunpack.c.h.b16 %v205
  %v225 = vunpack.c.l.b16 %v206
  %v226 = vunpack.c.h.b16 %v206
  %v227 = vunpack.c.l.b16 %v207
  %v228 = vunpack.c.h.b16 %v207
  %v229 = vunpack.c.l.b16 %v208
  %v230 = vunpack.c.h.b16 %v208
  %v231 = vunpack.c.l.b16 %v209
  %v232 = vunpack.c.h.b16 %v209
  %v233 = vunpack.c.l.b16 %v210
  %v234 = vunpack.c.h.b16 %v210
  %v235 = vpack.c.b16 %v223, %v219
  %v236 = vpack.c.b16 %v224, %v220
  %v237 = vpack.c.b16 %v225, %v221
  %v238 = vpack.c.b16 %v226, %v222
  %v239 = vpack.c.b16 %v231, %v227
  %v240 = vpack.c.b16 %v232, %v228
  %v241 = vpack.c.b16 %v233, %v229
  %v242 = vpack.c.b16 %v234, %v230
  %v248 = vand.u32 %v239, %v103
  %v251 = vand.u32 %v240, %v103
  %v254 = vand.u32 %v241, %v103
  %v257 = vand.u32 %v242, %v103
  %259 = vmatprep.subr.bf16.mxu0 0
  %260 = vmatpush1.bf16.msra.mxu0 0
  %261 = vmatprep.subr.bf16.mxu0 0
  %262 = vmatpush1.bf16.msra.mxu0 0
  %263 = vmatprep.subr.bf16.mxu0 0
  %264 = vmatpush1.bf16.msra.mxu0 0
  %265 = vmatprep.subr.bf16.mxu0 0
  %266 = vmatpush1.bf16.msra.mxu0 0
  %267 = vmatprep.subr.bf16.mxu0 0
  %268 = vmatpush1.bf16.msra.mxu0 0
  %269 = vmatprep.subr.bf16.mxu0 0
  %270 = vmatpush1.bf16.msra.mxu0 0
  %271 = vmatprep.subr.bf16.mxu0 %v251
  %272 = vmatpush1.bf16.msra.mxu0 %v248
  %273 = vmatprep.subr.bf16.mxu0 %v236
  %274 = vmatpush1.bf16.msra.mxu0 %v235
  %275 = vmatprep.subr.bf16.mxu0 0
  %276 = vmatpush2.bf16.msra.mxu0 0
  %277 = vmatprep.subr.bf16.mxu0 0
  %278 = vmatpush2.bf16.msra.mxu0 0
  %279 = vmatprep.subr.bf16.mxu0 0
  %280 = vmatpush2.bf16.msra.mxu0 0
  %281 = vmatprep.subr.bf16.mxu0 0
  %282 = vmatpush2.bf16.msra.mxu0 0
  %283 = vmatprep.subr.bf16.mxu0 0
  %284 = vmatpush2.bf16.msra.mxu0 0
  %285 = vmatprep.subr.bf16.mxu0 0
  %286 = vmatpush2.bf16.msra.mxu0 0
  %287 = vmatprep.subr.bf16.mxu0 0
  %288 = vmatpush2.bf16.msra.mxu0 0
  %289 = vmatprep.subr.bf16.mxu0 0
  %290 = vmatpush2.bf16.msra.mxu0 0
  %291 = vmatprep.mubr.bf16.mxu0 0
  %292 = vmatmul.mubr.bf16.gmra.mxu0 %v98
  %v293 = vpop.f32.mrf.mxu0
  %v294 = vadd.f32 %v58, %v293
  %v295 = vpop.f32.mrf.mxu0
  %v296 = vadd.f32 %v58, %v295
  %v297 = vpop.f32.mrf.mxu0
  %v298 = vpop.f32.mrf.mxu0
  %299 = vdwg.mxu0
  %300 = vmatprep.subr.bf16.mxu0 0
  %301 = vmatpush1.bf16.msra.mxu0 0
  %302 = vmatprep.subr.bf16.mxu0 0
  %303 = vmatpush1.bf16.msra.mxu0 0
  %304 = vmatprep.subr.bf16.mxu0 0
  %305 = vmatpush1.bf16.msra.mxu0 0
  %306 = vmatprep.subr.bf16.mxu0 0
  %307 = vmatpush1.bf16.msra.mxu0 0
  %308 = vmatprep.subr.bf16.mxu0 0
  %309 = vmatpush1.bf16.msra.mxu0 0
  %310 = vmatprep.subr.bf16.mxu0 0
  %311 = vmatpush1.bf16.msra.mxu0 0
  %312 = vmatprep.subr.bf16.mxu0 %v257
  %313 = vmatpush1.bf16.msra.mxu0 %v254
  %314 = vmatprep.subr.bf16.mxu0 %v238
  %315 = vmatpush1.bf16.msra.mxu0 %v237
  %316 = vmatprep.subr.bf16.mxu0 0
  %317 = vmatpush2.bf16.msra.mxu0 0
  %318 = vmatprep.subr.bf16.mxu0 0
  %319 = vmatpush2.bf16.msra.mxu0 0
  %320 = vmatprep.subr.bf16.mxu0 0
  %321 = vmatpush2.bf16.msra.mxu0 0
  %322 = vmatprep.subr.bf16.mxu0 0
  %323 = vmatpush2.bf16.msra.mxu0 0
  %324 = vmatprep.subr.bf16.mxu0 0
  %325 = vmatpush2.bf16.msra.mxu0 0
  %326 = vmatprep.subr.bf16.mxu0 0
  %327 = vmatpush2.bf16.msra.mxu0 0
  %328 = vmatprep.subr.bf16.mxu0 0
  %329 = vmatpush2.bf16.msra.mxu0 0
  %330 = vmatprep.subr.bf16.mxu0 0
  %331 = vmatpush2.bf16.msra.mxu0 0
  %332 = vmatprep.mubr.bf16.mxu0 0
  %333 = vmatmul.mubr.bf16.gmra.mxu0 %v98
  %v334 = vpop.f32.mrf.mxu0
  %v335 = vadd.f32 %v58, %v334
  %v336 = vpop.f32.mrf.mxu0
  %v337 = vadd.f32 %v58, %v336
  %v338 = vpop.f32.mrf.mxu0
  %v339 = vpop.f32.mrf.mxu0
  %340 = vdwg.mxu0
  %v341 = vmax.f32 %v294, 0.0
  %v342 = vmax.f32 %v296, 0.0
  %v343 = vmax.f32 %v335, 0.0
  %v344 = vmax.f32 %v337, 0.0
  %v345 = vmax.f32 %v198, %v341
  %v346 = vmax.f32 %v199, %v342
  %v347 = vmax.f32 %v200, %v343
  %v348 = vmax.f32 %v201, %v344
  %s349 = scalar_lea.vmem %s0, 128
  %v350 = vld [vmem:[%s349] sm:$0xff]
  %v351 = vld [vmem:[%s349 + $0x8] sm:$0xff]
  %v352 = vld [vmem:[%s349 + $0x10] sm:$0xff]
  %v353 = vld [vmem:[%s349 + $0x18] sm:$0xff]
  %v354 = vld [vmem:[%s349 + $0x20] sm:$0xff]
  %v355 = vld [vmem:[%s349 + $0x28] sm:$0xff]
  %v356 = vld [vmem:[%s349 + $0x30] sm:$0x33]
  %v357 = vld [vmem:[%s349 + $0x38] sm:$0x33]
  %v366 = vunpack.c.l.b16 %v350
  %v367 = vunpack.c.h.b16 %v350
  %v368 = vunpack.c.l.b16 %v351
  %v369 = vunpack.c.h.b16 %v351
  %v370 = vunpack.c.l.b16 %v352
  %v371 = vunpack.c.h.b16 %v352
  %v372 = vunpack.c.l.b16 %v353
  %v373 = vunpack.c.h.b16 %v353
  %v374 = vunpack.c.l.b16 %v354
  %v375 = vunpack.c.h.b16 %v354
  %v376 = vunpack.c.l.b16 %v355
  %v377 = vunpack.c.h.b16 %v355
  %v378 = vunpack.c.l.b16 %v356
  %v379 = vunpack.c.h.b16 %v356
  %v380 = vunpack.c.l.b16 %v357
  %v381 = vunpack.c.h.b16 %v357
  %v382 = vpack.c.b16 %v370, %v366
  %v383 = vpack.c.b16 %v371, %v367
  %v384 = vpack.c.b16 %v372, %v368
  %v385 = vpack.c.b16 %v373, %v369
  %v386 = vpack.c.b16 %v378, %v374
  %v387 = vpack.c.b16 %v379, %v375
  %v388 = vpack.c.b16 %v380, %v376
  %v389 = vpack.c.b16 %v381, %v377
  %v395 = vand.u32 %v386, %v103
  %v398 = vand.u32 %v387, %v103
  %v401 = vand.u32 %v388, %v103
  %v404 = vand.u32 %v389, %v103
  %406 = vmatprep.subr.bf16.mxu0 0
  %407 = vmatpush1.bf16.msra.mxu0 0
  %408 = vmatprep.subr.bf16.mxu0 0
  %409 = vmatpush1.bf16.msra.mxu0 0
  %410 = vmatprep.subr.bf16.mxu0 0
  %411 = vmatpush1.bf16.msra.mxu0 0
  %412 = vmatprep.subr.bf16.mxu0 0
  %413 = vmatpush1.bf16.msra.mxu0 0
  %414 = vmatprep.subr.bf16.mxu0 0
  %415 = vmatpush1.bf16.msra.mxu0 0
  %416 = vmatprep.subr.bf16.mxu0 0
  %417 = vmatpush1.bf16.msra.mxu0 0
  %418 = vmatprep.subr.bf16.mxu0 %v398
  %419 = vmatpush1.bf16.msra.mxu0 %v395
  %420 = vmatprep.subr.bf16.mxu0 %v383
  %421 = vmatpush1.bf16.msra.mxu0 %v382
  %422 = vmatprep.subr.bf16.mxu0 0
  %423 = vmatpush2.bf16.msra.mxu0 0
  %424 = vmatprep.subr.bf16.mxu0 0
  %425 = vmatpush2.bf16.msra.mxu0 0
  %426 = vmatprep.subr.bf16.mxu0 0
  %427 = vmatpush2.bf16.msra.mxu0 0
  %428 = vmatprep.subr.bf16.mxu0 0
  %429 = vmatpush2.bf16.msra.mxu0 0
  %430 = vmatprep.subr.bf16.mxu0 0
  %431 = vmatpush2.bf16.msra.mxu0 0
  %432 = vmatprep.subr.bf16.mxu0 0
  %433 = vmatpush2.bf16.msra.mxu0 0
  %434 = vmatprep.subr.bf16.mxu0 0
  %435 = vmatpush2.bf16.msra.mxu0 0
  %436 = vmatprep.subr.bf16.mxu0 0
  %437 = vmatpush2.bf16.msra.mxu0 0
  %438 = vmatprep.mubr.bf16.mxu0 0
  %439 = vmatmul.mubr.bf16.gmra.mxu0 %v98
  %v440 = vpop.f32.mrf.mxu0
  %v441 = vadd.f32 %v58, %v440
  %v442 = vpop.f32.mrf.mxu0
  %v443 = vadd.f32 %v58, %v442
  %v444 = vpop.f32.mrf.mxu0
  %v445 = vpop.f32.mrf.mxu0
  %446 = vdwg.mxu0
  %447 = vmatprep.subr.bf16.mxu0 0
  %448 = vmatpush1.bf16.msra.mxu0 0
  %449 = vmatprep.subr.bf16.mxu0 0
  %450 = vmatpush1.bf16.msra.mxu0 0
  %451 = vmatprep.subr.bf16.mxu0 0
  %452 = vmatpush1.bf16.msra.mxu0 0
  %453 = vmatprep.subr.bf16.mxu0 0
  %454 = vmatpush1.bf16.msra.mxu0 0
  %455 = vmatprep.subr.bf16.mxu0 0
  %456 = vmatpush1.bf16.msra.mxu0 0
  %457 = vmatprep.subr.bf16.mxu0 0
  %458 = vmatpush1.bf16.msra.mxu0 0
  %459 = vmatprep.subr.bf16.mxu0 %v404
  %460 = vmatpush1.bf16.msra.mxu0 %v401
  %461 = vmatprep.subr.bf16.mxu0 %v385
  %462 = vmatpush1.bf16.msra.mxu0 %v384
  %463 = vmatprep.subr.bf16.mxu0 0
  %464 = vmatpush2.bf16.msra.mxu0 0
  %465 = vmatprep.subr.bf16.mxu0 0
  %466 = vmatpush2.bf16.msra.mxu0 0
  %467 = vmatprep.subr.bf16.mxu0 0
  %468 = vmatpush2.bf16.msra.mxu0 0
  %469 = vmatprep.subr.bf16.mxu0 0
  %470 = vmatpush2.bf16.msra.mxu0 0
  %471 = vmatprep.subr.bf16.mxu0 0
  %472 = vmatpush2.bf16.msra.mxu0 0
  %473 = vmatprep.subr.bf16.mxu0 0
  %474 = vmatpush2.bf16.msra.mxu0 0
  %475 = vmatprep.subr.bf16.mxu0 0
  %476 = vmatpush2.bf16.msra.mxu0 0
  %477 = vmatprep.subr.bf16.mxu0 0
  %478 = vmatpush2.bf16.msra.mxu0 0
  %479 = vmatprep.mubr.bf16.mxu0 0
  %480 = vmatmul.mubr.bf16.gmra.mxu0 %v98
  %v481 = vpop.f32.mrf.mxu0
  %v482 = vadd.f32 %v58, %v481
  %v483 = vpop.f32.mrf.mxu0
  %v484 = vadd.f32 %v58, %v483
  %v485 = vpop.f32.mrf.mxu0
  %v486 = vpop.f32.mrf.mxu0
  %487 = vdwg.mxu0
  %v488 = vmax.f32 %v441, 0.0
  %v489 = vmax.f32 %v443, 0.0
  %v490 = vmax.f32 %v482, 0.0
  %v491 = vmax.f32 %v484, 0.0
  %v492 = vmax.f32 %v345, %v488
  %v493 = vmax.f32 %v346, %v489
  %v494 = vmax.f32 %v347, %v490
  %v495 = vmax.f32 %v348, %v491
  %s496 = scalar_lea.vmem %s0, 192
  %v497 = vld [vmem:[%s496] sm:$0xff]
  %v498 = vld [vmem:[%s496 + $0x8] sm:$0xff]
  %v499 = vld [vmem:[%s496 + $0x10] sm:$0xff]
  %v500 = vld [vmem:[%s496 + $0x18] sm:$0xff]
  %v501 = vld [vmem:[%s496 + $0x20] sm:$0xff]
  %v502 = vld [vmem:[%s496 + $0x28] sm:$0xff]
  %v503 = vld [vmem:[%s496 + $0x30] sm:$0x33]
  %v504 = vld [vmem:[%s496 + $0x38] sm:$0x33]
  %v513 = vunpack.c.l.b16 %v497
  %v514 = vunpack.c.h.b16 %v497
  %v515 = vunpack.c.l.b16 %v498
  %v516 = vunpack.c.h.b16 %v498
  %v517 = vunpack.c.l.b16 %v499
  %v518 = vunpack.c.h.b16 %v499
  %v519 = vunpack.c.l.b16 %v500
  %v520 = vunpack.c.h.b16 %v500
  %v521 = vunpack.c.l.b16 %v501
  %v522 = vunpack.c.h.b16 %v501
  %v523 = vunpack.c.l.b16 %v502
  %v524 = vunpack.c.h.b16 %v502
  %v525 = vunpack.c.l.b16 %v503
  %v526 = vunpack.c.h.b16 %v503
  %v527 = vunpack.c.l.b16 %v504
  %v528 = vunpack.c.h.b16 %v504
  %v529 = vpack.c.b16 %v517, %v513
  %v530 = vpack.c.b16 %v518, %v514
  %v531 = vpack.c.b16 %v519, %v515
  %v532 = vpack.c.b16 %v520, %v516
  %v533 = vpack.c.b16 %v525, %v521
  %v534 = vpack.c.b16 %v526, %v522
  %v535 = vpack.c.b16 %v527, %v523
  %v536 = vpack.c.b16 %v528, %v524
  %v542 = vand.u32 %v533, %v103
  %v545 = vand.u32 %v534, %v103
  %v548 = vand.u32 %v535, %v103
  %v551 = vand.u32 %v536, %v103
  %553 = vmatprep.subr.bf16.mxu0 0
  %554 = vmatpush1.bf16.msra.mxu0 0
  %555 = vmatprep.subr.bf16.mxu0 0
  %556 = vmatpush1.bf16.msra.mxu0 0
  %557 = vmatprep.subr.bf16.mxu0 0
  %558 = vmatpush1.bf16.msra.mxu0 0
  %559 = vmatprep.subr.bf16.mxu0 0
  %560 = vmatpush1.bf16.msra.mxu0 0
  %561 = vmatprep.subr.bf16.mxu0 0
  %562 = vmatpush1.bf16.msra.mxu0 0
  %563 = vmatprep.subr.bf16.mxu0 0
  %564 = vmatpush1.bf16.msra.mxu0 0
  %565 = vmatprep.subr.bf16.mxu0 %v545
  %566 = vmatpush1.bf16.msra.mxu0 %v542
  %567 = vmatprep.subr.bf16.mxu0 %v530
  %568 = vmatpush1.bf16.msra.mxu0 %v529
  %569 = vmatprep.subr.bf16.mxu0 0
  %570 = vmatpush2.bf16.msra.mxu0 0
  %571 = vmatprep.subr.bf16.mxu0 0
  %572 = vmatpush2.bf16.msra.mxu0 0
  %573 = vmatprep.subr.bf16.mxu0 0
  %574 = vmatpush2.bf16.msra.mxu0 0
  %575 = vmatprep.subr.bf16.mxu0 0
  %576 = vmatpush2.bf16.msra.mxu0 0
  %577 = vmatprep.subr.bf16.mxu0 0
  %578 = vmatpush2.bf16.msra.mxu0 0
  %579 = vmatprep.subr.bf16.mxu0 0
  %580 = vmatpush2.bf16.msra.mxu0 0
  %581 = vmatprep.subr.bf16.mxu0 0
  %582 = vmatpush2.bf16.msra.mxu0 0
  %583 = vmatprep.subr.bf16.mxu0 0
  %584 = vmatpush2.bf16.msra.mxu0 0
  %585 = vmatprep.mubr.bf16.mxu0 0
  %586 = vmatmul.mubr.bf16.gmra.mxu0 %v98
  %v587 = vpop.f32.mrf.mxu0
  %v588 = vadd.f32 %v58, %v587
  %v589 = vpop.f32.mrf.mxu0
  %v590 = vadd.f32 %v58, %v589
  %v591 = vpop.f32.mrf.mxu0
  %v592 = vpop.f32.mrf.mxu0
  %593 = vdwg.mxu0
  %594 = vmatprep.subr.bf16.mxu0 0
  %595 = vmatpush1.bf16.msra.mxu0 0
  %596 = vmatprep.subr.bf16.mxu0 0
  %597 = vmatpush1.bf16.msra.mxu0 0
  %598 = vmatprep.subr.bf16.mxu0 0
  %599 = vmatpush1.bf16.msra.mxu0 0
  %600 = vmatprep.subr.bf16.mxu0 0
  %601 = vmatpush1.bf16.msra.mxu0 0
  %602 = vmatprep.subr.bf16.mxu0 0
  %603 = vmatpush1.bf16.msra.mxu0 0
  %604 = vmatprep.subr.bf16.mxu0 0
  %605 = vmatpush1.bf16.msra.mxu0 0
  %606 = vmatprep.subr.bf16.mxu0 %v551
  %607 = vmatpush1.bf16.msra.mxu0 %v548
  %608 = vmatprep.subr.bf16.mxu0 %v532
  %609 = vmatpush1.bf16.msra.mxu0 %v531
  %610 = vmatprep.subr.bf16.mxu0 0
  %611 = vmatpush2.bf16.msra.mxu0 0
  %612 = vmatprep.subr.bf16.mxu0 0
  %613 = vmatpush2.bf16.msra.mxu0 0
  %614 = vmatprep.subr.bf16.mxu0 0
  %615 = vmatpush2.bf16.msra.mxu0 0
  %616 = vmatprep.subr.bf16.mxu0 0
  %617 = vmatpush2.bf16.msra.mxu0 0
  %618 = vmatprep.subr.bf16.mxu0 0
  %619 = vmatpush2.bf16.msra.mxu0 0
  %620 = vmatprep.subr.bf16.mxu0 0
  %621 = vmatpush2.bf16.msra.mxu0 0
  %622 = vmatprep.subr.bf16.mxu0 0
  %623 = vmatpush2.bf16.msra.mxu0 0
  %624 = vmatprep.subr.bf16.mxu0 0
  %625 = vmatpush2.bf16.msra.mxu0 0
  %626 = vmatprep.mubr.bf16.mxu0 0
  %627 = vmatmul.mubr.bf16.gmra.mxu0 %v98
  %v628 = vpop.f32.mrf.mxu0
  %v629 = vadd.f32 %v58, %v628
  %v630 = vpop.f32.mrf.mxu0
  %v631 = vadd.f32 %v58, %v630
  %v632 = vpop.f32.mrf.mxu0
  %v633 = vpop.f32.mrf.mxu0
  %634 = vdwg.mxu0
  %v635 = vmax.f32 %v588, 0.0
  %v636 = vmax.f32 %v590, 0.0
  %v637 = vmax.f32 %v629, 0.0
  %v638 = vmax.f32 %v631, 0.0
  %v639 = vmax.f32 %v492, %v635
  %v640 = vmax.f32 %v493, %v636
  %v641 = vmax.f32 %v494, %v637
  %v642 = vmax.f32 %v495, %v638
  %v643 = vpack.c.bf16 %v639, %v639
  %v644 = vpack.c.bf16 %v640, %v640
  %v645 = vpack.c.bf16 %v641, %v641
  %v646 = vpack.c.bf16 %v642, %v642
  %v647 = vld [vmem:[%s1] sm:$0xff]
  %v648 = vld [vmem:[%s1 + $0x8] sm:$0xff]
  %v649 = vld [vmem:[%s1 + $0x10] sm:$0xff]
  %v650 = vld [vmem:[%s1 + $0x18] sm:$0xff]
  %v651 = vld [vmem:[%s1 + $0x20] sm:$0xf]
  %v652 = vld [vmem:[%s1 + $0x24] sm:$0xff]
  %v653 = vld [vmem:[%s1 + $0x2c] sm:$0xff]
  %v654 = vld [vmem:[%s1 + $0x34] sm:$0xff]
  %v655 = vld [vmem:[%s1 + $0x3c] sm:$0xff]
  %v656 = vld [vmem:[%s1 + $0x44] sm:$0xf]
  %v657 = vld [vmem:[%s1 + $0x48] sm:$0xff]
  %v658 = vld [vmem:[%s1 + $0x50] sm:$0xff]
  %v659 = vld [vmem:[%s1 + $0x58] sm:$0xff]
  %v660 = vld [vmem:[%s1 + $0x60] sm:$0xff]
  %v661 = vld [vmem:[%s1 + $0x68] sm:$0xf]
  %v662 = vld [vmem:[%s1 + $0x6c] sm:$0xff]
  %v663 = vld [vmem:[%s1 + $0x74] sm:$0xff]
  %v664 = vld [vmem:[%s1 + $0x7c] sm:$0xff]
  %v665 = vld [vmem:[%s1 + $0x84] sm:$0xff]
  %v666 = vld [vmem:[%s1 + $0x8c] sm:$0xf]
  %v667 = vld [vmem:[%s1 + $0x90] sm:$0xff]
  %v668 = vld [vmem:[%s1 + $0x98] sm:$0xff]
  %v669 = vld [vmem:[%s1 + $0xa0] sm:$0xff]
  %v670 = vld [vmem:[%s1 + $0xa8] sm:$0xff]
  %v671 = vld [vmem:[%s1 + $0xb0] sm:$0xf]
  %v672 = vld [vmem:[%s1 + $0xb4] sm:$0xff]
  %v673 = vld [vmem:[%s1 + $0xbc] sm:$0xff]
  %v674 = vld [vmem:[%s1 + $0xc4] sm:$0xff]
  %v675 = vld [vmem:[%s1 + $0xcc] sm:$0xff]
  %v676 = vld [vmem:[%s1 + $0xd4] sm:$0xf]
  %v677 = vld [vmem:[%s1 + $0xd8] sm:$0xff]
  %v678 = vld [vmem:[%s1 + $0xe0] sm:$0xff]
  %v679 = vld [vmem:[%s1 + $0xe8] sm:$0xff]
  %v680 = vld [vmem:[%s1 + $0xf0] sm:$0xff]
  %v681 = vld [vmem:[%s1 + $0xf8] sm:$0xf]
  %v682 = vld [vmem:[%s1 + $0xfc] sm:$0xff]
  %v683 = vld [vmem:[%s1 + $0x104] sm:$0xff]
  %v684 = vld [vmem:[%s1 + $0x10c] sm:$0xff]
  %v685 = vld [vmem:[%s1 + $0x114] sm:$0xff]
  %v686 = vld [vmem:[%s1 + $0x11c] sm:$0xf]
  %v687 = vld [vmem:[%s1 + $0x120] sm:$0xff]
  %v688 = vld [vmem:[%s1 + $0x128] sm:$0xff]
  %v689 = vld [vmem:[%s1 + $0x130] sm:$0xff]
  %v690 = vld [vmem:[%s1 + $0x138] sm:$0xff]
  %v691 = vld [vmem:[%s1 + $0x140] sm:$0xf]
  %v692 = vld [vmem:[%s1 + $0x144] sm:$0xff]
  %v693 = vld [vmem:[%s1 + $0x14c] sm:$0xff]
  %v694 = vld [vmem:[%s1 + $0x154] sm:$0xff]
  %v695 = vld [vmem:[%s1 + $0x15c] sm:$0xff]
  %v696 = vld [vmem:[%s1 + $0x164] sm:$0xf]
  %v697 = vld [vmem:[%s1 + $0x168] sm:$0xff]
  %v698 = vld [vmem:[%s1 + $0x170] sm:$0xff]
  %v699 = vld [vmem:[%s1 + $0x178] sm:$0xff]
  %v700 = vld [vmem:[%s1 + $0x180] sm:$0xff]
  %v701 = vld [vmem:[%s1 + $0x188] sm:$0xf]
  %v702 = vld [vmem:[%s1 + $0x18c] sm:$0xff]
  %v703 = vld [vmem:[%s1 + $0x194] sm:$0xff]
  %v704 = vld [vmem:[%s1 + $0x19c] sm:$0xff]
  %v705 = vld [vmem:[%s1 + $0x1a4] sm:$0xff]
  %v706 = vld [vmem:[%s1 + $0x1ac] sm:$0xf]
  %v707 = vld [vmem:[%s1 + $0x1b0] sm:$0xff]
  %v708 = vld [vmem:[%s1 + $0x1b8] sm:$0xff]
  %v709 = vld [vmem:[%s1 + $0x1c0] sm:$0xff]
  %v710 = vld [vmem:[%s1 + $0x1c8] sm:$0xff]
  %v711 = vld [vmem:[%s1 + $0x1d0] sm:$0xf]
  %v712 = vld [vmem:[%s1 + $0x1d4] sm:$0xff]
  %v713 = vld [vmem:[%s1 + $0x1dc] sm:$0xff]
  %v714 = vld [vmem:[%s1 + $0x1e4] sm:$0xff]
  %v715 = vld [vmem:[%s1 + $0x1ec] sm:$0xff]
  %v716 = vld [vmem:[%s1 + $0x1f4] sm:$0xf]
  %v717 = vld [vmem:[%s1 + $0x1f8] sm:$0xff]
  %v718 = vld [vmem:[%s1 + $0x200] sm:$0xff]
  %v719 = vld [vmem:[%s1 + $0x208] sm:$0xff]
  %v720 = vld [vmem:[%s1 + $0x210] sm:$0xff]
  %v721 = vld [vmem:[%s1 + $0x218] sm:$0xf]
  %v722 = vld [vmem:[%s1 + $0x21c] sm:$0xff]
  %v723 = vld [vmem:[%s1 + $0x224] sm:$0xff]
  %v724 = vld [vmem:[%s1 + $0x22c] sm:$0xff]
  %v725 = vld [vmem:[%s1 + $0x234] sm:$0xff]
  %v726 = vld [vmem:[%s1 + $0x23c] sm:$0xf]
  %v727 = vld [vmem:[%s1 + $0x240] sm:$0xff]
  %v728 = vld [vmem:[%s1 + $0x248] sm:$0xff]
  %v729 = vld [vmem:[%s1 + $0x250] sm:$0xff]
  %v730 = vld [vmem:[%s1 + $0x258] sm:$0xff]
  %v731 = vld [vmem:[%s1 + $0x260] sm:$0xf]
  %v732 = vld [vmem:[%s1 + $0x264] sm:$0xff]
  %v733 = vld [vmem:[%s1 + $0x26c] sm:$0xff]
  %v734 = vld [vmem:[%s1 + $0x274] sm:$0xff]
  %v735 = vld [vmem:[%s1 + $0x27c] sm:$0xff]
  %v736 = vld [vmem:[%s1 + $0x284] sm:$0xf]
  %v737 = vld [vmem:[%s1 + $0x288] sm:$0xff]
  %v738 = vld [vmem:[%s1 + $0x290] sm:$0xff]
  %v739 = vld [vmem:[%s1 + $0x298] sm:$0xff]
  %v740 = vld [vmem:[%s1 + $0x2a0] sm:$0xff]
  %v741 = vld [vmem:[%s1 + $0x2a8] sm:$0xf]
  %v742 = vld [vmem:[%s1 + $0x2ac] sm:$0xff]
  %v743 = vld [vmem:[%s1 + $0x2b4] sm:$0xff]
  %v744 = vld [vmem:[%s1 + $0x2bc] sm:$0xff]
  %v745 = vld [vmem:[%s1 + $0x2c4] sm:$0xff]
  %v746 = vld [vmem:[%s1 + $0x2cc] sm:$0xf]
  %v747 = vld [vmem:[%s1 + $0x2d0] sm:$0xff]
  %v748 = vld [vmem:[%s1 + $0x2d8] sm:$0xff]
  %v749 = vld [vmem:[%s1 + $0x2e0] sm:$0xff]
  %v750 = vld [vmem:[%s1 + $0x2e8] sm:$0xff]
  %v751 = vld [vmem:[%s1 + $0x2f0] sm:$0xf]
  %v752 = vld [vmem:[%s1 + $0x2f4] sm:$0xff]
  %v753 = vld [vmem:[%s1 + $0x2fc] sm:$0xff]
  %v754 = vld [vmem:[%s1 + $0x304] sm:$0xff]
  %v755 = vld [vmem:[%s1 + $0x30c] sm:$0xff]
  %v756 = vld [vmem:[%s1 + $0x314] sm:$0xf]
  %v757 = vld [vmem:[%s1 + $0x318] sm:$0xff]
  %v758 = vld [vmem:[%s1 + $0x320] sm:$0xff]
  %v759 = vld [vmem:[%s1 + $0x328] sm:$0xff]
  %v760 = vld [vmem:[%s1 + $0x330] sm:$0xff]
  %v761 = vld [vmem:[%s1 + $0x338] sm:$0xf]
  %v762 = vld [vmem:[%s1 + $0x33c] sm:$0xff]
  %v763 = vld [vmem:[%s1 + $0x344] sm:$0xff]
  %v764 = vld [vmem:[%s1 + $0x34c] sm:$0xff]
  %v765 = vld [vmem:[%s1 + $0x354] sm:$0xff]
  %v766 = vld [vmem:[%s1 + $0x35c] sm:$0xf]
  %v767 = vld [vmem:[%s1 + $0x360] sm:$0xff]
  %v768 = vld [vmem:[%s1 + $0x368] sm:$0xff]
  %v769 = vld [vmem:[%s1 + $0x370] sm:$0xff]
  %v770 = vld [vmem:[%s1 + $0x378] sm:$0xff]
  %v771 = vld [vmem:[%s1 + $0x380] sm:$0xf]
  %v772 = vld [vmem:[%s1 + $0x384] sm:$0xff]
  %v773 = vld [vmem:[%s1 + $0x38c] sm:$0xff]
  %v774 = vld [vmem:[%s1 + $0x394] sm:$0xff]
  %v775 = vld [vmem:[%s1 + $0x39c] sm:$0xff]
  %v776 = vld [vmem:[%s1 + $0x3a4] sm:$0xf]
  %v777 = vld [vmem:[%s1 + $0x3a8] sm:$0xff]
  %v778 = vld [vmem:[%s1 + $0x3b0] sm:$0xff]
  %v779 = vld [vmem:[%s1 + $0x3b8] sm:$0xff]
  %v780 = vld [vmem:[%s1 + $0x3c0] sm:$0xff]
  %v781 = vld [vmem:[%s1 + $0x3c8] sm:$0xf]
  %v782 = vld [vmem:[%s1 + $0x3cc] sm:$0xff]
  %v783 = vld [vmem:[%s1 + $0x3d4] sm:$0xff]
  %v784 = vld [vmem:[%s1 + $0x3dc] sm:$0xff]
  %v785 = vld [vmem:[%s1 + $0x3e4] sm:$0xff]
  %v786 = vld [vmem:[%s1 + $0x3ec] sm:$0xf]
  %v787 = vld [vmem:[%s1 + $0x3f0] sm:$0xff]
  %v788 = vld [vmem:[%s1 + $0x3f8] sm:$0xff]
  %v789 = vld [vmem:[%s1 + $0x400] sm:$0xff]
  %v790 = vld [vmem:[%s1 + $0x408] sm:$0xff]
  %v791 = vld [vmem:[%s1 + $0x410] sm:$0xf]
  %v792 = vld [vmem:[%s1 + $0x414] sm:$0xff]
  %v793 = vld [vmem:[%s1 + $0x41c] sm:$0xff]
  %v794 = vld [vmem:[%s1 + $0x424] sm:$0xff]
  %v795 = vld [vmem:[%s1 + $0x42c] sm:$0xff]
  %v796 = vld [vmem:[%s1 + $0x434] sm:$0xf]
  %v797 = vld [vmem:[%s1 + $0x438] sm:$0xff]
  %v798 = vld [vmem:[%s1 + $0x440] sm:$0xff]
  %v799 = vld [vmem:[%s1 + $0x448] sm:$0xff]
  %v800 = vld [vmem:[%s1 + $0x450] sm:$0xff]
  %v801 = vld [vmem:[%s1 + $0x458] sm:$0xf]
  %v802 = vld [vmem:[%s1 + $0x45c] sm:$0xff]
  %v803 = vld [vmem:[%s1 + $0x464] sm:$0xff]
  %v804 = vld [vmem:[%s1 + $0x46c] sm:$0xff]
  %v805 = vld [vmem:[%s1 + $0x474] sm:$0xff]
  %v806 = vld [vmem:[%s1 + $0x47c] sm:$0xf]
  %v807 = vld [vmem:[%s1 + $0x480] sm:$0xff]
  %v808 = vld [vmem:[%s1 + $0x488] sm:$0xff]
  %v809 = vld [vmem:[%s1 + $0x490] sm:$0xff]
  %v810 = vld [vmem:[%s1 + $0x498] sm:$0xff]
  %v811 = vld [vmem:[%s1 + $0x4a0] sm:$0xf]
  %v812 = vld [vmem:[%s1 + $0x4a4] sm:$0xff]
  %v813 = vld [vmem:[%s1 + $0x4ac] sm:$0xff]
  %v814 = vld [vmem:[%s1 + $0x4b4] sm:$0xff]
  %v815 = vld [vmem:[%s1 + $0x4bc] sm:$0xff]
  %v816 = vld [vmem:[%s1 + $0x4c4] sm:$0xf]
  %v817 = vld [vmem:[%s1 + $0x4c8] sm:$0xff]
  %v818 = vld [vmem:[%s1 + $0x4d0] sm:$0xff]
  %v819 = vld [vmem:[%s1 + $0x4d8] sm:$0xff]
  %v820 = vld [vmem:[%s1 + $0x4e0] sm:$0xff]
  %v821 = vld [vmem:[%s1 + $0x4e8] sm:$0xf]
  %v822 = vld [vmem:[%s1 + $0x4ec] sm:$0xff]
  %v823 = vld [vmem:[%s1 + $0x4f4] sm:$0xff]
  %v824 = vld [vmem:[%s1 + $0x4fc] sm:$0xff]
  %v825 = vld [vmem:[%s1 + $0x504] sm:$0xff]
  %v826 = vld [vmem:[%s1 + $0x50c] sm:$0xf]
  %v827 = vld [vmem:[%s1 + $0x510] sm:$0xff]
  %v828 = vld [vmem:[%s1 + $0x518] sm:$0xff]
  %v829 = vld [vmem:[%s1 + $0x520] sm:$0xff]
  %v830 = vld [vmem:[%s1 + $0x528] sm:$0xff]
  %v831 = vld [vmem:[%s1 + $0x530] sm:$0xf]
  %v832 = vld [vmem:[%s1 + $0x534] sm:$0xff]
  %v833 = vld [vmem:[%s1 + $0x53c] sm:$0xff]
  %v834 = vld [vmem:[%s1 + $0x544] sm:$0xff]
  %v835 = vld [vmem:[%s1 + $0x54c] sm:$0xff]
  %v836 = vld [vmem:[%s1 + $0x554] sm:$0xf]
  %v837 = vld [vmem:[%s1 + $0x558] sm:$0xff]
  %v838 = vld [vmem:[%s1 + $0x560] sm:$0xff]
  %v839 = vld [vmem:[%s1 + $0x568] sm:$0xff]
  %v840 = vld [vmem:[%s1 + $0x570] sm:$0xff]
  %v841 = vld [vmem:[%s1 + $0x578] sm:$0xf]
  %v842 = vld [vmem:[%s1 + $0x57c] sm:$0xff]
  %v843 = vld [vmem:[%s1 + $0x584] sm:$0xff]
  %v844 = vld [vmem:[%s1 + $0x58c] sm:$0xff]
  %v845 = vld [vmem:[%s1 + $0x594] sm:$0xff]
  %v846 = vld [vmem:[%s1 + $0x59c] sm:$0xf]
  %v847 = vld [vmem:[%s1 + $0x5a0] sm:$0xff]
  %v848 = vld [vmem:[%s1 + $0x5a8] sm:$0xff]
  %v849 = vld [vmem:[%s1 + $0x5b0] sm:$0xff]
  %v850 = vld [vmem:[%s1 + $0x5b8] sm:$0xff]
  %v851 = vld [vmem:[%s1 + $0x5c0] sm:$0xf]
  %v852 = vld [vmem:[%s1 + $0x5c4] sm:$0xff]
  %v853 = vld [vmem:[%s1 + $0x5cc] sm:$0xff]
  %v854 = vld [vmem:[%s1 + $0x5d4] sm:$0xff]
  %v855 = vld [vmem:[%s1 + $0x5dc] sm:$0xff]
  %v856 = vld [vmem:[%s1 + $0x5e4] sm:$0xf]
  %v857 = vld [vmem:[%s1 + $0x5e8] sm:$0xff]
  %v858 = vld [vmem:[%s1 + $0x5f0] sm:$0xff]
  %v859 = vld [vmem:[%s1 + $0x5f8] sm:$0xff]
  %v860 = vld [vmem:[%s1 + $0x600] sm:$0xff]
  %v861 = vld [vmem:[%s1 + $0x608] sm:$0xf]
  %v862 = vld [vmem:[%s1 + $0x60c] sm:$0xff]
  %v863 = vld [vmem:[%s1 + $0x614] sm:$0xff]
  %v864 = vld [vmem:[%s1 + $0x61c] sm:$0xff]
  %v865 = vld [vmem:[%s1 + $0x624] sm:$0xff]
  %v866 = vld [vmem:[%s1 + $0x62c] sm:$0xf]
  %v867 = vld [vmem:[%s1 + $0x630] sm:$0xff]
  %v868 = vld [vmem:[%s1 + $0x638] sm:$0xff]
  %v869 = vld [vmem:[%s1 + $0x640] sm:$0xff]
  %v870 = vld [vmem:[%s1 + $0x648] sm:$0xff]
  %v871 = vld [vmem:[%s1 + $0x650] sm:$0xf]
  %v872 = vld [vmem:[%s1 + $0x654] sm:$0xff]
  %v873 = vld [vmem:[%s1 + $0x65c] sm:$0xff]
  %v874 = vld [vmem:[%s1 + $0x664] sm:$0xff]
  %v875 = vld [vmem:[%s1 + $0x66c] sm:$0xff]
  %v876 = vld [vmem:[%s1 + $0x674] sm:$0xf]
  %v877 = vld [vmem:[%s1 + $0x678] sm:$0xff]
  %v878 = vld [vmem:[%s1 + $0x680] sm:$0xff]
  %v879 = vld [vmem:[%s1 + $0x688] sm:$0xff]
  %v880 = vld [vmem:[%s1 + $0x690] sm:$0xff]
  %v881 = vld [vmem:[%s1 + $0x698] sm:$0xf]
  %v882 = vld [vmem:[%s1 + $0x69c] sm:$0xff]
  %v883 = vld [vmem:[%s1 + $0x6a4] sm:$0xff]
  %v884 = vld [vmem:[%s1 + $0x6ac] sm:$0xff]
  %v885 = vld [vmem:[%s1 + $0x6b4] sm:$0xff]
  %v886 = vld [vmem:[%s1 + $0x6bc] sm:$0xf]
  %v887 = vld [vmem:[%s1 + $0x6c0] sm:$0xff]
  %v888 = vld [vmem:[%s1 + $0x6c8] sm:$0xff]
  %v889 = vld [vmem:[%s1 + $0x6d0] sm:$0xff]
  %v890 = vld [vmem:[%s1 + $0x6d8] sm:$0xff]
  %v891 = vld [vmem:[%s1 + $0x6e0] sm:$0xf]
  %v892 = vld [vmem:[%s1 + $0x6e4] sm:$0xff]
  %v893 = vld [vmem:[%s1 + $0x6ec] sm:$0xff]
  %v894 = vld [vmem:[%s1 + $0x6f4] sm:$0xff]
  %v895 = vld [vmem:[%s1 + $0x6fc] sm:$0xff]
  %v896 = vld [vmem:[%s1 + $0x704] sm:$0xf]
  %v897 = vld [vmem:[%s1 + $0x708] sm:$0xff]
  %v898 = vld [vmem:[%s1 + $0x710] sm:$0xff]
  %v899 = vld [vmem:[%s1 + $0x718] sm:$0xff]
  %v900 = vld [vmem:[%s1 + $0x720] sm:$0xff]
  %v901 = vld [vmem:[%s1 + $0x728] sm:$0xf]
  %v902 = vld [vmem:[%s1 + $0x72c] sm:$0xff]
  %v903 = vld [vmem:[%s1 + $0x734] sm:$0xff]
  %v904 = vld [vmem:[%s1 + $0x73c] sm:$0xff]
  %v905 = vld [vmem:[%s1 + $0x744] sm:$0xff]
  %v906 = vld [vmem:[%s1 + $0x74c] sm:$0xf]
  %v907 = vld [vmem:[%s1 + $0x750] sm:$0xff]
  %v908 = vld [vmem:[%s1 + $0x758] sm:$0xff]
  %v909 = vld [vmem:[%s1 + $0x760] sm:$0xff]
  %v910 = vld [vmem:[%s1 + $0x768] sm:$0xff]
  %v911 = vld [vmem:[%s1 + $0x770] sm:$0xf]
  %v912 = vld [vmem:[%s1 + $0x774] sm:$0xff]
  %v913 = vld [vmem:[%s1 + $0x77c] sm:$0xff]
  %v914 = vld [vmem:[%s1 + $0x784] sm:$0xff]
  %v915 = vld [vmem:[%s1 + $0x78c] sm:$0xff]
  %v916 = vld [vmem:[%s1 + $0x794] sm:$0xf]
  %v917 = vld [vmem:[%s1 + $0x798] sm:$0xff]
  %v918 = vld [vmem:[%s1 + $0x7a0] sm:$0xff]
  %v919 = vld [vmem:[%s1 + $0x7a8] sm:$0xff]
  %v920 = vld [vmem:[%s1 + $0x7b0] sm:$0xff]
  %v921 = vld [vmem:[%s1 + $0x7b8] sm:$0xf]
  %v922 = vld [vmem:[%s1 + $0x7bc] sm:$0xff]
  %v923 = vld [vmem:[%s1 + $0x7c4] sm:$0xff]
  %v924 = vld [vmem:[%s1 + $0x7cc] sm:$0xff]
  %v925 = vld [vmem:[%s1 + $0x7d4] sm:$0xff]
  %v926 = vld [vmem:[%s1 + $0x7dc] sm:$0xf]
  %v927 = vld [vmem:[%s1 + $0x7e0] sm:$0xff]
  %v928 = vld [vmem:[%s1 + $0x7e8] sm:$0xff]
  %v929 = vld [vmem:[%s1 + $0x7f0] sm:$0xff]
  %v930 = vld [vmem:[%s1 + $0x7f8] sm:$0xff]
  %v931 = vld [vmem:[%s1 + $0x800] sm:$0xf]
  %v932 = vld [vmem:[%s1 + $0x804] sm:$0xff]
  %v933 = vld [vmem:[%s1 + $0x80c] sm:$0xff]
  %v934 = vld [vmem:[%s1 + $0x814] sm:$0xff]
  %v935 = vld [vmem:[%s1 + $0x81c] sm:$0xff]
  %v936 = vld [vmem:[%s1 + $0x824] sm:$0xf]
  %v937 = vld [vmem:[%s1 + $0x828] sm:$0xff]
  %v938 = vld [vmem:[%s1 + $0x830] sm:$0xff]
  %v939 = vld [vmem:[%s1 + $0x838] sm:$0xff]
  %v940 = vld [vmem:[%s1 + $0x840] sm:$0xff]
  %v941 = vld [vmem:[%s1 + $0x848] sm:$0xf]
  %v942 = vld [vmem:[%s1 + $0x84c] sm:$0xff]
  %v943 = vld [vmem:[%s1 + $0x854] sm:$0xff]
  %v944 = vld [vmem:[%s1 + $0x85c] sm:$0xff]
  %v945 = vld [vmem:[%s1 + $0x864] sm:$0xff]
  %v946 = vld [vmem:[%s1 + $0x86c] sm:$0xf]
  %v947 = vld [vmem:[%s1 + $0x870] sm:$0xff]
  %v948 = vld [vmem:[%s1 + $0x878] sm:$0xff]
  %v949 = vld [vmem:[%s1 + $0x880] sm:$0xff]
  %v950 = vld [vmem:[%s1 + $0x888] sm:$0xff]
  %v951 = vld [vmem:[%s1 + $0x890] sm:$0xf]
  %v952 = vld [vmem:[%s1 + $0x894] sm:$0xff]
  %v953 = vld [vmem:[%s1 + $0x89c] sm:$0xff]
  %v954 = vld [vmem:[%s1 + $0x8a4] sm:$0xff]
  %v955 = vld [vmem:[%s1 + $0x8ac] sm:$0xff]
  %v956 = vld [vmem:[%s1 + $0x8b4] sm:$0xf]
  %v957 = vld [vmem:[%s1 + $0x8b8] sm:$0xff]
  %v958 = vld [vmem:[%s1 + $0x8c0] sm:$0xff]
  %v959 = vld [vmem:[%s1 + $0x8c8] sm:$0xff]
  %v960 = vld [vmem:[%s1 + $0x8d0] sm:$0xff]
  %v961 = vld [vmem:[%s1 + $0x8d8] sm:$0xf]
  %v962 = vld [vmem:[%s1 + $0x8dc] sm:$0xff]
  %v963 = vld [vmem:[%s1 + $0x8e4] sm:$0xff]
  %v964 = vld [vmem:[%s1 + $0x8ec] sm:$0xff]
  %v965 = vld [vmem:[%s1 + $0x8f4] sm:$0xff]
  %v966 = vld [vmem:[%s1 + $0x8fc] sm:$0xf]
  %v1287 = vunpack.c.l.b16 %v647
  %v1288 = vunpack.c.h.b16 %v647
  %v1289 = vunpack.c.l.b16 %v648
  %v1290 = vunpack.c.h.b16 %v648
  %v1291 = vunpack.c.l.b16 %v649
  %v1292 = vunpack.c.h.b16 %v649
  %v1293 = vunpack.c.l.b16 %v650
  %v1294 = vunpack.c.h.b16 %v650
  %v1295 = vunpack.c.l.b16 %v651
  %v1296 = vunpack.c.l.b16 %v652
  %v1297 = vunpack.c.h.b16 %v652
  %v1298 = vunpack.c.l.b16 %v653
  %v1299 = vunpack.c.h.b16 %v653
  %v1300 = vunpack.c.l.b16 %v654
  %v1301 = vunpack.c.h.b16 %v654
  %v1302 = vunpack.c.l.b16 %v655
  %v1303 = vunpack.c.h.b16 %v655
  %v1304 = vunpack.c.l.b16 %v656
  %v1305 = vunpack.c.l.b16 %v657
  %v1306 = vunpack.c.h.b16 %v657
  %v1307 = vunpack.c.l.b16 %v658
  %v1308 = vunpack.c.h.b16 %v658
  %v1309 = vunpack.c.l.b16 %v659
  %v1310 = vunpack.c.h.b16 %v659
  %v1311 = vunpack.c.l.b16 %v660
  %v1312 = vunpack.c.h.b16 %v660
  %v1313 = vunpack.c.l.b16 %v661
  %v1314 = vunpack.c.l.b16 %v662
  %v1315 = vunpack.c.h.b16 %v662
  %v1316 = vunpack.c.l.b16 %v663
  %v1317 = vunpack.c.h.b16 %v663
  %v1318 = vunpack.c.l.b16 %v664
  %v1319 = vunpack.c.h.b16 %v664
  %v1320 = vunpack.c.l.b16 %v665
  %v1321 = vunpack.c.h.b16 %v665
  %v1322 = vunpack.c.l.b16 %v666
  %v1323 = vunpack.c.l.b16 %v667
  %v1324 = vunpack.c.h.b16 %v667
  %v1325 = vunpack.c.l.b16 %v668
  %v1326 = vunpack.c.h.b16 %v668
  %v1327 = vunpack.c.l.b16 %v669
  %v1328 = vunpack.c.h.b16 %v669
  %v1329 = vunpack.c.l.b16 %v670
  %v1330 = vunpack.c.h.b16 %v670
  %v1331 = vunpack.c.l.b16 %v671
  %v1332 = vunpack.c.l.b16 %v672
  %v1333 = vunpack.c.h.b16 %v672
  %v1334 = vunpack.c.l.b16 %v673
  %v1335 = vunpack.c.h.b16 %v673
  %v1336 = vunpack.c.l.b16 %v674
  %v1337 = vunpack.c.h.b16 %v674
  %v1338 = vunpack.c.l.b16 %v675
  %v1339 = vunpack.c.h.b16 %v675
  %v1340 = vunpack.c.l.b16 %v676
  %v1341 = vunpack.c.l.b16 %v677
  %v1342 = vunpack.c.h.b16 %v677
  %v1343 = vunpack.c.l.b16 %v678
  %v1344 = vunpack.c.h.b16 %v678
  %v1345 = vunpack.c.l.b16 %v679
  %v1346 = vunpack.c.h.b16 %v679
  %v1347 = vunpack.c.l.b16 %v680
  %v1348 = vunpack.c.h.b16 %v680
  %v1349 = vunpack.c.l.b16 %v681
  %v1350 = vunpack.c.l.b16 %v682
  %v1351 = vunpack.c.h.b16 %v682
  %v1352 = vunpack.c.l.b16 %v683
  %v1353 = vunpack.c.h.b16 %v683
  %v1354 = vunpack.c.l.b16 %v684
  %v1355 = vunpack.c.h.b16 %v684
  %v1356 = vunpack.c.l.b16 %v685
  %v1357 = vunpack.c.h.b16 %v685
  %v1358 = vunpack.c.l.b16 %v686
  %v1359 = vunpack.c.l.b16 %v687
  %v1360 = vunpack.c.h.b16 %v687
  %v1361 = vunpack.c.l.b16 %v688
  %v1362 = vunpack.c.h.b16 %v688
  %v1363 = vunpack.c.l.b16 %v689
  %v1364 = vunpack.c.h.b16 %v689
  %v1365 = vunpack.c.l.b16 %v690
  %v1366 = vunpack.c.h.b16 %v690
  %v1367 = vunpack.c.l.b16 %v691
  %v1368 = vunpack.c.l.b16 %v692
  %v1369 = vunpack.c.h.b16 %v692
  %v1370 = vunpack.c.l.b16 %v693
  %v1371 = vunpack.c.h.b16 %v693
  %v1372 = vunpack.c.l.b16 %v694
  %v1373 = vunpack.c.h.b16 %v694
  %v1374 = vunpack.c.l.b16 %v695
  %v1375 = vunpack.c.h.b16 %v695
  %v1376 = vunpack.c.l.b16 %v696
  %v1377 = vunpack.c.l.b16 %v697
  %v1378 = vunpack.c.h.b16 %v697
  %v1379 = vunpack.c.l.b16 %v698
  %v1380 = vunpack.c.h.b16 %v698
  %v1381 = vunpack.c.l.b16 %v699
  %v1382 = vunpack.c.h.b16 %v699
  %v1383 = vunpack.c.l.b16 %v700
  %v1384 = vunpack.c.h.b16 %v700
  %v1385 = vunpack.c.l.b16 %v701
  %v1386 = vunpack.c.l.b16 %v702
  %v1387 = vunpack.c.h.b16 %v702
  %v1388 = vunpack.c.l.b16 %v703
  %v1389 = vunpack.c.h.b16 %v703
  %v1390 = vunpack.c.l.b16 %v704
  %v1391 = vunpack.c.h.b16 %v704
  %v1392 = vunpack.c.l.b16 %v705
  %v1393 = vunpack.c.h.b16 %v705
  %v1394 = vunpack.c.l.b16 %v706
  %v1395 = vunpack.c.l.b16 %v707
  %v1396 = vunpack.c.h.b16 %v707
  %v1397 = vunpack.c.l.b16 %v708
  %v1398 = vunpack.c.h.b16 %v708
  %v1399 = vunpack.c.l.b16 %v709
  %v1400 = vunpack.c.h.b16 %v709
  %v1401 = vunpack.c.l.b16 %v710
  %v1402 = vunpack.c.h.b16 %v710
  %v1403 = vunpack.c.l.b16 %v711
  %v1404 = vunpack.c.l.b16 %v712
  %v1405 = vunpack.c.h.b16 %v712
  %v1406 = vunpack.c.l.b16 %v713
  %v1407 = vunpack.c.h.b16 %v713
  %v1408 = vunpack.c.l.b16 %v714
  %v1409 = vunpack.c.h.b16 %v714
  %v1410 = vunpack.c.l.b16 %v715
  %v1411 = vunpack.c.h.b16 %v715
  %v1412 = vunpack.c.l.b16 %v716
  %v1413 = vunpack.c.l.b16 %v717
  %v1414 = vunpack.c.h.b16 %v717
  %v1415 = vunpack.c.l.b16 %v718
  %v1416 = vunpack.c.h.b16 %v718
  %v1417 = vunpack.c.l.b16 %v719
  %v1418 = vunpack.c.h.b16 %v719
  %v1419 = vunpack.c.l.b16 %v720
  %v1420 = vunpack.c.h.b16 %v720
  %v1421 = vunpack.c.l.b16 %v721
  %v1422 = vunpack.c.l.b16 %v722
  %v1423 = vunpack.c.h.b16 %v722
  %v1424 = vunpack.c.l.b16 %v723
  %v1425 = vunpack.c.h.b16 %v723
  %v1426 = vunpack.c.l.b16 %v724
  %v1427 = vunpack.c.h.b16 %v724
  %v1428 = vunpack.c.l.b16 %v725
  %v1429 = vunpack.c.h.b16 %v725
  %v1430 = vunpack.c.l.b16 %v726
  %v1431 = vunpack.c.l.b16 %v727
  %v1432 = vunpack.c.h.b16 %v727
  %v1433 = vunpack.c.l.b16 %v728
  %v1434 = vunpack.c.h.b16 %v728
  %v1435 = vunpack.c.l.b16 %v729
  %v1436 = vunpack.c.h.b16 %v729
  %v1437 = vunpack.c.l.b16 %v730
  %v1438 = vunpack.c.h.b16 %v730
  %v1439 = vunpack.c.l.b16 %v731
  %v1440 = vunpack.c.l.b16 %v732
  %v1441 = vunpack.c.h.b16 %v732
  %v1442 = vunpack.c.l.b16 %v733
  %v1443 = vunpack.c.h.b16 %v733
  %v1444 = vunpack.c.l.b16 %v734
  %v1445 = vunpack.c.h.b16 %v734
  %v1446 = vunpack.c.l.b16 %v735
  %v1447 = vunpack.c.h.b16 %v735
  %v1448 = vunpack.c.l.b16 %v736
  %v1449 = vunpack.c.l.b16 %v737
  %v1450 = vunpack.c.h.b16 %v737
  %v1451 = vunpack.c.l.b16 %v738
  %v1452 = vunpack.c.h.b16 %v738
  %v1453 = vunpack.c.l.b16 %v739
  %v1454 = vunpack.c.h.b16 %v739
  %v1455 = vunpack.c.l.b16 %v740
  %v1456 = vunpack.c.h.b16 %v740
  %v1457 = vunpack.c.l.b16 %v741
  %v1458 = vunpack.c.l.b16 %v742
  %v1459 = vunpack.c.h.b16 %v742
  %v1460 = vunpack.c.l.b16 %v743
  %v1461 = vunpack.c.h.b16 %v743
  %v1462 = vunpack.c.l.b16 %v744
  %v1463 = vunpack.c.h.b16 %v744
  %v1464 = vunpack.c.l.b16 %v745
  %v1465 = vunpack.c.h.b16 %v745
  %v1466 = vunpack.c.l.b16 %v746
  %v1467 = vunpack.c.l.b16 %v747
  %v1468 = vunpack.c.h.b16 %v747
  %v1469 = vunpack.c.l.b16 %v748
  %v1470 = vunpack.c.h.b16 %v748
  %v1471 = vunpack.c.l.b16 %v749
  %v1472 = vunpack.c.h.b16 %v749
  %v1473 = vunpack.c.l.b16 %v750
  %v1474 = vunpack.c.h.b16 %v750
  %v1475 = vunpack.c.l.b16 %v751
  %v1476 = vunpack.c.l.b16 %v752
  %v1477 = vunpack.c.h.b16 %v752
  %v1478 = vunpack.c.l.b16 %v753
  %v1479 = vunpack.c.h.b16 %v753
  %v1480 = vunpack.c.l.b16 %v754
  %v1481 = vunpack.c.h.b16 %v754
  %v1482 = vunpack.c.l.b16 %v755
  %v1483 = vunpack.c.h.b16 %v755
  %v1484 = vunpack.c.l.b16 %v756
  %v1485 = vunpack.c.l.b16 %v757
  %v1486 = vunpack.c.h.b16 %v757
  %v1487 = vunpack.c.l.b16 %v758
  %v1488 = vunpack.c.h.b16 %v758
  %v1489 = vunpack.c.l.b16 %v759
  %v1490 = vunpack.c.h.b16 %v759
  %v1491 = vunpack.c.l.b16 %v760
  %v1492 = vunpack.c.h.b16 %v760
  %v1493 = vunpack.c.l.b16 %v761
  %v1494 = vunpack.c.l.b16 %v762
  %v1495 = vunpack.c.h.b16 %v762
  %v1496 = vunpack.c.l.b16 %v763
  %v1497 = vunpack.c.h.b16 %v763
  %v1498 = vunpack.c.l.b16 %v764
  %v1499 = vunpack.c.h.b16 %v764
  %v1500 = vunpack.c.l.b16 %v765
  %v1501 = vunpack.c.h.b16 %v765
  %v1502 = vunpack.c.l.b16 %v766
  %v1503 = vunpack.c.l.b16 %v767
  %v1504 = vunpack.c.h.b16 %v767
  %v1505 = vunpack.c.l.b16 %v768
  %v1506 = vunpack.c.h.b16 %v768
  %v1507 = vunpack.c.l.b16 %v769
  %v1508 = vunpack.c.h.b16 %v769
  %v1509 = vunpack.c.l.b16 %v770
  %v1510 = vunpack.c.h.b16 %v770
  %v1511 = vunpack.c.l.b16 %v771
  %v1512 = vunpack.c.l.b16 %v772
  %v1513 = vunpack.c.h.b16 %v772
  %v1514 = vunpack.c.l.b16 %v773
  %v1515 = vunpack.c.h.b16 %v773
  %v1516 = vunpack.c.l.b16 %v774
  %v1517 = vunpack.c.h.b16 %v774
  %v1518 = vunpack.c.l.b16 %v775
  %v1519 = vunpack.c.h.b16 %v775
  %v1520 = vunpack.c.l.b16 %v776
  %v1521 = vunpack.c.l.b16 %v777
  %v1522 = vunpack.c.h.b16 %v777
  %v1523 = vunpack.c.l.b16 %v778
  %v1524 = vunpack.c.h.b16 %v778
  %v1525 = vunpack.c.l.b16 %v779
  %v1526 = vunpack.c.h.b16 %v779
  %v1527 = vunpack.c.l.b16 %v780
  %v1528 = vunpack.c.h.b16 %v780
  %v1529 = vunpack.c.l.b16 %v781
  %v1530 = vunpack.c.l.b16 %v782
  %v1531 = vunpack.c.h.b16 %v782
  %v1532 = vunpack.c.l.b16 %v783
  %v1533 = vunpack.c.h.b16 %v783
  %v1534 = vunpack.c.l.b16 %v784
  %v1535 = vunpack.c.h.b16 %v784
  %v1536 = vunpack.c.l.b16 %v785
  %v1537 = vunpack.c.h.b16 %v785
  %v1538 = vunpack.c.l.b16 %v786
  %v1539 = vunpack.c.l.b16 %v787
  %v1540 = vunpack.c.h.b16 %v787
  %v1541 = vunpack.c.l.b16 %v788
  %v1542 = vunpack.c.h.b16 %v788
  %v1543 = vunpack.c.l.b16 %v789
  %v1544 = vunpack.c.h.b16 %v789
  %v1545 = vunpack.c.l.b16 %v790
  %v1546 = vunpack.c.h.b16 %v790
  %v1547 = vunpack.c.l.b16 %v791
  %v1548 = vunpack.c.l.b16 %v792
  %v1549 = vunpack.c.h.b16 %v792
  %v1550 = vunpack.c.l.b16 %v793
  %v1551 = vunpack.c.h.b16 %v793
  %v1552 = vunpack.c.l.b16 %v794
  %v1553 = vunpack.c.h.b16 %v794
  %v1554 = vunpack.c.l.b16 %v795
  %v1555 = vunpack.c.h.b16 %v795
  %v1556 = vunpack.c.l.b16 %v796
  %v1557 = vunpack.c.l.b16 %v797
  %v1558 = vunpack.c.h.b16 %v797
  %v1559 = vunpack.c.l.b16 %v798
  %v1560 = vunpack.c.h.b16 %v798
  %v1561 = vunpack.c.l.b16 %v799
  %v1562 = vunpack.c.h.b16 %v799
  %v1563 = vunpack.c.l.b16 %v800
  %v1564 = vunpack.c.h.b16 %v800
  %v1565 = vunpack.c.l.b16 %v801
  %v1566 = vunpack.c.l.b16 %v802
  %v1567 = vunpack.c.h.b16 %v802
  %v1568 = vunpack.c.l.b16 %v803
  %v1569 = vunpack.c.h.b16 %v803
  %v1570 = vunpack.c.l.b16 %v804
  %v1571 = vunpack.c.h.b16 %v804
  %v1572 = vunpack.c.l.b16 %v805
  %v1573 = vunpack.c.h.b16 %v805
  %v1574 = vunpack.c.l.b16 %v806
  %v1575 = vunpack.c.l.b16 %v807
  %v1576 = vunpack.c.h.b16 %v807
  %v1577 = vunpack.c.l.b16 %v808
  %v1578 = vunpack.c.h.b16 %v808
  %v1579 = vunpack.c.l.b16 %v809
  %v1580 = vunpack.c.h.b16 %v809
  %v1581 = vunpack.c.l.b16 %v810
  %v1582 = vunpack.c.h.b16 %v810
  %v1583 = vunpack.c.l.b16 %v811
  %v1584 = vunpack.c.l.b16 %v812
  %v1585 = vunpack.c.h.b16 %v812
  %v1586 = vunpack.c.l.b16 %v813
  %v1587 = vunpack.c.h.b16 %v813
  %v1588 = vunpack.c.l.b16 %v814
  %v1589 = vunpack.c.h.b16 %v814
  %v1590 = vunpack.c.l.b16 %v815
  %v1591 = vunpack.c.h.b16 %v815
  %v1592 = vunpack.c.l.b16 %v816
  %v1593 = vunpack.c.l.b16 %v817
  %v1594 = vunpack.c.h.b16 %v817
  %v1595 = vunpack.c.l.b16 %v818
  %v1596 = vunpack.c.h.b16 %v818
  %v1597 = vunpack.c.l.b16 %v819
  %v1598 = vunpack.c.h.b16 %v819
  %v1599 = vunpack.c.l.b16 %v820
  %v1600 = vunpack.c.h.b16 %v820
  %v1601 = vunpack.c.l.b16 %v821
  %v1602 = vunpack.c.l.b16 %v822
  %v1603 = vunpack.c.h.b16 %v822
  %v1604 = vunpack.c.l.b16 %v823
  %v1605 = vunpack.c.h.b16 %v823
  %v1606 = vunpack.c.l.b16 %v824
  %v1607 = vunpack.c.h.b16 %v824
  %v1608 = vunpack.c.l.b16 %v825
  %v1609 = vunpack.c.h.b16 %v825
  %v1610 = vunpack.c.l.b16 %v826
  %v1611 = vunpack.c.l.b16 %v827
  %v1612 = vunpack.c.h.b16 %v827
  %v1613 = vunpack.c.l.b16 %v828
  %v1614 = vunpack.c.h.b16 %v828
  %v1615 = vunpack.c.l.b16 %v829
  %v1616 = vunpack.c.h.b16 %v829
  %v1617 = vunpack.c.l.b16 %v830
  %v1618 = vunpack.c.h.b16 %v830
  %v1619 = vunpack.c.l.b16 %v831
  %v1620 = vunpack.c.l.b16 %v832
  %v1621 = vunpack.c.h.b16 %v832
  %v1622 = vunpack.c.l.b16 %v833
  %v1623 = vunpack.c.h.b16 %v833
  %v1624 = vunpack.c.l.b16 %v834
  %v1625 = vunpack.c.h.b16 %v834
  %v1626 = vunpack.c.l.b16 %v835
  %v1627 = vunpack.c.h.b16 %v835
  %v1628 = vunpack.c.l.b16 %v836
  %v1629 = vunpack.c.l.b16 %v837
  %v1630 = vunpack.c.h.b16 %v837
  %v1631 = vunpack.c.l.b16 %v838
  %v1632 = vunpack.c.h.b16 %v838
  %v1633 = vunpack.c.l.b16 %v839
  %v1634 = vunpack.c.h.b16 %v839
  %v1635 = vunpack.c.l.b16 %v840
  %v1636 = vunpack.c.h.b16 %v840
  %v1637 = vunpack.c.l.b16 %v841
  %v1638 = vunpack.c.l.b16 %v842
  %v1639 = vunpack.c.h.b16 %v842
  %v1640 = vunpack.c.l.b16 %v843
  %v1641 = vunpack.c.h.b16 %v843
  %v1642 = vunpack.c.l.b16 %v844
  %v1643 = vunpack.c.h.b16 %v844
  %v1644 = vunpack.c.l.b16 %v845
  %v1645 = vunpack.c.h.b16 %v845
  %v1646 = vunpack.c.l.b16 %v846
  %v1647 = vunpack.c.l.b16 %v847
  %v1648 = vunpack.c.h.b16 %v847
  %v1649 = vunpack.c.l.b16 %v848
  %v1650 = vunpack.c.h.b16 %v848
  %v1651 = vunpack.c.l.b16 %v849
  %v1652 = vunpack.c.h.b16 %v849
  %v1653 = vunpack.c.l.b16 %v850
  %v1654 = vunpack.c.h.b16 %v850
  %v1655 = vunpack.c.l.b16 %v851
  %v1656 = vunpack.c.l.b16 %v852
  %v1657 = vunpack.c.h.b16 %v852
  %v1658 = vunpack.c.l.b16 %v853
  %v1659 = vunpack.c.h.b16 %v853
  %v1660 = vunpack.c.l.b16 %v854
  %v1661 = vunpack.c.h.b16 %v854
  %v1662 = vunpack.c.l.b16 %v855
  %v1663 = vunpack.c.h.b16 %v855
  %v1664 = vunpack.c.l.b16 %v856
  %v1665 = vunpack.c.l.b16 %v857
  %v1666 = vunpack.c.h.b16 %v857
  %v1667 = vunpack.c.l.b16 %v858
  %v1668 = vunpack.c.h.b16 %v858
  %v1669 = vunpack.c.l.b16 %v859
  %v1670 = vunpack.c.h.b16 %v859
  %v1671 = vunpack.c.l.b16 %v860
  %v1672 = vunpack.c.h.b16 %v860
  %v1673 = vunpack.c.l.b16 %v861
  %v1674 = vunpack.c.l.b16 %v862
  %v1675 = vunpack.c.h.b16 %v862
  %v1676 = vunpack.c.l.b16 %v863
  %v1677 = vunpack.c.h.b16 %v863
  %v1678 = vunpack.c.l.b16 %v864
  %v1679 = vunpack.c.h.b16 %v864
  %v1680 = vunpack.c.l.b16 %v865
  %v1681 = vunpack.c.h.b16 %v865
  %v1682 = vunpack.c.l.b16 %v866
  %v1683 = vunpack.c.l.b16 %v867
  %v1684 = vunpack.c.h.b16 %v867
  %v1685 = vunpack.c.l.b16 %v868
  %v1686 = vunpack.c.h.b16 %v868
  %v1687 = vunpack.c.l.b16 %v869
  %v1688 = vunpack.c.h.b16 %v869
  %v1689 = vunpack.c.l.b16 %v870
  %v1690 = vunpack.c.h.b16 %v870
  %v1691 = vunpack.c.l.b16 %v871
  %v1692 = vunpack.c.l.b16 %v872
  %v1693 = vunpack.c.h.b16 %v872
  %v1694 = vunpack.c.l.b16 %v873
  %v1695 = vunpack.c.h.b16 %v873
  %v1696 = vunpack.c.l.b16 %v874
  %v1697 = vunpack.c.h.b16 %v874
  %v1698 = vunpack.c.l.b16 %v875
  %v1699 = vunpack.c.h.b16 %v875
  %v1700 = vunpack.c.l.b16 %v876
  %v1701 = vunpack.c.l.b16 %v877
  %v1702 = vunpack.c.h.b16 %v877
  %v1703 = vunpack.c.l.b16 %v878
  %v1704 = vunpack.c.h.b16 %v878
  %v1705 = vunpack.c.l.b16 %v879
  %v1706 = vunpack.c.h.b16 %v879
  %v1707 = vunpack.c.l.b16 %v880
  %v1708 = vunpack.c.h.b16 %v880
  %v1709 = vunpack.c.l.b16 %v881
  %v1710 = vunpack.c.l.b16 %v882
  %v1711 = vunpack.c.h.b16 %v882
  %v1712 = vunpack.c.l.b16 %v883
  %v1713 = vunpack.c.h.b16 %v883
  %v1714 = vunpack.c.l.b16 %v884
  %v1715 = vunpack.c.h.b16 %v884
  %v1716 = vunpack.c.l.b16 %v885
  %v1717 = vunpack.c.h.b16 %v885
  %v1718 = vunpack.c.l.b16 %v886
  %v1719 = vunpack.c.l.b16 %v887
  %v1720 = vunpack.c.h.b16 %v887
  %v1721 = vunpack.c.l.b16 %v888
  %v1722 = vunpack.c.h.b16 %v888
  %v1723 = vunpack.c.l.b16 %v889
  %v1724 = vunpack.c.h.b16 %v889
  %v1725 = vunpack.c.l.b16 %v890
  %v1726 = vunpack.c.h.b16 %v890
  %v1727 = vunpack.c.l.b16 %v891
  %v1728 = vunpack.c.l.b16 %v892
  %v1729 = vunpack.c.h.b16 %v892
  %v1730 = vunpack.c.l.b16 %v893
  %v1731 = vunpack.c.h.b16 %v893
  %v1732 = vunpack.c.l.b16 %v894
  %v1733 = vunpack.c.h.b16 %v894
  %v1734 = vunpack.c.l.b16 %v895
  %v1735 = vunpack.c.h.b16 %v895
  %v1736 = vunpack.c.l.b16 %v896
  %v1737 = vunpack.c.l.b16 %v897
  %v1738 = vunpack.c.h.b16 %v897
  %v1739 = vunpack.c.l.b16 %v898
  %v1740 = vunpack.c.h.b16 %v898
  %v1741 = vunpack.c.l.b16 %v899
  %v1742 = vunpack.c.h.b16 %v899
  %v1743 = vunpack.c.l.b16 %v900
  %v1744 = vunpack.c.h.b16 %v900
  %v1745 = vunpack.c.l.b16 %v901
  %v1746 = vunpack.c.l.b16 %v902
  %v1747 = vunpack.c.h.b16 %v902
  %v1748 = vunpack.c.l.b16 %v903
  %v1749 = vunpack.c.h.b16 %v903
  %v1750 = vunpack.c.l.b16 %v904
  %v1751 = vunpack.c.h.b16 %v904
  %v1752 = vunpack.c.l.b16 %v905
  %v1753 = vunpack.c.h.b16 %v905
  %v1754 = vunpack.c.l.b16 %v906
  %v1755 = vunpack.c.l.b16 %v907
  %v1756 = vunpack.c.h.b16 %v907
  %v1757 = vunpack.c.l.b16 %v908
  %v1758 = vunpack.c.h.b16 %v908
  %v1759 = vunpack.c.l.b16 %v909
  %v1760 = vunpack.c.h.b16 %v909
  %v1761 = vunpack.c.l.b16 %v910
  %v1762 = vunpack.c.h.b16 %v910
  %v1763 = vunpack.c.l.b16 %v911
  %v1764 = vunpack.c.l.b16 %v912
  %v1765 = vunpack.c.h.b16 %v912
  %v1766 = vunpack.c.l.b16 %v913
  %v1767 = vunpack.c.h.b16 %v913
  %v1768 = vunpack.c.l.b16 %v914
  %v1769 = vunpack.c.h.b16 %v914
  %v1770 = vunpack.c.l.b16 %v915
  %v1771 = vunpack.c.h.b16 %v915
  %v1772 = vunpack.c.l.b16 %v916
  %v1773 = vunpack.c.l.b16 %v917
  %v1774 = vunpack.c.h.b16 %v917
  %v1775 = vunpack.c.l.b16 %v918
  %v1776 = vunpack.c.h.b16 %v918
  %v1777 = vunpack.c.l.b16 %v919
  %v1778 = vunpack.c.h.b16 %v919
  %v1779 = vunpack.c.l.b16 %v920
  %v1780 = vunpack.c.h.b16 %v920
  %v1781 = vunpack.c.l.b16 %v921
  %v1782 = vunpack.c.l.b16 %v922
  %v1783 = vunpack.c.h.b16 %v922
  %v1784 = vunpack.c.l.b16 %v923
  %v1785 = vunpack.c.h.b16 %v923
  %v1786 = vunpack.c.l.b16 %v924
  %v1787 = vunpack.c.h.b16 %v924
  %v1788 = vunpack.c.l.b16 %v925
  %v1789 = vunpack.c.h.b16 %v925
  %v1790 = vunpack.c.l.b16 %v926
  %v1791 = vunpack.c.l.b16 %v927
  %v1792 = vunpack.c.h.b16 %v927
  %v1793 = vunpack.c.l.b16 %v928
  %v1794 = vunpack.c.h.b16 %v928
  %v1795 = vunpack.c.l.b16 %v929
  %v1796 = vunpack.c.h.b16 %v929
  %v1797 = vunpack.c.l.b16 %v930
  %v1798 = vunpack.c.h.b16 %v930
  %v1799 = vunpack.c.l.b16 %v931
  %v1800 = vunpack.c.l.b16 %v932
  %v1801 = vunpack.c.h.b16 %v932
  %v1802 = vunpack.c.l.b16 %v933
  %v1803 = vunpack.c.h.b16 %v933
  %v1804 = vunpack.c.l.b16 %v934
  %v1805 = vunpack.c.h.b16 %v934
  %v1806 = vunpack.c.l.b16 %v935
  %v1807 = vunpack.c.h.b16 %v935
  %v1808 = vunpack.c.l.b16 %v936
  %v1809 = vunpack.c.l.b16 %v937
  %v1810 = vunpack.c.h.b16 %v937
  %v1811 = vunpack.c.l.b16 %v938
  %v1812 = vunpack.c.h.b16 %v938
  %v1813 = vunpack.c.l.b16 %v939
  %v1814 = vunpack.c.h.b16 %v939
  %v1815 = vunpack.c.l.b16 %v940
  %v1816 = vunpack.c.h.b16 %v940
  %v1817 = vunpack.c.l.b16 %v941
  %v1818 = vunpack.c.l.b16 %v942
  %v1819 = vunpack.c.h.b16 %v942
  %v1820 = vunpack.c.l.b16 %v943
  %v1821 = vunpack.c.h.b16 %v943
  %v1822 = vunpack.c.l.b16 %v944
  %v1823 = vunpack.c.h.b16 %v944
  %v1824 = vunpack.c.l.b16 %v945
  %v1825 = vunpack.c.h.b16 %v945
  %v1826 = vunpack.c.l.b16 %v946
  %v1827 = vunpack.c.l.b16 %v947
  %v1828 = vunpack.c.h.b16 %v947
  %v1829 = vunpack.c.l.b16 %v948
  %v1830 = vunpack.c.h.b16 %v948
  %v1831 = vunpack.c.l.b16 %v949
  %v1832 = vunpack.c.h.b16 %v949
  %v1833 = vunpack.c.l.b16 %v950
  %v1834 = vunpack.c.h.b16 %v950
  %v1835 = vunpack.c.l.b16 %v951
  %v1836 = vunpack.c.l.b16 %v952
  %v1837 = vunpack.c.h.b16 %v952
  %v1838 = vunpack.c.l.b16 %v953
  %v1839 = vunpack.c.h.b16 %v953
  %v1840 = vunpack.c.l.b16 %v954
  %v1841 = vunpack.c.h.b16 %v954
  %v1842 = vunpack.c.l.b16 %v955
  %v1843 = vunpack.c.h.b16 %v955
  %v1844 = vunpack.c.l.b16 %v956
  %v1845 = vunpack.c.l.b16 %v957
  %v1846 = vunpack.c.h.b16 %v957
  %v1847 = vunpack.c.l.b16 %v958
  %v1848 = vunpack.c.h.b16 %v958
  %v1849 = vunpack.c.l.b16 %v959
  %v1850 = vunpack.c.h.b16 %v959
  %v1851 = vunpack.c.l.b16 %v960
  %v1852 = vunpack.c.h.b16 %v960
  %v1853 = vunpack.c.l.b16 %v961
  %v1854 = vunpack.c.l.b16 %v962
  %v1855 = vunpack.c.h.b16 %v962
  %v1856 = vunpack.c.l.b16 %v963
  %v1857 = vunpack.c.h.b16 %v963
  %v1858 = vunpack.c.l.b16 %v964
  %v1859 = vunpack.c.h.b16 %v964
  %v1860 = vunpack.c.l.b16 %v965
  %v1861 = vunpack.c.h.b16 %v965
  %v1862 = vunpack.c.l.b16 %v966
  %v1863 = vpack.c.b16 %v1296, %v1287
  %v1864 = vpack.c.b16 %v1297, %v1288
  %v1865 = vpack.c.b16 %v1298, %v1289
  %v1866 = vpack.c.b16 %v1299, %v1290
  %v1867 = vpack.c.b16 %v1300, %v1291
  %v1868 = vpack.c.b16 %v1301, %v1292
  %v1869 = vpack.c.b16 %v1302, %v1293
  %v1870 = vpack.c.b16 %v1303, %v1294
  %v1871 = vpack.c.b16 %v1304, %v1295
  %v1872 = vpack.c.b16 %v1314, %v1305
  %v1873 = vpack.c.b16 %v1315, %v1306
  %v1874 = vpack.c.b16 %v1316, %v1307
  %v1875 = vpack.c.b16 %v1317, %v1308
  %v1876 = vpack.c.b16 %v1318, %v1309
  %v1877 = vpack.c.b16 %v1319, %v1310
  %v1878 = vpack.c.b16 %v1320, %v1311
  %v1879 = vpack.c.b16 %v1321, %v1312
  %v1880 = vpack.c.b16 %v1322, %v1313
  %v1881 = vpack.c.b16 %v1332, %v1323
  %v1882 = vpack.c.b16 %v1333, %v1324
  %v1883 = vpack.c.b16 %v1334, %v1325
  %v1884 = vpack.c.b16 %v1335, %v1326
  %v1885 = vpack.c.b16 %v1336, %v1327
  %v1886 = vpack.c.b16 %v1337, %v1328
  %v1887 = vpack.c.b16 %v1338, %v1329
  %v1888 = vpack.c.b16 %v1339, %v1330
  %v1889 = vpack.c.b16 %v1340, %v1331
  %v1890 = vpack.c.b16 %v1350, %v1341
  %v1891 = vpack.c.b16 %v1351, %v1342
  %v1892 = vpack.c.b16 %v1352, %v1343
  %v1893 = vpack.c.b16 %v1353, %v1344
  %v1894 = vpack.c.b16 %v1354, %v1345
  %v1895 = vpack.c.b16 %v1355, %v1346
  %v1896 = vpack.c.b16 %v1356, %v1347
  %v1897 = vpack.c.b16 %v1357, %v1348
  %v1898 = vpack.c.b16 %v1358, %v1349
  %v1899 = vpack.c.b16 %v1368, %v1359
  %v1900 = vpack.c.b16 %v1369, %v1360
  %v1901 = vpack.c.b16 %v1370, %v1361
  %v1902 = vpack.c.b16 %v1371, %v1362
  %v1903 = vpack.c.b16 %v1372, %v1363
  %v1904 = vpack.c.b16 %v1373, %v1364
  %v1905 = vpack.c.b16 %v1374, %v1365
  %v1906 = vpack.c.b16 %v1375, %v1366
  %v1907 = vpack.c.b16 %v1376, %v1367
  %v1908 = vpack.c.b16 %v1386, %v1377
  %v1909 = vpack.c.b16 %v1387, %v1378
  %v1910 = vpack.c.b16 %v1388, %v1379
  %v1911 = vpack.c.b16 %v1389, %v1380
  %v1912 = vpack.c.b16 %v1390, %v1381
  %v1913 = vpack.c.b16 %v1391, %v1382
  %v1914 = vpack.c.b16 %v1392, %v1383
  %v1915 = vpack.c.b16 %v1393, %v1384
  %v1916 = vpack.c.b16 %v1394, %v1385
  %v1917 = vpack.c.b16 %v1404, %v1395
  %v1918 = vpack.c.b16 %v1405, %v1396
  %v1919 = vpack.c.b16 %v1406, %v1397
  %v1920 = vpack.c.b16 %v1407, %v1398
  %v1921 = vpack.c.b16 %v1408, %v1399
  %v1922 = vpack.c.b16 %v1409, %v1400
  %v1923 = vpack.c.b16 %v1410, %v1401
  %v1924 = vpack.c.b16 %v1411, %v1402
  %v1925 = vpack.c.b16 %v1412, %v1403
  %v1926 = vpack.c.b16 %v1422, %v1413
  %v1927 = vpack.c.b16 %v1423, %v1414
  %v1928 = vpack.c.b16 %v1424, %v1415
  %v1929 = vpack.c.b16 %v1425, %v1416
  %v1930 = vpack.c.b16 %v1426, %v1417
  %v1931 = vpack.c.b16 %v1427, %v1418
  %v1932 = vpack.c.b16 %v1428, %v1419
  %v1933 = vpack.c.b16 %v1429, %v1420
  %v1934 = vpack.c.b16 %v1430, %v1421
  %v1935 = vpack.c.b16 %v1440, %v1431
  %v1936 = vpack.c.b16 %v1441, %v1432
  %v1937 = vpack.c.b16 %v1442, %v1433
  %v1938 = vpack.c.b16 %v1443, %v1434
  %v1939 = vpack.c.b16 %v1444, %v1435
  %v1940 = vpack.c.b16 %v1445, %v1436
  %v1941 = vpack.c.b16 %v1446, %v1437
  %v1942 = vpack.c.b16 %v1447, %v1438
  %v1943 = vpack.c.b16 %v1448, %v1439
  %v1944 = vpack.c.b16 %v1458, %v1449
  %v1945 = vpack.c.b16 %v1459, %v1450
  %v1946 = vpack.c.b16 %v1460, %v1451
  %v1947 = vpack.c.b16 %v1461, %v1452
  %v1948 = vpack.c.b16 %v1462, %v1453
  %v1949 = vpack.c.b16 %v1463, %v1454
  %v1950 = vpack.c.b16 %v1464, %v1455
  %v1951 = vpack.c.b16 %v1465, %v1456
  %v1952 = vpack.c.b16 %v1466, %v1457
  %v1953 = vpack.c.b16 %v1476, %v1467
  %v1954 = vpack.c.b16 %v1477, %v1468
  %v1955 = vpack.c.b16 %v1478, %v1469
  %v1956 = vpack.c.b16 %v1479, %v1470
  %v1957 = vpack.c.b16 %v1480, %v1471
  %v1958 = vpack.c.b16 %v1481, %v1472
  %v1959 = vpack.c.b16 %v1482, %v1473
  %v1960 = vpack.c.b16 %v1483, %v1474
  %v1961 = vpack.c.b16 %v1484, %v1475
  %v1962 = vpack.c.b16 %v1494, %v1485
  %v1963 = vpack.c.b16 %v1495, %v1486
  %v1964 = vpack.c.b16 %v1496, %v1487
  %v1965 = vpack.c.b16 %v1497, %v1488
  %v1966 = vpack.c.b16 %v1498, %v1489
  %v1967 = vpack.c.b16 %v1499, %v1490
  %v1968 = vpack.c.b16 %v1500, %v1491
  %v1969 = vpack.c.b16 %v1501, %v1492
  %v1970 = vpack.c.b16 %v1502, %v1493
  %v1971 = vpack.c.b16 %v1512, %v1503
  %v1972 = vpack.c.b16 %v1513, %v1504
  %v1973 = vpack.c.b16 %v1514, %v1505
  %v1974 = vpack.c.b16 %v1515, %v1506
  %v1975 = vpack.c.b16 %v1516, %v1507
  %v1976 = vpack.c.b16 %v1517, %v1508
  %v1977 = vpack.c.b16 %v1518, %v1509
  %v1978 = vpack.c.b16 %v1519, %v1510
  %v1979 = vpack.c.b16 %v1520, %v1511
  %v1980 = vpack.c.b16 %v1530, %v1521
  %v1981 = vpack.c.b16 %v1531, %v1522
  %v1982 = vpack.c.b16 %v1532, %v1523
  %v1983 = vpack.c.b16 %v1533, %v1524
  %v1984 = vpack.c.b16 %v1534, %v1525
  %v1985 = vpack.c.b16 %v1535, %v1526
  %v1986 = vpack.c.b16 %v1536, %v1527
  %v1987 = vpack.c.b16 %v1537, %v1528
  %v1988 = vpack.c.b16 %v1538, %v1529
  %v1989 = vpack.c.b16 %v1548, %v1539
  %v1990 = vpack.c.b16 %v1549, %v1540
  %v1991 = vpack.c.b16 %v1550, %v1541
  %v1992 = vpack.c.b16 %v1551, %v1542
  %v1993 = vpack.c.b16 %v1552, %v1543
  %v1994 = vpack.c.b16 %v1553, %v1544
  %v1995 = vpack.c.b16 %v1554, %v1545
  %v1996 = vpack.c.b16 %v1555, %v1546
  %v1997 = vpack.c.b16 %v1556, %v1547
  %v1998 = vpack.c.b16 %v1566, %v1557
  %v1999 = vpack.c.b16 %v1567, %v1558
  %v2000 = vpack.c.b16 %v1568, %v1559
  %v2001 = vpack.c.b16 %v1569, %v1560
  %v2002 = vpack.c.b16 %v1570, %v1561
  %v2003 = vpack.c.b16 %v1571, %v1562
  %v2004 = vpack.c.b16 %v1572, %v1563
  %v2005 = vpack.c.b16 %v1573, %v1564
  %v2006 = vpack.c.b16 %v1574, %v1565
  %v2007 = vpack.c.b16 %v1584, %v1575
  %v2008 = vpack.c.b16 %v1585, %v1576
  %v2009 = vpack.c.b16 %v1586, %v1577
  %v2010 = vpack.c.b16 %v1587, %v1578
  %v2011 = vpack.c.b16 %v1588, %v1579
  %v2012 = vpack.c.b16 %v1589, %v1580
  %v2013 = vpack.c.b16 %v1590, %v1581
  %v2014 = vpack.c.b16 %v1591, %v1582
  %v2015 = vpack.c.b16 %v1592, %v1583
  %v2016 = vpack.c.b16 %v1602, %v1593
  %v2017 = vpack.c.b16 %v1603, %v1594
  %v2018 = vpack.c.b16 %v1604, %v1595
  %v2019 = vpack.c.b16 %v1605, %v1596
  %v2020 = vpack.c.b16 %v1606, %v1597
  %v2021 = vpack.c.b16 %v1607, %v1598
  %v2022 = vpack.c.b16 %v1608, %v1599
  %v2023 = vpack.c.b16 %v1609, %v1600
  %v2024 = vpack.c.b16 %v1610, %v1601
  %v2025 = vpack.c.b16 %v1620, %v1611
  %v2026 = vpack.c.b16 %v1621, %v1612
  %v2027 = vpack.c.b16 %v1622, %v1613
  %v2028 = vpack.c.b16 %v1623, %v1614
  %v2029 = vpack.c.b16 %v1624, %v1615
  %v2030 = vpack.c.b16 %v1625, %v1616
  %v2031 = vpack.c.b16 %v1626, %v1617
  %v2032 = vpack.c.b16 %v1627, %v1618
  %v2033 = vpack.c.b16 %v1628, %v1619
  %v2034 = vpack.c.b16 %v1638, %v1629
  %v2035 = vpack.c.b16 %v1639, %v1630
  %v2036 = vpack.c.b16 %v1640, %v1631
  %v2037 = vpack.c.b16 %v1641, %v1632
  %v2038 = vpack.c.b16 %v1642, %v1633
  %v2039 = vpack.c.b16 %v1643, %v1634
  %v2040 = vpack.c.b16 %v1644, %v1635
  %v2041 = vpack.c.b16 %v1645, %v1636
  %v2042 = vpack.c.b16 %v1646, %v1637
  %v2043 = vpack.c.b16 %v1656, %v1647
  %v2044 = vpack.c.b16 %v1657, %v1648
  %v2045 = vpack.c.b16 %v1658, %v1649
  %v2046 = vpack.c.b16 %v1659, %v1650
  %v2047 = vpack.c.b16 %v1660, %v1651
  %v2048 = vpack.c.b16 %v1661, %v1652
  %v2049 = vpack.c.b16 %v1662, %v1653
  %v2050 = vpack.c.b16 %v1663, %v1654
  %v2051 = vpack.c.b16 %v1664, %v1655
  %v2052 = vpack.c.b16 %v1674, %v1665
  %v2053 = vpack.c.b16 %v1675, %v1666
  %v2054 = vpack.c.b16 %v1676, %v1667
  %v2055 = vpack.c.b16 %v1677, %v1668
  %v2056 = vpack.c.b16 %v1678, %v1669
  %v2057 = vpack.c.b16 %v1679, %v1670
  %v2058 = vpack.c.b16 %v1680, %v1671
  %v2059 = vpack.c.b16 %v1681, %v1672
  %v2060 = vpack.c.b16 %v1682, %v1673
  %v2061 = vpack.c.b16 %v1692, %v1683
  %v2062 = vpack.c.b16 %v1693, %v1684
  %v2063 = vpack.c.b16 %v1694, %v1685
  %v2064 = vpack.c.b16 %v1695, %v1686
  %v2065 = vpack.c.b16 %v1696, %v1687
  %v2066 = vpack.c.b16 %v1697, %v1688
  %v2067 = vpack.c.b16 %v1698, %v1689
  %v2068 = vpack.c.b16 %v1699, %v1690
  %v2069 = vpack.c.b16 %v1700, %v1691
  %v2070 = vpack.c.b16 %v1710, %v1701
  %v2071 = vpack.c.b16 %v1711, %v1702
  %v2072 = vpack.c.b16 %v1712, %v1703
  %v2073 = vpack.c.b16 %v1713, %v1704
  %v2074 = vpack.c.b16 %v1714, %v1705
  %v2075 = vpack.c.b16 %v1715, %v1706
  %v2076 = vpack.c.b16 %v1716, %v1707
  %v2077 = vpack.c.b16 %v1717, %v1708
  %v2078 = vpack.c.b16 %v1718, %v1709
  %v2079 = vpack.c.b16 %v1728, %v1719
  %v2080 = vpack.c.b16 %v1729, %v1720
  %v2081 = vpack.c.b16 %v1730, %v1721
  %v2082 = vpack.c.b16 %v1731, %v1722
  %v2083 = vpack.c.b16 %v1732, %v1723
  %v2084 = vpack.c.b16 %v1733, %v1724
  %v2085 = vpack.c.b16 %v1734, %v1725
  %v2086 = vpack.c.b16 %v1735, %v1726
  %v2087 = vpack.c.b16 %v1736, %v1727
  %v2088 = vpack.c.b16 %v1746, %v1737
  %v2089 = vpack.c.b16 %v1747, %v1738
  %v2090 = vpack.c.b16 %v1748, %v1739
  %v2091 = vpack.c.b16 %v1749, %v1740
  %v2092 = vpack.c.b16 %v1750, %v1741
  %v2093 = vpack.c.b16 %v1751, %v1742
  %v2094 = vpack.c.b16 %v1752, %v1743
  %v2095 = vpack.c.b16 %v1753, %v1744
  %v2096 = vpack.c.b16 %v1754, %v1745
  %v2097 = vpack.c.b16 %v1764, %v1755
  %v2098 = vpack.c.b16 %v1765, %v1756
  %v2099 = vpack.c.b16 %v1766, %v1757
  %v2100 = vpack.c.b16 %v1767, %v1758
  %v2101 = vpack.c.b16 %v1768, %v1759
  %v2102 = vpack.c.b16 %v1769, %v1760
  %v2103 = vpack.c.b16 %v1770, %v1761
  %v2104 = vpack.c.b16 %v1771, %v1762
  %v2105 = vpack.c.b16 %v1772, %v1763
  %v2106 = vpack.c.b16 %v1782, %v1773
  %v2107 = vpack.c.b16 %v1783, %v1774
  %v2108 = vpack.c.b16 %v1784, %v1775
  %v2109 = vpack.c.b16 %v1785, %v1776
  %v2110 = vpack.c.b16 %v1786, %v1777
  %v2111 = vpack.c.b16 %v1787, %v1778
  %v2112 = vpack.c.b16 %v1788, %v1779
  %v2113 = vpack.c.b16 %v1789, %v1780
  %v2114 = vpack.c.b16 %v1790, %v1781
  %v2115 = vpack.c.b16 %v1800, %v1791
  %v2116 = vpack.c.b16 %v1801, %v1792
  %v2117 = vpack.c.b16 %v1802, %v1793
  %v2118 = vpack.c.b16 %v1803, %v1794
  %v2119 = vpack.c.b16 %v1804, %v1795
  %v2120 = vpack.c.b16 %v1805, %v1796
  %v2121 = vpack.c.b16 %v1806, %v1797
  %v2122 = vpack.c.b16 %v1807, %v1798
  %v2123 = vpack.c.b16 %v1808, %v1799
  %v2124 = vpack.c.b16 %v1818, %v1809
  %v2125 = vpack.c.b16 %v1819, %v1810
  %v2126 = vpack.c.b16 %v1820, %v1811
  %v2127 = vpack.c.b16 %v1821, %v1812
  %v2128 = vpack.c.b16 %v1822, %v1813
  %v2129 = vpack.c.b16 %v1823, %v1814
  %v2130 = vpack.c.b16 %v1824, %v1815
  %v2131 = vpack.c.b16 %v1825, %v1816
  %v2132 = vpack.c.b16 %v1826, %v1817
  %v2133 = vpack.c.b16 %v1836, %v1827
  %v2134 = vpack.c.b16 %v1837, %v1828
  %v2135 = vpack.c.b16 %v1838, %v1829
  %v2136 = vpack.c.b16 %v1839, %v1830
  %v2137 = vpack.c.b16 %v1840, %v1831
  %v2138 = vpack.c.b16 %v1841, %v1832
  %v2139 = vpack.c.b16 %v1842, %v1833
  %v2140 = vpack.c.b16 %v1843, %v1834
  %v2141 = vpack.c.b16 %v1844, %v1835
  %v2142 = vpack.c.b16 %v1854, %v1845
  %v2143 = vpack.c.b16 %v1855, %v1846
  %v2144 = vpack.c.b16 %v1856, %v1847
  %v2145 = vpack.c.b16 %v1857, %v1848
  %v2146 = vpack.c.b16 %v1858, %v1849
  %v2147 = vpack.c.b16 %v1859, %v1850
  %v2148 = vpack.c.b16 %v1860, %v1851
  %v2149 = vpack.c.b16 %v1861, %v1852
  %v2150 = vpack.c.b16 %v1862, %v1853
  %2439 = vmatprep.subr.bf16.mxu0 %v1927
  %2440 = vmatpush1.bf16.msra.mxu0 %v1926
  %2441 = vmatprep.subr.bf16.mxu0 %v1918
  %2442 = vmatpush1.bf16.msra.mxu0 %v1917
  %2443 = vmatprep.subr.bf16.mxu0 %v1909
  %2444 = vmatpush1.bf16.msra.mxu0 %v1908
  %2445 = vmatprep.subr.bf16.mxu0 %v1900
  %2446 = vmatpush1.bf16.msra.mxu0 %v1899
  %2447 = vmatprep.subr.bf16.mxu0 %v1891
  %2448 = vmatpush1.bf16.msra.mxu0 %v1890
  %2449 = vmatprep.subr.bf16.mxu0 %v1882
  %2450 = vmatpush1.bf16.msra.mxu0 %v1881
  %2451 = vmatprep.subr.bf16.mxu0 %v1873
  %2452 = vmatpush1.bf16.msra.mxu0 %v1872
  %2453 = vmatprep.subr.bf16.mxu0 %v1864
  %2454 = vmatpush1.bf16.msra.mxu0 %v1863
  %2455 = vmatprep.subr.bf16.mxu0 %v1999
  %2456 = vmatpush2.bf16.msra.mxu0 %v1998
  %2457 = vmatprep.subr.bf16.mxu0 %v1990
  %2458 = vmatpush2.bf16.msra.mxu0 %v1989
  %2459 = vmatprep.subr.bf16.mxu0 %v1981
  %2460 = vmatpush2.bf16.msra.mxu0 %v1980
  %2461 = vmatprep.subr.bf16.mxu0 %v1972
  %2462 = vmatpush2.bf16.msra.mxu0 %v1971
  %2463 = vmatprep.subr.bf16.mxu0 %v1963
  %2464 = vmatpush2.bf16.msra.mxu0 %v1962
  %2465 = vmatprep.subr.bf16.mxu0 %v1954
  %2466 = vmatpush2.bf16.msra.mxu0 %v1953
  %2467 = vmatprep.subr.bf16.mxu0 %v1945
  %2468 = vmatpush2.bf16.msra.mxu0 %v1944
  %2469 = vmatprep.subr.bf16.mxu0 %v1936
  %2470 = vmatpush2.bf16.msra.mxu0 %v1935
  %2471 = vmatprep.mubr.bf16.mxu0 %v644
  %2472 = vmatmul.mubr.bf16.gmra.mxu0 %v643
  %v2473 = vpop.f32.mrf.mxu0
  %v2474 = vadd.f32 0.0, %v2473
  %v2475 = vpop.f32.mrf.mxu0
  %v2476 = vadd.f32 0.0, %v2475
  %v2477 = vpop.f32.mrf.mxu0
  %v2478 = vpop.f32.mrf.mxu0
  %2479 = vdwg.mxu0
  %2480 = vmatprep.subr.bf16.mxu0 %v2071
  %2481 = vmatpush1.bf16.msra.mxu0 %v2070
  %2482 = vmatprep.subr.bf16.mxu0 %v2062
  %2483 = vmatpush1.bf16.msra.mxu0 %v2061
  %2484 = vmatprep.subr.bf16.mxu0 %v2053
  %2485 = vmatpush1.bf16.msra.mxu0 %v2052
  %2486 = vmatprep.subr.bf16.mxu0 %v2044
  %2487 = vmatpush1.bf16.msra.mxu0 %v2043
  %2488 = vmatprep.subr.bf16.mxu0 %v2035
  %2489 = vmatpush1.bf16.msra.mxu0 %v2034
  %2490 = vmatprep.subr.bf16.mxu0 %v2026
  %2491 = vmatpush1.bf16.msra.mxu0 %v2025
  %2492 = vmatprep.subr.bf16.mxu0 %v2017
  %2493 = vmatpush1.bf16.msra.mxu0 %v2016
  %2494 = vmatprep.subr.bf16.mxu0 %v2008
  %2495 = vmatpush1.bf16.msra.mxu0 %v2007
  %2496 = vmatprep.subr.bf16.mxu0 %v2143
  %2497 = vmatpush2.bf16.msra.mxu0 %v2142
  %2498 = vmatprep.subr.bf16.mxu0 %v2134
  %2499 = vmatpush2.bf16.msra.mxu0 %v2133
  %2500 = vmatprep.subr.bf16.mxu0 %v2125
  %2501 = vmatpush2.bf16.msra.mxu0 %v2124
  %2502 = vmatprep.subr.bf16.mxu0 %v2116
  %2503 = vmatpush2.bf16.msra.mxu0 %v2115
  %2504 = vmatprep.subr.bf16.mxu0 %v2107
  %2505 = vmatpush2.bf16.msra.mxu0 %v2106
  %2506 = vmatprep.subr.bf16.mxu0 %v2098
  %2507 = vmatpush2.bf16.msra.mxu0 %v2097
  %2508 = vmatprep.subr.bf16.mxu0 %v2089
  %2509 = vmatpush2.bf16.msra.mxu0 %v2088
  %2510 = vmatprep.subr.bf16.mxu0 %v2080
  %2511 = vmatpush2.bf16.msra.mxu0 %v2079
  %2512 = vmatprep.mubr.bf16.mxu0 %v646
  %2513 = vmatmul.mubr.bf16.gmra.mxu0 %v645
  %v2514 = vpop.f32.mrf.mxu0
  %v2515 = vadd.f32 %v2474, %v2514
  %v2516 = vpop.f32.mrf.mxu0
  %v2517 = vadd.f32 %v2476, %v2516
  %v2518 = vpop.f32.mrf.mxu0
  %v2519 = vpop.f32.mrf.mxu0
  %2520 = vdwg.mxu0
  %2521 = vmatprep.subr.bf16.mxu0 %v1929
  %2522 = vmatpush1.bf16.msra.mxu0 %v1928
  %2523 = vmatprep.subr.bf16.mxu0 %v1920
  %2524 = vmatpush1.bf16.msra.mxu0 %v1919
  %2525 = vmatprep.subr.bf16.mxu0 %v1911
  %2526 = vmatpush1.bf16.msra.mxu0 %v1910
  %2527 = vmatprep.subr.bf16.mxu0 %v1902
  %2528 = vmatpush1.bf16.msra.mxu0 %v1901
  %2529 = vmatprep.subr.bf16.mxu0 %v1893
  %2530 = vmatpush1.bf16.msra.mxu0 %v1892
  %2531 = vmatprep.subr.bf16.mxu0 %v1884
  %2532 = vmatpush1.bf16.msra.mxu0 %v1883
  %2533 = vmatprep.subr.bf16.mxu0 %v1875
  %2534 = vmatpush1.bf16.msra.mxu0 %v1874
  %2535 = vmatprep.subr.bf16.mxu0 %v1866
  %2536 = vmatpush1.bf16.msra.mxu0 %v1865
  %2537 = vmatprep.subr.bf16.mxu0 %v2001
  %2538 = vmatpush2.bf16.msra.mxu0 %v2000
  %2539 = vmatprep.subr.bf16.mxu0 %v1992
  %2540 = vmatpush2.bf16.msra.mxu0 %v1991
  %2541 = vmatprep.subr.bf16.mxu0 %v1983
  %2542 = vmatpush2.bf16.msra.mxu0 %v1982
  %2543 = vmatprep.subr.bf16.mxu0 %v1974
  %2544 = vmatpush2.bf16.msra.mxu0 %v1973
  %2545 = vmatprep.subr.bf16.mxu0 %v1965
  %2546 = vmatpush2.bf16.msra.mxu0 %v1964
  %2547 = vmatprep.subr.bf16.mxu0 %v1956
  %2548 = vmatpush2.bf16.msra.mxu0 %v1955
  %2549 = vmatprep.subr.bf16.mxu0 %v1947
  %2550 = vmatpush2.bf16.msra.mxu0 %v1946
  %2551 = vmatprep.subr.bf16.mxu0 %v1938
  %2552 = vmatpush2.bf16.msra.mxu0 %v1937
  %2553 = vmatprep.mubr.bf16.mxu0 %v644
  %2554 = vmatmul.mubr.bf16.gmra.mxu0 %v643
  %v2555 = vpop.f32.mrf.mxu0
  %v2556 = vadd.f32 0.0, %v2555
  %v2557 = vpop.f32.mrf.mxu0
  %v2558 = vadd.f32 0.0, %v2557
  %v2559 = vpop.f32.mrf.mxu0
  %v2560 = vpop.f32.mrf.mxu0
  %2561 = vdwg.mxu0
  %2562 = vmatprep.subr.bf16.mxu0 %v2073
  %2563 = vmatpush1.bf16.msra.mxu0 %v2072
  %2564 = vmatprep.subr.bf16.mxu0 %v2064
  %2565 = vmatpush1.bf16.msra.mxu0 %v2063
  %2566 = vmatprep.subr.bf16.mxu0 %v2055
  %2567 = vmatpush1.bf16.msra.mxu0 %v2054
  %2568 = vmatprep.subr.bf16.mxu0 %v2046
  %2569 = vmatpush1.bf16.msra.mxu0 %v2045
  %2570 = vmatprep.subr.bf16.mxu0 %v2037
  %2571 = vmatpush1.bf16.msra.mxu0 %v2036
  %2572 = vmatprep.subr.bf16.mxu0 %v2028
  %2573 = vmatpush1.bf16.msra.mxu0 %v2027
  %2574 = vmatprep.subr.bf16.mxu0 %v2019
  %2575 = vmatpush1.bf16.msra.mxu0 %v2018
  %2576 = vmatprep.subr.bf16.mxu0 %v2010
  %2577 = vmatpush1.bf16.msra.mxu0 %v2009
  %2578 = vmatprep.subr.bf16.mxu0 %v2145
  %2579 = vmatpush2.bf16.msra.mxu0 %v2144
  %2580 = vmatprep.subr.bf16.mxu0 %v2136
  %2581 = vmatpush2.bf16.msra.mxu0 %v2135
  %2582 = vmatprep.subr.bf16.mxu0 %v2127
  %2583 = vmatpush2.bf16.msra.mxu0 %v2126
  %2584 = vmatprep.subr.bf16.mxu0 %v2118
  %2585 = vmatpush2.bf16.msra.mxu0 %v2117
  %2586 = vmatprep.subr.bf16.mxu0 %v2109
  %2587 = vmatpush2.bf16.msra.mxu0 %v2108
  %2588 = vmatprep.subr.bf16.mxu0 %v2100
  %2589 = vmatpush2.bf16.msra.mxu0 %v2099
  %2590 = vmatprep.subr.bf16.mxu0 %v2091
  %2591 = vmatpush2.bf16.msra.mxu0 %v2090
  %2592 = vmatprep.subr.bf16.mxu0 %v2082
  %2593 = vmatpush2.bf16.msra.mxu0 %v2081
  %2594 = vmatprep.mubr.bf16.mxu0 %v646
  %2595 = vmatmul.mubr.bf16.gmra.mxu0 %v645
  %v2596 = vpop.f32.mrf.mxu0
  %v2597 = vadd.f32 %v2556, %v2596
  %v2598 = vpop.f32.mrf.mxu0
  %v2599 = vadd.f32 %v2558, %v2598
  %v2600 = vpop.f32.mrf.mxu0
  %v2601 = vpop.f32.mrf.mxu0
  %2602 = vdwg.mxu0
  %2603 = vmatprep.subr.bf16.mxu0 %v1931
  %2604 = vmatpush1.bf16.msra.mxu0 %v1930
  %2605 = vmatprep.subr.bf16.mxu0 %v1922
  %2606 = vmatpush1.bf16.msra.mxu0 %v1921
  %2607 = vmatprep.subr.bf16.mxu0 %v1913
  %2608 = vmatpush1.bf16.msra.mxu0 %v1912
  %2609 = vmatprep.subr.bf16.mxu0 %v1904
  %2610 = vmatpush1.bf16.msra.mxu0 %v1903
  %2611 = vmatprep.subr.bf16.mxu0 %v1895
  %2612 = vmatpush1.bf16.msra.mxu0 %v1894
  %2613 = vmatprep.subr.bf16.mxu0 %v1886
  %2614 = vmatpush1.bf16.msra.mxu0 %v1885
  %2615 = vmatprep.subr.bf16.mxu0 %v1877
  %2616 = vmatpush1.bf16.msra.mxu0 %v1876
  %2617 = vmatprep.subr.bf16.mxu0 %v1868
  %2618 = vmatpush1.bf16.msra.mxu0 %v1867
  %2619 = vmatprep.subr.bf16.mxu0 %v2003
  %2620 = vmatpush2.bf16.msra.mxu0 %v2002
  %2621 = vmatprep.subr.bf16.mxu0 %v1994
  %2622 = vmatpush2.bf16.msra.mxu0 %v1993
  %2623 = vmatprep.subr.bf16.mxu0 %v1985
  %2624 = vmatpush2.bf16.msra.mxu0 %v1984
  %2625 = vmatprep.subr.bf16.mxu0 %v1976
  %2626 = vmatpush2.bf16.msra.mxu0 %v1975
  %2627 = vmatprep.subr.bf16.mxu0 %v1967
  %2628 = vmatpush2.bf16.msra.mxu0 %v1966
  %2629 = vmatprep.subr.bf16.mxu0 %v1958
  %2630 = vmatpush2.bf16.msra.mxu0 %v1957
  %2631 = vmatprep.subr.bf16.mxu0 %v1949
  %2632 = vmatpush2.bf16.msra.mxu0 %v1948
  %2633 = vmatprep.subr.bf16.mxu0 %v1940
  %2634 = vmatpush2.bf16.msra.mxu0 %v1939
  %2635 = vmatprep.mubr.bf16.mxu0 %v644
  %2636 = vmatmul.mubr.bf16.gmra.mxu0 %v643
  %v2637 = vpop.f32.mrf.mxu0
  %v2638 = vadd.f32 0.0, %v2637
  %v2639 = vpop.f32.mrf.mxu0
  %v2640 = vadd.f32 0.0, %v2639
  %v2641 = vpop.f32.mrf.mxu0
  %v2642 = vpop.f32.mrf.mxu0
  %2643 = vdwg.mxu0
  %2644 = vmatprep.subr.bf16.mxu0 %v2075
  %2645 = vmatpush1.bf16.msra.mxu0 %v2074
  %2646 = vmatprep.subr.bf16.mxu0 %v2066
  %2647 = vmatpush1.bf16.msra.mxu0 %v2065
  %2648 = vmatprep.subr.bf16.mxu0 %v2057
  %2649 = vmatpush1.bf16.msra.mxu0 %v2056
  %2650 = vmatprep.subr.bf16.mxu0 %v2048
  %2651 = vmatpush1.bf16.msra.mxu0 %v2047
  %2652 = vmatprep.subr.bf16.mxu0 %v2039
  %2653 = vmatpush1.bf16.msra.mxu0 %v2038
  %2654 = vmatprep.subr.bf16.mxu0 %v2030
  %2655 = vmatpush1.bf16.msra.mxu0 %v2029
  %2656 = vmatprep.subr.bf16.mxu0 %v2021
  %2657 = vmatpush1.bf16.msra.mxu0 %v2020
  %2658 = vmatprep.subr.bf16.mxu0 %v2012
  %2659 = vmatpush1.bf16.msra.mxu0 %v2011
  %2660 = vmatprep.subr.bf16.mxu0 %v2147
  %2661 = vmatpush2.bf16.msra.mxu0 %v2146
  %2662 = vmatprep.subr.bf16.mxu0 %v2138
  %2663 = vmatpush2.bf16.msra.mxu0 %v2137
  %2664 = vmatprep.subr.bf16.mxu0 %v2129
  %2665 = vmatpush2.bf16.msra.mxu0 %v2128
  %2666 = vmatprep.subr.bf16.mxu0 %v2120
  %2667 = vmatpush2.bf16.msra.mxu0 %v2119
  %2668 = vmatprep.subr.bf16.mxu0 %v2111
  %2669 = vmatpush2.bf16.msra.mxu0 %v2110
  %2670 = vmatprep.subr.bf16.mxu0 %v2102
  %2671 = vmatpush2.bf16.msra.mxu0 %v2101
  %2672 = vmatprep.subr.bf16.mxu0 %v2093
  %2673 = vmatpush2.bf16.msra.mxu0 %v2092
  %2674 = vmatprep.subr.bf16.mxu0 %v2084
  %2675 = vmatpush2.bf16.msra.mxu0 %v2083
  %2676 = vmatprep.mubr.bf16.mxu0 %v646
  %2677 = vmatmul.mubr.bf16.gmra.mxu0 %v645
  %v2678 = vpop.f32.mrf.mxu0
  %v2679 = vadd.f32 %v2638, %v2678
  %v2680 = vpop.f32.mrf.mxu0
  %v2681 = vadd.f32 %v2640, %v2680
  %v2682 = vpop.f32.mrf.mxu0
  %v2683 = vpop.f32.mrf.mxu0
  %2684 = vdwg.mxu0
  %2685 = vmatprep.subr.bf16.mxu0 %v1933
  %2686 = vmatpush1.bf16.msra.mxu0 %v1932
  %2687 = vmatprep.subr.bf16.mxu0 %v1924
  %2688 = vmatpush1.bf16.msra.mxu0 %v1923
  %2689 = vmatprep.subr.bf16.mxu0 %v1915
  %2690 = vmatpush1.bf16.msra.mxu0 %v1914
  %2691 = vmatprep.subr.bf16.mxu0 %v1906
  %2692 = vmatpush1.bf16.msra.mxu0 %v1905
  %2693 = vmatprep.subr.bf16.mxu0 %v1897
  %2694 = vmatpush1.bf16.msra.mxu0 %v1896
  %2695 = vmatprep.subr.bf16.mxu0 %v1888
  %2696 = vmatpush1.bf16.msra.mxu0 %v1887
  %2697 = vmatprep.subr.bf16.mxu0 %v1879
  %2698 = vmatpush1.bf16.msra.mxu0 %v1878
  %2699 = vmatprep.subr.bf16.mxu0 %v1870
  %2700 = vmatpush1.bf16.msra.mxu0 %v1869
  %2701 = vmatprep.subr.bf16.mxu0 %v2005
  %2702 = vmatpush2.bf16.msra.mxu0 %v2004
  %2703 = vmatprep.subr.bf16.mxu0 %v1996
  %2704 = vmatpush2.bf16.msra.mxu0 %v1995
  %2705 = vmatprep.subr.bf16.mxu0 %v1987
  %2706 = vmatpush2.bf16.msra.mxu0 %v1986
  %2707 = vmatprep.subr.bf16.mxu0 %v1978
  %2708 = vmatpush2.bf16.msra.mxu0 %v1977
  %2709 = vmatprep.subr.bf16.mxu0 %v1969
  %2710 = vmatpush2.bf16.msra.mxu0 %v1968
  %2711 = vmatprep.subr.bf16.mxu0 %v1960
  %2712 = vmatpush2.bf16.msra.mxu0 %v1959
  %2713 = vmatprep.subr.bf16.mxu0 %v1951
  %2714 = vmatpush2.bf16.msra.mxu0 %v1950
  %2715 = vmatprep.subr.bf16.mxu0 %v1942
  %2716 = vmatpush2.bf16.msra.mxu0 %v1941
  %2717 = vmatprep.mubr.bf16.mxu0 %v644
  %2718 = vmatmul.mubr.bf16.gmra.mxu0 %v643
  %v2719 = vpop.f32.mrf.mxu0
  %v2720 = vadd.f32 0.0, %v2719
  %v2721 = vpop.f32.mrf.mxu0
  %v2722 = vadd.f32 0.0, %v2721
  %v2723 = vpop.f32.mrf.mxu0
  %v2724 = vpop.f32.mrf.mxu0
  %2725 = vdwg.mxu0
  %2726 = vmatprep.subr.bf16.mxu0 %v2077
  %2727 = vmatpush1.bf16.msra.mxu0 %v2076
  %2728 = vmatprep.subr.bf16.mxu0 %v2068
  %2729 = vmatpush1.bf16.msra.mxu0 %v2067
  %2730 = vmatprep.subr.bf16.mxu0 %v2059
  %2731 = vmatpush1.bf16.msra.mxu0 %v2058
  %2732 = vmatprep.subr.bf16.mxu0 %v2050
  %2733 = vmatpush1.bf16.msra.mxu0 %v2049
  %2734 = vmatprep.subr.bf16.mxu0 %v2041
  %2735 = vmatpush1.bf16.msra.mxu0 %v2040
  %2736 = vmatprep.subr.bf16.mxu0 %v2032
  %2737 = vmatpush1.bf16.msra.mxu0 %v2031
  %2738 = vmatprep.subr.bf16.mxu0 %v2023
  %2739 = vmatpush1.bf16.msra.mxu0 %v2022
  %2740 = vmatprep.subr.bf16.mxu0 %v2014
  %2741 = vmatpush1.bf16.msra.mxu0 %v2013
  %2742 = vmatprep.subr.bf16.mxu0 %v2149
  %2743 = vmatpush2.bf16.msra.mxu0 %v2148
  %2744 = vmatprep.subr.bf16.mxu0 %v2140
  %2745 = vmatpush2.bf16.msra.mxu0 %v2139
  %2746 = vmatprep.subr.bf16.mxu0 %v2131
  %2747 = vmatpush2.bf16.msra.mxu0 %v2130
  %2748 = vmatprep.subr.bf16.mxu0 %v2122
  %2749 = vmatpush2.bf16.msra.mxu0 %v2121
  %2750 = vmatprep.subr.bf16.mxu0 %v2113
  %2751 = vmatpush2.bf16.msra.mxu0 %v2112
  %2752 = vmatprep.subr.bf16.mxu0 %v2104
  %2753 = vmatpush2.bf16.msra.mxu0 %v2103
  %2754 = vmatprep.subr.bf16.mxu0 %v2095
  %2755 = vmatpush2.bf16.msra.mxu0 %v2094
  %2756 = vmatprep.subr.bf16.mxu0 %v2086
  %2757 = vmatpush2.bf16.msra.mxu0 %v2085
  %2758 = vmatprep.mubr.bf16.mxu0 %v646
  %2759 = vmatmul.mubr.bf16.gmra.mxu0 %v645
  %v2760 = vpop.f32.mrf.mxu0
  %v2761 = vadd.f32 %v2720, %v2760
  %v2762 = vpop.f32.mrf.mxu0
  %v2763 = vadd.f32 %v2722, %v2762
  %v2764 = vpop.f32.mrf.mxu0
  %v2765 = vpop.f32.mrf.mxu0
  %2766 = vdwg.mxu0
  %2767 = vmatprep.subr.bf16.mxu0 0
  %2768 = vmatpush1.bf16.msra.mxu0 %v1934
  %2769 = vmatprep.subr.bf16.mxu0 0
  %2770 = vmatpush1.bf16.msra.mxu0 %v1925
  %2771 = vmatprep.subr.bf16.mxu0 0
  %2772 = vmatpush1.bf16.msra.mxu0 %v1916
  %2773 = vmatprep.subr.bf16.mxu0 0
  %2774 = vmatpush1.bf16.msra.mxu0 %v1907
  %2775 = vmatprep.subr.bf16.mxu0 0
  %2776 = vmatpush1.bf16.msra.mxu0 %v1898
  %2777 = vmatprep.subr.bf16.mxu0 0
  %2778 = vmatpush1.bf16.msra.mxu0 %v1889
  %2779 = vmatprep.subr.bf16.mxu0 0
  %2780 = vmatpush1.bf16.msra.mxu0 %v1880
  %2781 = vmatprep.subr.bf16.mxu0 0
  %2782 = vmatpush1.bf16.msra.mxu0 %v1871
  %2783 = vmatprep.subr.bf16.mxu0 0
  %2784 = vmatpush2.bf16.msra.mxu0 %v2006
  %2785 = vmatprep.subr.bf16.mxu0 0
  %2786 = vmatpush2.bf16.msra.mxu0 %v1997
  %2787 = vmatprep.subr.bf16.mxu0 0
  %2788 = vmatpush2.bf16.msra.mxu0 %v1988
  %2789 = vmatprep.subr.bf16.mxu0 0
  %2790 = vmatpush2.bf16.msra.mxu0 %v1979
  %2791 = vmatprep.subr.bf16.mxu0 0
  %2792 = vmatpush2.bf16.msra.mxu0 %v1970
  %2793 = vmatprep.subr.bf16.mxu0 0
  %2794 = vmatpush2.bf16.msra.mxu0 %v1961
  %2795 = vmatprep.subr.bf16.mxu0 0
  %2796 = vmatpush2.bf16.msra.mxu0 %v1952
  %2797 = vmatprep.subr.bf16.mxu0 0
  %2798 = vmatpush2.bf16.msra.mxu0 %v1943
  %2799 = vmatprep.mubr.bf16.mxu0 %v644
  %2800 = vmatmul.mubr.bf16.gmra.mxu0 %v643
  %v2801 = vpop.f32.mrf.mxu0
  %v2802 = vadd.f32 0.0, %v2801
  %v2803 = vpop.f32.mrf.mxu0
  %v2804 = vpop.f32.mrf.mxu0
  %v2805 = vpop.f32.mrf.mxu0
  %2806 = vdwg.mxu0
  %2807 = vmatprep.subr.bf16.mxu0 0
  %2808 = vmatpush1.bf16.msra.mxu0 %v2078
  %2809 = vmatprep.subr.bf16.mxu0 0
  %2810 = vmatpush1.bf16.msra.mxu0 %v2069
  %2811 = vmatprep.subr.bf16.mxu0 0
  %2812 = vmatpush1.bf16.msra.mxu0 %v2060
  %2813 = vmatprep.subr.bf16.mxu0 0
  %2814 = vmatpush1.bf16.msra.mxu0 %v2051
  %2815 = vmatprep.subr.bf16.mxu0 0
  %2816 = vmatpush1.bf16.msra.mxu0 %v2042
  %2817 = vmatprep.subr.bf16.mxu0 0
  %2818 = vmatpush1.bf16.msra.mxu0 %v2033
  %2819 = vmatprep.subr.bf16.mxu0 0
  %2820 = vmatpush1.bf16.msra.mxu0 %v2024
  %2821 = vmatprep.subr.bf16.mxu0 0
  %2822 = vmatpush1.bf16.msra.mxu0 %v2015
  %2823 = vmatprep.subr.bf16.mxu0 0
  %2824 = vmatpush2.bf16.msra.mxu0 %v2150
  %2825 = vmatprep.subr.bf16.mxu0 0
  %2826 = vmatpush2.bf16.msra.mxu0 %v2141
  %2827 = vmatprep.subr.bf16.mxu0 0
  %2828 = vmatpush2.bf16.msra.mxu0 %v2132
  %2829 = vmatprep.subr.bf16.mxu0 0
  %2830 = vmatpush2.bf16.msra.mxu0 %v2123
  %2831 = vmatprep.subr.bf16.mxu0 0
  %2832 = vmatpush2.bf16.msra.mxu0 %v2114
  %2833 = vmatprep.subr.bf16.mxu0 0
  %2834 = vmatpush2.bf16.msra.mxu0 %v2105
  %2835 = vmatprep.subr.bf16.mxu0 0
  %2836 = vmatpush2.bf16.msra.mxu0 %v2096
  %2837 = vmatprep.subr.bf16.mxu0 0
  %2838 = vmatpush2.bf16.msra.mxu0 %v2087
  %2839 = vmatprep.mubr.bf16.mxu0 %v646
  %2840 = vmatmul.mubr.bf16.gmra.mxu0 %v645
  %v2841 = vpop.f32.mrf.mxu0
  %v2842 = vadd.f32 %v2802, %v2841
  %v2843 = vpop.f32.mrf.mxu0
  %v2844 = vpop.f32.mrf.mxu0
  %v2845 = vpop.f32.mrf.mxu0
  %2846 = vdwg.mxu0
  %v2847 = vpack.c.bf16 %v2515, %v2515
  %v2848 = vpack.c.bf16 %v2517, %v2517
  %v2849 = vpack.c.bf16 %v2597, %v2597
  %v2850 = vpack.c.bf16 %v2599, %v2599
  %v2851 = vpack.c.bf16 %v2679, %v2679
  %v2852 = vpack.c.bf16 %v2681, %v2681
  %v2853 = vpack.c.bf16 %v2761, %v2761
  %v2854 = vpack.c.bf16 %v2763, %v2763
  %v2855 = vpack.c.bf16 %v2842, %v2842
  %v2856 = vld [vmem:[%s6] sm:$0xff]
  %v2857 = vld [vmem:[%s6 + $0x8] sm:$0xff]
  %v2858 = vld [vmem:[%s5] sm:$0xf]
  %v2859 = vld [vmem:[%s5 + $0x4] sm:$0xf]
  %s2860 = scalar_lea.vmem %s5, 8
  %v2861 = vld [vmem:[%s2860] sm:$0xf]
  %v2862 = vld [vmem:[%s2860 + $0x4] sm:$0xf]
  %v2865 = vunpack.c.l.b16 %v2861
  %v2866 = vunpack.c.l.b16 %v2862
  %v2867 = vpack.c.b16 %v2866, %v2865
  %vm2868 = vcmask 31744
  %v2870 = vsel %vm2868, %v2867, 0
  %vm2872 = vcmask 1041408
  %v2874 = vsel %vm2872, %v2848, 0
  %2876 = vmatprep.subr.bf16.mxu0 0
  %2877 = vmatpush1.bf16.msra.mxu0 0
  %2878 = vmatprep.subr.bf16.mxu0 0
  %2879 = vmatpush1.bf16.msra.mxu0 0
  %2880 = vmatprep.subr.bf16.mxu0 0
  %2881 = vmatpush1.bf16.msra.mxu0 0
  %2882 = vmatprep.subr.bf16.mxu0 0
  %2883 = vmatpush1.bf16.msra.mxu0 0
  %2884 = vmatprep.subr.bf16.mxu0 0
  %2885 = vmatpush1.bf16.msra.mxu0 0
  %2886 = vmatprep.subr.bf16.mxu0 0
  %2887 = vmatpush1.bf16.msra.mxu0 0
  %2888 = vmatprep.subr.bf16.mxu0 0
  %2889 = vmatpush1.bf16.msra.mxu0 0
  %2890 = vmatprep.subr.bf16.mxu0 0
  %2891 = vmatpush1.bf16.msra.mxu0 %v2874
  %2892 = vmatprep.subr.bf16.mxu0 0
  %2893 = vmatpush2.bf16.msra.mxu0 0
  %2894 = vmatprep.subr.bf16.mxu0 0
  %2895 = vmatpush2.bf16.msra.mxu0 0
  %2896 = vmatprep.subr.bf16.mxu0 0
  %2897 = vmatpush2.bf16.msra.mxu0 0
  %2898 = vmatprep.subr.bf16.mxu0 0
  %2899 = vmatpush2.bf16.msra.mxu0 0
  %2900 = vmatprep.subr.bf16.mxu0 0
  %2901 = vmatpush2.bf16.msra.mxu0 0
  %2902 = vmatprep.subr.bf16.mxu0 0
  %2903 = vmatpush2.bf16.msra.mxu0 0
  %2904 = vmatprep.subr.bf16.mxu0 0
  %2905 = vmatpush2.bf16.msra.mxu0 0
  %2906 = vmatprep.subr.bf16.mxu0 0
  %2907 = vmatpush2.bf16.msra.mxu0 0
  %2908 = vmatprep.mubr.bf16.mxu0 0
  %2909 = vmatmul.mubr.bf16.gmra.mxu0 %v2870
  %v2910 = vpop.f32.mrf.mxu0
  %v2911 = vadd.f32 0.0, %v2910
  %v2912 = vpop.f32.mrf.mxu0
  %v2913 = vpop.f32.mrf.mxu0
  %v2914 = vadd.f32 0.0, %v2913
  %v2915 = vpop.f32.mrf.mxu0
  %2916 = vdwg.mxu0
  %v2919 = vunpack.c.l.b16 %v2858
  %v2920 = vunpack.c.l.b16 %v2859
  %v2921 = vpack.c.b16 %v2920, %v2919
  %v2923 = vsel %vm2868, %v2921, 0
  %v2926 = vsel %vm2872, %v2847, 0
  %2928 = vmatprep.subr.bf16.mxu0 0
  %2929 = vmatpush1.bf16.msra.mxu0 0
  %2930 = vmatprep.subr.bf16.mxu0 0
  %2931 = vmatpush1.bf16.msra.mxu0 0
  %2932 = vmatprep.subr.bf16.mxu0 0
  %2933 = vmatpush1.bf16.msra.mxu0 0
  %2934 = vmatprep.subr.bf16.mxu0 0
  %2935 = vmatpush1.bf16.msra.mxu0 0
  %2936 = vmatprep.subr.bf16.mxu0 0
  %2937 = vmatpush1.bf16.msra.mxu0 0
  %2938 = vmatprep.subr.bf16.mxu0 0
  %2939 = vmatpush1.bf16.msra.mxu0 0
  %2940 = vmatprep.subr.bf16.mxu0 0
  %2941 = vmatpush1.bf16.msra.mxu0 0
  %2942 = vmatprep.subr.bf16.mxu0 0
  %2943 = vmatpush1.bf16.msra.mxu0 %v2926
  %2944 = vmatprep.subr.bf16.mxu0 0
  %2945 = vmatpush2.bf16.msra.mxu0 0
  %2946 = vmatprep.subr.bf16.mxu0 0
  %2947 = vmatpush2.bf16.msra.mxu0 0
  %2948 = vmatprep.subr.bf16.mxu0 0
  %2949 = vmatpush2.bf16.msra.mxu0 0
  %2950 = vmatprep.subr.bf16.mxu0 0
  %2951 = vmatpush2.bf16.msra.mxu0 0
  %2952 = vmatprep.subr.bf16.mxu0 0
  %2953 = vmatpush2.bf16.msra.mxu0 0
  %2954 = vmatprep.subr.bf16.mxu0 0
  %2955 = vmatpush2.bf16.msra.mxu0 0
  %2956 = vmatprep.subr.bf16.mxu0 0
  %2957 = vmatpush2.bf16.msra.mxu0 0
  %2958 = vmatprep.subr.bf16.mxu0 0
  %2959 = vmatpush2.bf16.msra.mxu0 0
  %2960 = vmatprep.mubr.bf16.mxu0 0
  %2961 = vmatmul.mubr.bf16.gmra.mxu0 %v2923
  %v2962 = vpop.f32.mrf.mxu0
  %v2963 = vadd.f32 %v2911, %v2962
  %v2964 = vpop.f32.mrf.mxu0
  %v2965 = vpop.f32.mrf.mxu0
  %v2966 = vadd.f32 %v2914, %v2965
  %v2967 = vpop.f32.mrf.mxu0
  %2968 = vdwg.mxu0
  %s2969 = scalar_lea.vmem %s5, 16
  %v2970 = vld [vmem:[%s2969] sm:$0xf]
  %v2971 = vld [vmem:[%s2969 + $0x4] sm:$0xf]
  %v2974 = vunpack.c.l.b16 %v2970
  %v2975 = vunpack.c.l.b16 %v2971
  %v2976 = vpack.c.b16 %v2975, %v2974
  %v2978 = vsel %vm2868, %v2976, 0
  %v2981 = vsel %vm2872, %v2849, 0
  %2983 = vmatprep.subr.bf16.mxu0 0
  %2984 = vmatpush1.bf16.msra.mxu0 0
  %2985 = vmatprep.subr.bf16.mxu0 0
  %2986 = vmatpush1.bf16.msra.mxu0 0
  %2987 = vmatprep.subr.bf16.mxu0 0
  %2988 = vmatpush1.bf16.msra.mxu0 0
  %2989 = vmatprep.subr.bf16.mxu0 0
  %2990 = vmatpush1.bf16.msra.mxu0 0
  %2991 = vmatprep.subr.bf16.mxu0 0
  %2992 = vmatpush1.bf16.msra.mxu0 0
  %2993 = vmatprep.subr.bf16.mxu0 0
  %2994 = vmatpush1.bf16.msra.mxu0 0
  %2995 = vmatprep.subr.bf16.mxu0 0
  %2996 = vmatpush1.bf16.msra.mxu0 0
  %2997 = vmatprep.subr.bf16.mxu0 0
  %2998 = vmatpush1.bf16.msra.mxu0 %v2981
  %2999 = vmatprep.subr.bf16.mxu0 0
  %3000 = vmatpush2.bf16.msra.mxu0 0
  %3001 = vmatprep.subr.bf16.mxu0 0
  %3002 = vmatpush2.bf16.msra.mxu0 0
  %3003 = vmatprep.subr.bf16.mxu0 0
  %3004 = vmatpush2.bf16.msra.mxu0 0
  %3005 = vmatprep.subr.bf16.mxu0 0
  %3006 = vmatpush2.bf16.msra.mxu0 0
  %3007 = vmatprep.subr.bf16.mxu0 0
  %3008 = vmatpush2.bf16.msra.mxu0 0
  %3009 = vmatprep.subr.bf16.mxu0 0
  %3010 = vmatpush2.bf16.msra.mxu0 0
  %3011 = vmatprep.subr.bf16.mxu0 0
  %3012 = vmatpush2.bf16.msra.mxu0 0
  %3013 = vmatprep.subr.bf16.mxu0 0
  %3014 = vmatpush2.bf16.msra.mxu0 0
  %3015 = vmatprep.mubr.bf16.mxu0 0
  %3016 = vmatmul.mubr.bf16.gmra.mxu0 %v2978
  %v3017 = vpop.f32.mrf.mxu0
  %v3018 = vadd.f32 0.0, %v3017
  %v3019 = vpop.f32.mrf.mxu0
  %v3020 = vpop.f32.mrf.mxu0
  %v3021 = vadd.f32 0.0, %v3020
  %v3022 = vpop.f32.mrf.mxu0
  %3023 = vdwg.mxu0
  %v3024 = vadd.f32 %v2963, %v3018
  %v3025 = vadd.f32 %v2966, %v3021
  %s3026 = scalar_lea.vmem %s5, 24
  %v3027 = vld [vmem:[%s3026] sm:$0xf]
  %v3028 = vld [vmem:[%s3026 + $0x4] sm:$0xf]
  %v3031 = vunpack.c.l.b16 %v3027
  %v3032 = vunpack.c.l.b16 %v3028
  %v3033 = vpack.c.b16 %v3032, %v3031
  %v3035 = vsel %vm2868, %v3033, 0
  %v3038 = vsel %vm2872, %v2850, 0
  %3040 = vmatprep.subr.bf16.mxu0 0
  %3041 = vmatpush1.bf16.msra.mxu0 0
  %3042 = vmatprep.subr.bf16.mxu0 0
  %3043 = vmatpush1.bf16.msra.mxu0 0
  %3044 = vmatprep.subr.bf16.mxu0 0
  %3045 = vmatpush1.bf16.msra.mxu0 0
  %3046 = vmatprep.subr.bf16.mxu0 0
  %3047 = vmatpush1.bf16.msra.mxu0 0
  %3048 = vmatprep.subr.bf16.mxu0 0
  %3049 = vmatpush1.bf16.msra.mxu0 0
  %3050 = vmatprep.subr.bf16.mxu0 0
  %3051 = vmatpush1.bf16.msra.mxu0 0
  %3052 = vmatprep.subr.bf16.mxu0 0
  %3053 = vmatpush1.bf16.msra.mxu0 0
  %3054 = vmatprep.subr.bf16.mxu0 0
  %3055 = vmatpush1.bf16.msra.mxu0 %v3038
  %3056 = vmatprep.subr.bf16.mxu0 0
  %3057 = vmatpush2.bf16.msra.mxu0 0
  %3058 = vmatprep.subr.bf16.mxu0 0
  %3059 = vmatpush2.bf16.msra.mxu0 0
  %3060 = vmatprep.subr.bf16.mxu0 0
  %3061 = vmatpush2.bf16.msra.mxu0 0
  %3062 = vmatprep.subr.bf16.mxu0 0
  %3063 = vmatpush2.bf16.msra.mxu0 0
  %3064 = vmatprep.subr.bf16.mxu0 0
  %3065 = vmatpush2.bf16.msra.mxu0 0
  %3066 = vmatprep.subr.bf16.mxu0 0
  %3067 = vmatpush2.bf16.msra.mxu0 0
  %3068 = vmatprep.subr.bf16.mxu0 0
  %3069 = vmatpush2.bf16.msra.mxu0 0
  %3070 = vmatprep.subr.bf16.mxu0 0
  %3071 = vmatpush2.bf16.msra.mxu0 0
  %3072 = vmatprep.mubr.bf16.mxu0 0
  %3073 = vmatmul.mubr.bf16.gmra.mxu0 %v3035
  %v3074 = vpop.f32.mrf.mxu0
  %v3075 = vadd.f32 0.0, %v3074
  %v3076 = vpop.f32.mrf.mxu0
  %v3077 = vpop.f32.mrf.mxu0
  %v3078 = vadd.f32 0.0, %v3077
  %v3079 = vpop.f32.mrf.mxu0
  %3080 = vdwg.mxu0
  %v3081 = vadd.f32 %v3024, %v3075
  %v3082 = vadd.f32 %v3025, %v3078
  %s3083 = scalar_lea.vmem %s5, 32
  %v3084 = vld [vmem:[%s3083] sm:$0xf]
  %v3085 = vld [vmem:[%s3083 + $0x4] sm:$0xf]
  %v3088 = vunpack.c.l.b16 %v3084
  %v3089 = vunpack.c.l.b16 %v3085
  %v3090 = vpack.c.b16 %v3089, %v3088
  %v3092 = vsel %vm2868, %v3090, 0
  %v3095 = vsel %vm2872, %v2851, 0
  %3097 = vmatprep.subr.bf16.mxu0 0
  %3098 = vmatpush1.bf16.msra.mxu0 0
  %3099 = vmatprep.subr.bf16.mxu0 0
  %3100 = vmatpush1.bf16.msra.mxu0 0
  %3101 = vmatprep.subr.bf16.mxu0 0
  %3102 = vmatpush1.bf16.msra.mxu0 0
  %3103 = vmatprep.subr.bf16.mxu0 0
  %3104 = vmatpush1.bf16.msra.mxu0 0
  %3105 = vmatprep.subr.bf16.mxu0 0
  %3106 = vmatpush1.bf16.msra.mxu0 0
  %3107 = vmatprep.subr.bf16.mxu0 0
  %3108 = vmatpush1.bf16.msra.mxu0 0
  %3109 = vmatprep.subr.bf16.mxu0 0
  %3110 = vmatpush1.bf16.msra.mxu0 0
  %3111 = vmatprep.subr.bf16.mxu0 0
  %3112 = vmatpush1.bf16.msra.mxu0 %v3095
  %3113 = vmatprep.subr.bf16.mxu0 0
  %3114 = vmatpush2.bf16.msra.mxu0 0
  %3115 = vmatprep.subr.bf16.mxu0 0
  %3116 = vmatpush2.bf16.msra.mxu0 0
  %3117 = vmatprep.subr.bf16.mxu0 0
  %3118 = vmatpush2.bf16.msra.mxu0 0
  %3119 = vmatprep.subr.bf16.mxu0 0
  %3120 = vmatpush2.bf16.msra.mxu0 0
  %3121 = vmatprep.subr.bf16.mxu0 0
  %3122 = vmatpush2.bf16.msra.mxu0 0
  %3123 = vmatprep.subr.bf16.mxu0 0
  %3124 = vmatpush2.bf16.msra.mxu0 0
  %3125 = vmatprep.subr.bf16.mxu0 0
  %3126 = vmatpush2.bf16.msra.mxu0 0
  %3127 = vmatprep.subr.bf16.mxu0 0
  %3128 = vmatpush2.bf16.msra.mxu0 0
  %3129 = vmatprep.mubr.bf16.mxu0 0
  %3130 = vmatmul.mubr.bf16.gmra.mxu0 %v3092
  %v3131 = vpop.f32.mrf.mxu0
  %v3132 = vadd.f32 0.0, %v3131
  %v3133 = vpop.f32.mrf.mxu0
  %v3134 = vpop.f32.mrf.mxu0
  %v3135 = vadd.f32 0.0, %v3134
  %v3136 = vpop.f32.mrf.mxu0
  %3137 = vdwg.mxu0
  %v3138 = vadd.f32 %v3081, %v3132
  %v3139 = vadd.f32 %v3082, %v3135
  %s3140 = scalar_lea.vmem %s5, 40
  %v3141 = vld [vmem:[%s3140] sm:$0xf]
  %v3142 = vld [vmem:[%s3140 + $0x4] sm:$0xf]
  %v3145 = vunpack.c.l.b16 %v3141
  %v3146 = vunpack.c.l.b16 %v3142
  %v3147 = vpack.c.b16 %v3146, %v3145
  %v3149 = vsel %vm2868, %v3147, 0
  %v3152 = vsel %vm2872, %v2852, 0
  %3154 = vmatprep.subr.bf16.mxu0 0
  %3155 = vmatpush1.bf16.msra.mxu0 0
  %3156 = vmatprep.subr.bf16.mxu0 0
  %3157 = vmatpush1.bf16.msra.mxu0 0
  %3158 = vmatprep.subr.bf16.mxu0 0
  %3159 = vmatpush1.bf16.msra.mxu0 0
  %3160 = vmatprep.subr.bf16.mxu0 0
  %3161 = vmatpush1.bf16.msra.mxu0 0
  %3162 = vmatprep.subr.bf16.mxu0 0
  %3163 = vmatpush1.bf16.msra.mxu0 0
  %3164 = vmatprep.subr.bf16.mxu0 0
  %3165 = vmatpush1.bf16.msra.mxu0 0
  %3166 = vmatprep.subr.bf16.mxu0 0
  %3167 = vmatpush1.bf16.msra.mxu0 0
  %3168 = vmatprep.subr.bf16.mxu0 0
  %3169 = vmatpush1.bf16.msra.mxu0 %v3152
  %3170 = vmatprep.subr.bf16.mxu0 0
  %3171 = vmatpush2.bf16.msra.mxu0 0
  %3172 = vmatprep.subr.bf16.mxu0 0
  %3173 = vmatpush2.bf16.msra.mxu0 0
  %3174 = vmatprep.subr.bf16.mxu0 0
  %3175 = vmatpush2.bf16.msra.mxu0 0
  %3176 = vmatprep.subr.bf16.mxu0 0
  %3177 = vmatpush2.bf16.msra.mxu0 0
  %3178 = vmatprep.subr.bf16.mxu0 0
  %3179 = vmatpush2.bf16.msra.mxu0 0
  %3180 = vmatprep.subr.bf16.mxu0 0
  %3181 = vmatpush2.bf16.msra.mxu0 0
  %3182 = vmatprep.subr.bf16.mxu0 0
  %3183 = vmatpush2.bf16.msra.mxu0 0
  %3184 = vmatprep.subr.bf16.mxu0 0
  %3185 = vmatpush2.bf16.msra.mxu0 0
  %3186 = vmatprep.mubr.bf16.mxu0 0
  %3187 = vmatmul.mubr.bf16.gmra.mxu0 %v3149
  %v3188 = vpop.f32.mrf.mxu0
  %v3189 = vadd.f32 0.0, %v3188
  %v3190 = vpop.f32.mrf.mxu0
  %v3191 = vpop.f32.mrf.mxu0
  %v3192 = vadd.f32 0.0, %v3191
  %v3193 = vpop.f32.mrf.mxu0
  %3194 = vdwg.mxu0
  %v3195 = vadd.f32 %v3138, %v3189
  %v3196 = vadd.f32 %v3139, %v3192
  %s3197 = scalar_lea.vmem %s5, 48
  %v3198 = vld [vmem:[%s3197] sm:$0xf]
  %v3199 = vld [vmem:[%s3197 + $0x4] sm:$0xf]
  %v3202 = vunpack.c.l.b16 %v3198
  %v3203 = vunpack.c.l.b16 %v3199
  %v3204 = vpack.c.b16 %v3203, %v3202
  %v3206 = vsel %vm2868, %v3204, 0
  %v3209 = vsel %vm2872, %v2853, 0
  %3211 = vmatprep.subr.bf16.mxu0 0
  %3212 = vmatpush1.bf16.msra.mxu0 0
  %3213 = vmatprep.subr.bf16.mxu0 0
  %3214 = vmatpush1.bf16.msra.mxu0 0
  %3215 = vmatprep.subr.bf16.mxu0 0
  %3216 = vmatpush1.bf16.msra.mxu0 0
  %3217 = vmatprep.subr.bf16.mxu0 0
  %3218 = vmatpush1.bf16.msra.mxu0 0
  %3219 = vmatprep.subr.bf16.mxu0 0
  %3220 = vmatpush1.bf16.msra.mxu0 0
  %3221 = vmatprep.subr.bf16.mxu0 0
  %3222 = vmatpush1.bf16.msra.mxu0 0
  %3223 = vmatprep.subr.bf16.mxu0 0
  %3224 = vmatpush1.bf16.msra.mxu0 0
  %3225 = vmatprep.subr.bf16.mxu0 0
  %3226 = vmatpush1.bf16.msra.mxu0 %v3209
  %3227 = vmatprep.subr.bf16.mxu0 0
  %3228 = vmatpush2.bf16.msra.mxu0 0
  %3229 = vmatprep.subr.bf16.mxu0 0
  %3230 = vmatpush2.bf16.msra.mxu0 0
  %3231 = vmatprep.subr.bf16.mxu0 0
  %3232 = vmatpush2.bf16.msra.mxu0 0
  %3233 = vmatprep.subr.bf16.mxu0 0
  %3234 = vmatpush2.bf16.msra.mxu0 0
  %3235 = vmatprep.subr.bf16.mxu0 0
  %3236 = vmatpush2.bf16.msra.mxu0 0
  %3237 = vmatprep.subr.bf16.mxu0 0
  %3238 = vmatpush2.bf16.msra.mxu0 0
  %3239 = vmatprep.subr.bf16.mxu0 0
  %3240 = vmatpush2.bf16.msra.mxu0 0
  %3241 = vmatprep.subr.bf16.mxu0 0
  %3242 = vmatpush2.bf16.msra.mxu0 0
  %3243 = vmatprep.mubr.bf16.mxu0 0
  %3244 = vmatmul.mubr.bf16.gmra.mxu0 %v3206
  %v3245 = vpop.f32.mrf.mxu0
  %v3246 = vadd.f32 0.0, %v3245
  %v3247 = vpop.f32.mrf.mxu0
  %v3248 = vpop.f32.mrf.mxu0
  %v3249 = vadd.f32 0.0, %v3248
  %v3250 = vpop.f32.mrf.mxu0
  %3251 = vdwg.mxu0
  %v3252 = vadd.f32 %v3195, %v3246
  %v3253 = vadd.f32 %v3196, %v3249
  %s3254 = scalar_lea.vmem %s5, 56
  %v3255 = vld [vmem:[%s3254] sm:$0xf]
  %v3256 = vld [vmem:[%s3254 + $0x4] sm:$0xf]
  %v3259 = vunpack.c.l.b16 %v3255
  %v3260 = vunpack.c.l.b16 %v3256
  %v3261 = vpack.c.b16 %v3260, %v3259
  %v3263 = vsel %vm2868, %v3261, 0
  %v3266 = vsel %vm2872, %v2854, 0
  %3268 = vmatprep.subr.bf16.mxu0 0
  %3269 = vmatpush1.bf16.msra.mxu0 0
  %3270 = vmatprep.subr.bf16.mxu0 0
  %3271 = vmatpush1.bf16.msra.mxu0 0
  %3272 = vmatprep.subr.bf16.mxu0 0
  %3273 = vmatpush1.bf16.msra.mxu0 0
  %3274 = vmatprep.subr.bf16.mxu0 0
  %3275 = vmatpush1.bf16.msra.mxu0 0
  %3276 = vmatprep.subr.bf16.mxu0 0
  %3277 = vmatpush1.bf16.msra.mxu0 0
  %3278 = vmatprep.subr.bf16.mxu0 0
  %3279 = vmatpush1.bf16.msra.mxu0 0
  %3280 = vmatprep.subr.bf16.mxu0 0
  %3281 = vmatpush1.bf16.msra.mxu0 0
  %3282 = vmatprep.subr.bf16.mxu0 0
  %3283 = vmatpush1.bf16.msra.mxu0 %v3266
  %3284 = vmatprep.subr.bf16.mxu0 0
  %3285 = vmatpush2.bf16.msra.mxu0 0
  %3286 = vmatprep.subr.bf16.mxu0 0
  %3287 = vmatpush2.bf16.msra.mxu0 0
  %3288 = vmatprep.subr.bf16.mxu0 0
  %3289 = vmatpush2.bf16.msra.mxu0 0
  %3290 = vmatprep.subr.bf16.mxu0 0
  %3291 = vmatpush2.bf16.msra.mxu0 0
  %3292 = vmatprep.subr.bf16.mxu0 0
  %3293 = vmatpush2.bf16.msra.mxu0 0
  %3294 = vmatprep.subr.bf16.mxu0 0
  %3295 = vmatpush2.bf16.msra.mxu0 0
  %3296 = vmatprep.subr.bf16.mxu0 0
  %3297 = vmatpush2.bf16.msra.mxu0 0
  %3298 = vmatprep.subr.bf16.mxu0 0
  %3299 = vmatpush2.bf16.msra.mxu0 0
  %3300 = vmatprep.mubr.bf16.mxu0 0
  %3301 = vmatmul.mubr.bf16.gmra.mxu0 %v3263
  %v3302 = vpop.f32.mrf.mxu0
  %v3303 = vadd.f32 0.0, %v3302
  %v3304 = vpop.f32.mrf.mxu0
  %v3305 = vpop.f32.mrf.mxu0
  %v3306 = vadd.f32 0.0, %v3305
  %v3307 = vpop.f32.mrf.mxu0
  %3308 = vdwg.mxu0
  %v3309 = vadd.f32 %v3252, %v3303
  %v3310 = vadd.f32 %v3253, %v3306
  %s3311 = scalar_lea.vmem %s5, 64
  %v3312 = vld [vmem:[%s3311] sm:$0xf]
  %v3313 = vld [vmem:[%s3311 + $0x4] sm:$0xf]
  %v3316 = vunpack.c.l.b16 %v3312
  %v3317 = vunpack.c.l.b16 %v3313
  %v3318 = vpack.c.b16 %v3317, %v3316
  %v3320 = vsel %vm2868, %v3318, 0
  %v3323 = vsel %vm2872, %v2855, 0
  %3325 = vmatprep.subr.bf16.mxu0 0
  %3326 = vmatpush1.bf16.msra.mxu0 0
  %3327 = vmatprep.subr.bf16.mxu0 0
  %3328 = vmatpush1.bf16.msra.mxu0 0
  %3329 = vmatprep.subr.bf16.mxu0 0
  %3330 = vmatpush1.bf16.msra.mxu0 0
  %3331 = vmatprep.subr.bf16.mxu0 0
  %3332 = vmatpush1.bf16.msra.mxu0 0
  %3333 = vmatprep.subr.bf16.mxu0 0
  %3334 = vmatpush1.bf16.msra.mxu0 0
  %3335 = vmatprep.subr.bf16.mxu0 0
  %3336 = vmatpush1.bf16.msra.mxu0 0
  %3337 = vmatprep.subr.bf16.mxu0 0
  %3338 = vmatpush1.bf16.msra.mxu0 0
  %3339 = vmatprep.subr.bf16.mxu0 0
  %3340 = vmatpush1.bf16.msra.mxu0 %v3323
  %3341 = vmatprep.subr.bf16.mxu0 0
  %3342 = vmatpush2.bf16.msra.mxu0 0
  %3343 = vmatprep.subr.bf16.mxu0 0
  %3344 = vmatpush2.bf16.msra.mxu0 0
  %3345 = vmatprep.subr.bf16.mxu0 0
  %3346 = vmatpush2.bf16.msra.mxu0 0
  %3347 = vmatprep.subr.bf16.mxu0 0
  %3348 = vmatpush2.bf16.msra.mxu0 0
  %3349 = vmatprep.subr.bf16.mxu0 0
  %3350 = vmatpush2.bf16.msra.mxu0 0
  %3351 = vmatprep.subr.bf16.mxu0 0
  %3352 = vmatpush2.bf16.msra.mxu0 0
  %3353 = vmatprep.subr.bf16.mxu0 0
  %3354 = vmatpush2.bf16.msra.mxu0 0
  %3355 = vmatprep.subr.bf16.mxu0 0
  %3356 = vmatpush2.bf16.msra.mxu0 0
  %3357 = vmatprep.mubr.bf16.mxu0 0
  %3358 = vmatmul.mubr.bf16.gmra.mxu0 %v3320
  %v3359 = vpop.f32.mrf.mxu0
  %v3360 = vadd.f32 0.0, %v3359
  %v3361 = vpop.f32.mrf.mxu0
  %v3362 = vpop.f32.mrf.mxu0
  %v3363 = vadd.f32 0.0, %v3362
  %v3364 = vpop.f32.mrf.mxu0
  %3365 = vdwg.mxu0
  %v3366 = vadd.f32 %v3309, %v3360
  %v3367 = vadd.f32 %v3310, %v3363
  %3369 = vset.pattern.permute.xlu0 0
  %3370 = vperm.xlu0 %3369, %v2856
  %v3371 = vpop.permute.xlu0 %3370
  %3374 = vset.pattern.permute.xlu0 0
  %3375 = vperm.xlu0 %3374, %v2857
  %v3376 = vpop.permute.xlu0 %3375
  %v3378 = vadd.f32 %v3366, %v3371
  %v3379 = vadd.f32 %v3367, %v3376
  %v3380 = vmax.f32 %v3378, 0.0
  %v3381 = vmax.f32 %v3379, 0.0
  %3384 = vrot.lane.b32.xlu0 %v3380, 96
  %v3385 = vpop.permute.xlu0 %3384
  %3386 = vrot.lane.b32.xlu0 %v3381, 96
  %v3387 = vpop.permute.xlu0 %3386
  %v3390 = vmax.f32 %v3380, %v3385
  %v3391 = vmax.f32 %v3381, %v3387
  %3392 = vrot.lane.b32.xlu0 %v3380, 64
  %v3393 = vpop.permute.xlu0 %3392
  %3394 = vrot.lane.b32.xlu0 %v3381, 64
  %v3395 = vpop.permute.xlu0 %3394
  %v3398 = vmax.f32 %v3390, %v3393
  %v3399 = vmax.f32 %v3391, %v3395
  %3400 = vrot.lane.b32.xlu0 %v3380, 32
  %v3401 = vpop.permute.xlu0 %3400
  %3402 = vrot.lane.b32.xlu0 %v3381, 32
  %v3403 = vpop.permute.xlu0 %3402
  %v3406 = vmax.f32 %v3398, %v3401
  %v3407 = vmax.f32 %v3399, %v3403
  %v3408 = vpack.c.bf16 %v3407, %v3406
  %v3409 = vld [vmem:[%s2] sm:$0xf]
  %v3410 = vld [vmem:[%s2 + $0x4] sm:$0xf]
  %v3411 = vld [vmem:[%s2 + $0x8] sm:$0xf]
  %v3412 = vld [vmem:[%s2 + $0xc] sm:$0xf]
  %v3417 = vunpack.c.l.b16 %v3409
  %v3418 = vunpack.c.l.b16 %v3410
  %v3419 = vunpack.c.l.b16 %v3411
  %v3420 = vunpack.c.l.b16 %v3412
  %v3421 = vpack.c.b16 %v3418, %v3417
  %v3422 = vpack.c.b16 %v3420, %v3419
  %vm3425 = vcmask 261120
  %v3427 = vsel %vm3425, %v3408, 0
  %3429 = vmatprep.subr.bf16.mxu0 0
  %3430 = vmatpush1.bf16.msra.mxu0 0
  %3431 = vmatprep.subr.bf16.mxu0 0
  %3432 = vmatpush1.bf16.msra.mxu0 0
  %3433 = vmatprep.subr.bf16.mxu0 0
  %3434 = vmatpush1.bf16.msra.mxu0 0
  %3435 = vmatprep.subr.bf16.mxu0 0
  %3436 = vmatpush1.bf16.msra.mxu0 0
  %3437 = vmatprep.subr.bf16.mxu0 0
  %3438 = vmatpush1.bf16.msra.mxu0 0
  %3439 = vmatprep.subr.bf16.mxu0 0
  %3440 = vmatpush1.bf16.msra.mxu0 0
  %3441 = vmatprep.subr.bf16.mxu0 0
  %3442 = vmatpush1.bf16.msra.mxu0 %v3422
  %3443 = vmatprep.subr.bf16.mxu0 0
  %3444 = vmatpush1.bf16.msra.mxu0 %v3421
  %3445 = vmatprep.subr.bf16.mxu0 0
  %3446 = vmatpush2.bf16.msra.mxu0 0
  %3447 = vmatprep.subr.bf16.mxu0 0
  %3448 = vmatpush2.bf16.msra.mxu0 0
  %3449 = vmatprep.subr.bf16.mxu0 0
  %3450 = vmatpush2.bf16.msra.mxu0 0
  %3451 = vmatprep.subr.bf16.mxu0 0
  %3452 = vmatpush2.bf16.msra.mxu0 0
  %3453 = vmatprep.subr.bf16.mxu0 0
  %3454 = vmatpush2.bf16.msra.mxu0 0
  %3455 = vmatprep.subr.bf16.mxu0 0
  %3456 = vmatpush2.bf16.msra.mxu0 0
  %3457 = vmatprep.subr.bf16.mxu0 0
  %3458 = vmatpush2.bf16.msra.mxu0 0
  %3459 = vmatprep.subr.bf16.mxu0 0
  %3460 = vmatpush2.bf16.msra.mxu0 0
  %3461 = vmatprep.mubr.bf16.mxu0 0
  %3462 = vmatmul.mubr.bf16.gmra.mxu0 %v3427
  %v3463 = vpop.f32.mrf.mxu0
  %v3464 = vadd.f32 0.0, %v3463
  %v3465 = vpop.f32.mrf.mxu0
  %v3466 = vpop.f32.mrf.mxu0
  %v3467 = vadd.f32 0.0, %v3466
  %v3468 = vpop.f32.mrf.mxu0
  %3469 = vdwg.mxu0
  %v3470 = vpack.c.bf16 %v3467, %v3464
  %v3471 = vld [vmem:[%s8] sm:$0xff]
  %v3472 = vld [vmem:[%s8 + $0x8] sm:$0xff]
  %v3473 = vld [vmem:[%s8 + $0x10] sm:$0xff]
  %v3474 = vld [vmem:[%s8 + $0x18] sm:$0xff]
  %v3475 = vld [vmem:[%s7] sm:$0xf]
  %v3476 = vld [vmem:[%s7 + $0x4] sm:$0xf]
  %v3477 = vld [vmem:[%s7 + $0x8] sm:$0xf]
  %v3478 = vld [vmem:[%s7 + $0xc] sm:$0xf]
  %s3479 = scalar_lea.vmem %s7, 16
  %v3480 = vld [vmem:[%s3479] sm:$0xf]
  %v3481 = vld [vmem:[%s3479 + $0x4] sm:$0xf]
  %v3482 = vld [vmem:[%s3479 + $0x8] sm:$0xf]
  %v3483 = vld [vmem:[%s3479 + $0xc] sm:$0xf]
  %v3488 = vunpack.c.l.b16 %v3480
  %v3489 = vunpack.c.l.b16 %v3481
  %v3490 = vunpack.c.l.b16 %v3482
  %v3491 = vunpack.c.l.b16 %v3483
  %v3492 = vpack.c.b16 %v3489, %v3488
  %v3493 = vpack.c.b16 %v3491, %v3490
  %3495 = vrot.lane.b32.xlu0 %v3470, 120
  %v3496 = vpop.permute.xlu0 %3495
  %vm3498 = vcmask 130048
  %v3500 = vsel %vm3498, %v3492, 0
  %v3503 = vsel %vm3498, %v3493, 0
  %3505 = vmatprep.subr.bf16.mxu0 0
  %3506 = vmatpush1.bf16.msra.mxu0 0
  %3507 = vmatprep.subr.bf16.mxu0 0
  %3508 = vmatpush1.bf16.msra.mxu0 0
  %3509 = vmatprep.subr.bf16.mxu0 0
  %3510 = vmatpush1.bf16.msra.mxu0 0
  %3511 = vmatprep.subr.bf16.mxu0 0
  %3512 = vmatpush1.bf16.msra.mxu0 0
  %3513 = vmatprep.subr.bf16.mxu0 0
  %3514 = vmatpush1.bf16.msra.mxu0 0
  %3515 = vmatprep.subr.bf16.mxu0 0
  %3516 = vmatpush1.bf16.msra.mxu0 0
  %3517 = vmatprep.subr.bf16.mxu0 0
  %3518 = vmatpush1.bf16.msra.mxu0 0
  %3519 = vmatprep.subr.bf16.mxu0 0
  %3520 = vmatpush1.bf16.msra.mxu0 %v3496
  %3521 = vmatprep.subr.bf16.mxu0 0
  %3522 = vmatpush2.bf16.msra.mxu0 0
  %3523 = vmatprep.subr.bf16.mxu0 0
  %3524 = vmatpush2.bf16.msra.mxu0 0
  %3525 = vmatprep.subr.bf16.mxu0 0
  %3526 = vmatpush2.bf16.msra.mxu0 0
  %3527 = vmatprep.subr.bf16.mxu0 0
  %3528 = vmatpush2.bf16.msra.mxu0 0
  %3529 = vmatprep.subr.bf16.mxu0 0
  %3530 = vmatpush2.bf16.msra.mxu0 0
  %3531 = vmatprep.subr.bf16.mxu0 0
  %3532 = vmatpush2.bf16.msra.mxu0 0
  %3533 = vmatprep.subr.bf16.mxu0 0
  %3534 = vmatpush2.bf16.msra.mxu0 0
  %3535 = vmatprep.subr.bf16.mxu0 0
  %3536 = vmatpush2.bf16.msra.mxu0 0
  %3537 = vmatprep.mubr.bf16.mxu0 0
  %3538 = vmatmul.mubr.bf16.gmra.mxu0 %v3500
  %v3539 = vpop.f32.mrf.mxu0
  %v3540 = vadd.f32 0.0, %v3539
  %v3541 = vpop.f32.mrf.mxu0
  %v3542 = vpop.f32.mrf.mxu0
  %v3543 = vadd.f32 0.0, %v3542
  %v3544 = vpop.f32.mrf.mxu0
  %3545 = vmatprep.mubr.bf16.mxu0 0
  %3546 = vmatmul.mubr.bf16.gmra.mxu0 %v3503
  %v3547 = vpop.f32.mrf.mxu0
  %v3548 = vadd.f32 0.0, %v3547
  %v3549 = vpop.f32.mrf.mxu0
  %v3550 = vpop.f32.mrf.mxu0
  %v3551 = vadd.f32 0.0, %v3550
  %v3552 = vpop.f32.mrf.mxu0
  %3553 = vdwg.mxu0
  %v3558 = vunpack.c.l.b16 %v3475
  %v3559 = vunpack.c.l.b16 %v3476
  %v3560 = vunpack.c.l.b16 %v3477
  %v3561 = vunpack.c.l.b16 %v3478
  %v3562 = vpack.c.b16 %v3559, %v3558
  %v3563 = vpack.c.b16 %v3561, %v3560
  %v3565 = vsel %vm3498, %v3562, 0
  %v3568 = vsel %vm3498, %v3563, 0
  %3570 = vmatprep.subr.bf16.mxu0 0
  %3571 = vmatpush1.bf16.msra.mxu0 0
  %3572 = vmatprep.subr.bf16.mxu0 0
  %3573 = vmatpush1.bf16.msra.mxu0 0
  %3574 = vmatprep.subr.bf16.mxu0 0
  %3575 = vmatpush1.bf16.msra.mxu0 0
  %3576 = vmatprep.subr.bf16.mxu0 0
  %3577 = vmatpush1.bf16.msra.mxu0 0
  %3578 = vmatprep.subr.bf16.mxu0 0
  %3579 = vmatpush1.bf16.msra.mxu0 0
  %3580 = vmatprep.subr.bf16.mxu0 0
  %3581 = vmatpush1.bf16.msra.mxu0 0
  %3582 = vmatprep.subr.bf16.mxu0 0
  %3583 = vmatpush1.bf16.msra.mxu0 0
  %3584 = vmatprep.subr.bf16.mxu0 0
  %3585 = vmatpush1.bf16.msra.mxu0 %v3470
  %3586 = vmatprep.subr.bf16.mxu0 0
  %3587 = vmatpush2.bf16.msra.mxu0 0
  %3588 = vmatprep.subr.bf16.mxu0 0
  %3589 = vmatpush2.bf16.msra.mxu0 0
  %3590 = vmatprep.subr.bf16.mxu0 0
  %3591 = vmatpush2.bf16.msra.mxu0 0
  %3592 = vmatprep.subr.bf16.mxu0 0
  %3593 = vmatpush2.bf16.msra.mxu0 0
  %3594 = vmatprep.subr.bf16.mxu0 0
  %3595 = vmatpush2.bf16.msra.mxu0 0
  %3596 = vmatprep.subr.bf16.mxu0 0
  %3597 = vmatpush2.bf16.msra.mxu0 0
  %3598 = vmatprep.subr.bf16.mxu0 0
  %3599 = vmatpush2.bf16.msra.mxu0 0
  %3600 = vmatprep.subr.bf16.mxu0 0
  %3601 = vmatpush2.bf16.msra.mxu0 0
  %3602 = vmatprep.mubr.bf16.mxu0 0
  %3603 = vmatmul.mubr.bf16.gmra.mxu0 %v3565
  %v3604 = vpop.f32.mrf.mxu0
  %v3605 = vadd.f32 %v3540, %v3604
  %v3606 = vpop.f32.mrf.mxu0
  %v3607 = vpop.f32.mrf.mxu0
  %v3608 = vadd.f32 %v3543, %v3607
  %v3609 = vpop.f32.mrf.mxu0
  %3610 = vmatprep.mubr.bf16.mxu0 0
  %3611 = vmatmul.mubr.bf16.gmra.mxu0 %v3568
  %v3612 = vpop.f32.mrf.mxu0
  %v3613 = vadd.f32 %v3548, %v3612
  %v3614 = vpop.f32.mrf.mxu0
  %v3615 = vpop.f32.mrf.mxu0
  %v3616 = vadd.f32 %v3551, %v3615
  %v3617 = vpop.f32.mrf.mxu0
  %3618 = vdwg.mxu0
  %s3619 = scalar_lea.vmem %s7, 32
  %v3620 = vld [vmem:[%s3619] sm:$0xf]
  %v3621 = vld [vmem:[%s3619 + $0x4] sm:$0xf]
  %v3622 = vld [vmem:[%s3619 + $0x8] sm:$0xf]
  %v3623 = vld [vmem:[%s3619 + $0xc] sm:$0xf]
  %v3628 = vunpack.c.l.b16 %v3620
  %v3629 = vunpack.c.l.b16 %v3621
  %v3630 = vunpack.c.l.b16 %v3622
  %v3631 = vunpack.c.l.b16 %v3623
  %v3632 = vpack.c.b16 %v3629, %v3628
  %v3633 = vpack.c.b16 %v3631, %v3630
  %3634 = vrot.lane.b32.xlu0 %v3470, 112
  %v3635 = vpop.permute.xlu0 %3634
  %v3638 = vsel %vm3498, %v3632, 0
  %v3641 = vsel %vm3498, %v3633, 0
  %3643 = vmatprep.subr.bf16.mxu0 0
  %3644 = vmatpush1.bf16.msra.mxu0 0
  %3645 = vmatprep.subr.bf16.mxu0 0
  %3646 = vmatpush1.bf16.msra.mxu0 0
  %3647 = vmatprep.subr.bf16.mxu0 0
  %3648 = vmatpush1.bf16.msra.mxu0 0
  %3649 = vmatprep.subr.bf16.mxu0 0
  %3650 = vmatpush1.bf16.msra.mxu0 0
  %3651 = vmatprep.subr.bf16.mxu0 0
  %3652 = vmatpush1.bf16.msra.mxu0 0
  %3653 = vmatprep.subr.bf16.mxu0 0
  %3654 = vmatpush1.bf16.msra.mxu0 0
  %3655 = vmatprep.subr.bf16.mxu0 0
  %3656 = vmatpush1.bf16.msra.mxu0 0
  %3657 = vmatprep.subr.bf16.mxu0 0
  %3658 = vmatpush1.bf16.msra.mxu0 %v3635
  %3659 = vmatprep.subr.bf16.mxu0 0
  %3660 = vmatpush2.bf16.msra.mxu0 0
  %3661 = vmatprep.subr.bf16.mxu0 0
  %3662 = vmatpush2.bf16.msra.mxu0 0
  %3663 = vmatprep.subr.bf16.mxu0 0
  %3664 = vmatpush2.bf16.msra.mxu0 0
  %3665 = vmatprep.subr.bf16.mxu0 0
  %3666 = vmatpush2.bf16.msra.mxu0 0
  %3667 = vmatprep.subr.bf16.mxu0 0
  %3668 = vmatpush2.bf16.msra.mxu0 0
  %3669 = vmatprep.subr.bf16.mxu0 0
  %3670 = vmatpush2.bf16.msra.mxu0 0
  %3671 = vmatprep.subr.bf16.mxu0 0
  %3672 = vmatpush2.bf16.msra.mxu0 0
  %3673 = vmatprep.subr.bf16.mxu0 0
  %3674 = vmatpush2.bf16.msra.mxu0 0
  %3675 = vmatprep.mubr.bf16.mxu0 0
  %3676 = vmatmul.mubr.bf16.gmra.mxu0 %v3638
  %v3677 = vpop.f32.mrf.mxu0
  %v3678 = vadd.f32 0.0, %v3677
  %v3679 = vpop.f32.mrf.mxu0
  %v3680 = vpop.f32.mrf.mxu0
  %v3681 = vadd.f32 0.0, %v3680
  %v3682 = vpop.f32.mrf.mxu0
  %3683 = vmatprep.mubr.bf16.mxu0 0
  %3684 = vmatmul.mubr.bf16.gmra.mxu0 %v3641
  %v3685 = vpop.f32.mrf.mxu0
  %v3686 = vadd.f32 0.0, %v3685
  %v3687 = vpop.f32.mrf.mxu0
  %v3688 = vpop.f32.mrf.mxu0
  %v3689 = vadd.f32 0.0, %v3688
  %v3690 = vpop.f32.mrf.mxu0
  %3691 = vdwg.mxu0
  %v3692 = vadd.f32 %v3605, %v3678
  %v3693 = vadd.f32 %v3608, %v3681
  %v3694 = vadd.f32 %v3613, %v3686
  %v3695 = vadd.f32 %v3616, %v3689
  %s3696 = scalar_lea.vmem %s7, 48
  %v3697 = vld [vmem:[%s3696] sm:$0xf]
  %v3698 = vld [vmem:[%s3696 + $0x4] sm:$0xf]
  %v3699 = vld [vmem:[%s3696 + $0x8] sm:$0xf]
  %v3700 = vld [vmem:[%s3696 + $0xc] sm:$0xf]
  %v3705 = vunpack.c.l.b16 %v3697
  %v3706 = vunpack.c.l.b16 %v3698
  %v3707 = vunpack.c.l.b16 %v3699
  %v3708 = vunpack.c.l.b16 %v3700
  %v3709 = vpack.c.b16 %v3706, %v3705
  %v3710 = vpack.c.b16 %v3708, %v3707
  %3711 = vrot.lane.b32.xlu0 %v3470, 104
  %v3712 = vpop.permute.xlu0 %3711
  %v3715 = vsel %vm3498, %v3709, 0
  %v3718 = vsel %vm3498, %v3710, 0
  %3720 = vmatprep.subr.bf16.mxu0 0
  %3721 = vmatpush1.bf16.msra.mxu0 0
  %3722 = vmatprep.subr.bf16.mxu0 0
  %3723 = vmatpush1.bf16.msra.mxu0 0
  %3724 = vmatprep.subr.bf16.mxu0 0
  %3725 = vmatpush1.bf16.msra.mxu0 0
  %3726 = vmatprep.subr.bf16.mxu0 0
  %3727 = vmatpush1.bf16.msra.mxu0 0
  %3728 = vmatprep.subr.bf16.mxu0 0
  %3729 = vmatpush1.bf16.msra.mxu0 0
  %3730 = vmatprep.subr.bf16.mxu0 0
  %3731 = vmatpush1.bf16.msra.mxu0 0
  %3732 = vmatprep.subr.bf16.mxu0 0
  %3733 = vmatpush1.bf16.msra.mxu0 0
  %3734 = vmatprep.subr.bf16.mxu0 0
  %3735 = vmatpush1.bf16.msra.mxu0 %v3712
  %3736 = vmatprep.subr.bf16.mxu0 0
  %3737 = vmatpush2.bf16.msra.mxu0 0
  %3738 = vmatprep.subr.bf16.mxu0 0
  %3739 = vmatpush2.bf16.msra.mxu0 0
  %3740 = vmatprep.subr.bf16.mxu0 0
  %3741 = vmatpush2.bf16.msra.mxu0 0
  %3742 = vmatprep.subr.bf16.mxu0 0
  %3743 = vmatpush2.bf16.msra.mxu0 0
  %3744 = vmatprep.subr.bf16.mxu0 0
  %3745 = vmatpush2.bf16.msra.mxu0 0
  %3746 = vmatprep.subr.bf16.mxu0 0
  %3747 = vmatpush2.bf16.msra.mxu0 0
  %3748 = vmatprep.subr.bf16.mxu0 0
  %3749 = vmatpush2.bf16.msra.mxu0 0
  %3750 = vmatprep.subr.bf16.mxu0 0
  %3751 = vmatpush2.bf16.msra.mxu0 0
  %3752 = vmatprep.mubr.bf16.mxu0 0
  %3753 = vmatmul.mubr.bf16.gmra.mxu0 %v3715
  %v3754 = vpop.f32.mrf.mxu0
  %v3755 = vadd.f32 0.0, %v3754
  %v3756 = vpop.f32.mrf.mxu0
  %v3757 = vpop.f32.mrf.mxu0
  %v3758 = vadd.f32 0.0, %v3757
  %v3759 = vpop.f32.mrf.mxu0
  %3760 = vmatprep.mubr.bf16.mxu0 0
  %3761 = vmatmul.mubr.bf16.gmra.mxu0 %v3718
  %v3762 = vpop.f32.mrf.mxu0
  %v3763 = vadd.f32 0.0, %v3762
  %v3764 = vpop.f32.mrf.mxu0
  %v3765 = vpop.f32.mrf.mxu0
  %v3766 = vadd.f32 0.0, %v3765
  %v3767 = vpop.f32.mrf.mxu0
  %3768 = vdwg.mxu0
  %v3769 = vadd.f32 %v3692, %v3755
  %v3770 = vadd.f32 %v3693, %v3758
  %v3771 = vadd.f32 %v3694, %v3763
  %v3772 = vadd.f32 %v3695, %v3766
  %s3773 = scalar_lea.vmem %s7, 64
  %v3774 = vld [vmem:[%s3773] sm:$0xf]
  %v3775 = vld [vmem:[%s3773 + $0x4] sm:$0xf]
  %v3776 = vld [vmem:[%s3773 + $0x8] sm:$0xf]
  %v3777 = vld [vmem:[%s3773 + $0xc] sm:$0xf]
  %v3782 = vunpack.c.l.b16 %v3774
  %v3783 = vunpack.c.l.b16 %v3775
  %v3784 = vunpack.c.l.b16 %v3776
  %v3785 = vunpack.c.l.b16 %v3777
  %v3786 = vpack.c.b16 %v3783, %v3782
  %v3787 = vpack.c.b16 %v3785, %v3784
  %3788 = vrot.lane.b32.xlu0 %v3470, 96
  %v3789 = vpop.permute.xlu0 %3788
  %v3792 = vsel %vm3498, %v3786, 0
  %v3795 = vsel %vm3498, %v3787, 0
  %3797 = vmatprep.subr.bf16.mxu0 0
  %3798 = vmatpush1.bf16.msra.mxu0 0
  %3799 = vmatprep.subr.bf16.mxu0 0
  %3800 = vmatpush1.bf16.msra.mxu0 0
  %3801 = vmatprep.subr.bf16.mxu0 0
  %3802 = vmatpush1.bf16.msra.mxu0 0
  %3803 = vmatprep.subr.bf16.mxu0 0
  %3804 = vmatpush1.bf16.msra.mxu0 0
  %3805 = vmatprep.subr.bf16.mxu0 0
  %3806 = vmatpush1.bf16.msra.mxu0 0
  %3807 = vmatprep.subr.bf16.mxu0 0
  %3808 = vmatpush1.bf16.msra.mxu0 0
  %3809 = vmatprep.subr.bf16.mxu0 0
  %3810 = vmatpush1.bf16.msra.mxu0 0
  %3811 = vmatprep.subr.bf16.mxu0 0
  %3812 = vmatpush1.bf16.msra.mxu0 %v3789
  %3813 = vmatprep.subr.bf16.mxu0 0
  %3814 = vmatpush2.bf16.msra.mxu0 0
  %3815 = vmatprep.subr.bf16.mxu0 0
  %3816 = vmatpush2.bf16.msra.mxu0 0
  %3817 = vmatprep.subr.bf16.mxu0 0
  %3818 = vmatpush2.bf16.msra.mxu0 0
  %3819 = vmatprep.subr.bf16.mxu0 0
  %3820 = vmatpush2.bf16.msra.mxu0 0
  %3821 = vmatprep.subr.bf16.mxu0 0
  %3822 = vmatpush2.bf16.msra.mxu0 0
  %3823 = vmatprep.subr.bf16.mxu0 0
  %3824 = vmatpush2.bf16.msra.mxu0 0
  %3825 = vmatprep.subr.bf16.mxu0 0
  %3826 = vmatpush2.bf16.msra.mxu0 0
  %3827 = vmatprep.subr.bf16.mxu0 0
  %3828 = vmatpush2.bf16.msra.mxu0 0
  %3829 = vmatprep.mubr.bf16.mxu0 0
  %3830 = vmatmul.mubr.bf16.gmra.mxu0 %v3792
  %v3831 = vpop.f32.mrf.mxu0
  %v3832 = vadd.f32 0.0, %v3831
  %v3833 = vpop.f32.mrf.mxu0
  %v3834 = vpop.f32.mrf.mxu0
  %v3835 = vadd.f32 0.0, %v3834
  %v3836 = vpop.f32.mrf.mxu0
  %3837 = vmatprep.mubr.bf16.mxu0 0
  %3838 = vmatmul.mubr.bf16.gmra.mxu0 %v3795
  %v3839 = vpop.f32.mrf.mxu0
  %v3840 = vadd.f32 0.0, %v3839
  %v3841 = vpop.f32.mrf.mxu0
  %v3842 = vpop.f32.mrf.mxu0
  %v3843 = vadd.f32 0.0, %v3842
  %v3844 = vpop.f32.mrf.mxu0
  %3845 = vdwg.mxu0
  %v3846 = vadd.f32 %v3769, %v3832
  %v3847 = vadd.f32 %v3770, %v3835
  %v3848 = vadd.f32 %v3771, %v3840
  %v3849 = vadd.f32 %v3772, %v3843
  %s3850 = scalar_lea.vmem %s7, 80
  %v3851 = vld [vmem:[%s3850] sm:$0xf]
  %v3852 = vld [vmem:[%s3850 + $0x4] sm:$0xf]
  %v3853 = vld [vmem:[%s3850 + $0x8] sm:$0xf]
  %v3854 = vld [vmem:[%s3850 + $0xc] sm:$0xf]
  %v3859 = vunpack.c.l.b16 %v3851
  %v3860 = vunpack.c.l.b16 %v3852
  %v3861 = vunpack.c.l.b16 %v3853
  %v3862 = vunpack.c.l.b16 %v3854
  %v3863 = vpack.c.b16 %v3860, %v3859
  %v3864 = vpack.c.b16 %v3862, %v3861
  %3865 = vrot.lane.b32.xlu0 %v3470, 88
  %v3866 = vpop.permute.xlu0 %3865
  %v3869 = vsel %vm3498, %v3863, 0
  %v3872 = vsel %vm3498, %v3864, 0
  %3874 = vmatprep.subr.bf16.mxu0 0
  %3875 = vmatpush1.bf16.msra.mxu0 0
  %3876 = vmatprep.subr.bf16.mxu0 0
  %3877 = vmatpush1.bf16.msra.mxu0 0
  %3878 = vmatprep.subr.bf16.mxu0 0
  %3879 = vmatpush1.bf16.msra.mxu0 0
  %3880 = vmatprep.subr.bf16.mxu0 0
  %3881 = vmatpush1.bf16.msra.mxu0 0
  %3882 = vmatprep.subr.bf16.mxu0 0
  %3883 = vmatpush1.bf16.msra.mxu0 0
  %3884 = vmatprep.subr.bf16.mxu0 0
  %3885 = vmatpush1.bf16.msra.mxu0 0
  %3886 = vmatprep.subr.bf16.mxu0 0
  %3887 = vmatpush1.bf16.msra.mxu0 0
  %3888 = vmatprep.subr.bf16.mxu0 0
  %3889 = vmatpush1.bf16.msra.mxu0 %v3866
  %3890 = vmatprep.subr.bf16.mxu0 0
  %3891 = vmatpush2.bf16.msra.mxu0 0
  %3892 = vmatprep.subr.bf16.mxu0 0
  %3893 = vmatpush2.bf16.msra.mxu0 0
  %3894 = vmatprep.subr.bf16.mxu0 0
  %3895 = vmatpush2.bf16.msra.mxu0 0
  %3896 = vmatprep.subr.bf16.mxu0 0
  %3897 = vmatpush2.bf16.msra.mxu0 0
  %3898 = vmatprep.subr.bf16.mxu0 0
  %3899 = vmatpush2.bf16.msra.mxu0 0
  %3900 = vmatprep.subr.bf16.mxu0 0
  %3901 = vmatpush2.bf16.msra.mxu0 0
  %3902 = vmatprep.subr.bf16.mxu0 0
  %3903 = vmatpush2.bf16.msra.mxu0 0
  %3904 = vmatprep.subr.bf16.mxu0 0
  %3905 = vmatpush2.bf16.msra.mxu0 0
  %3906 = vmatprep.mubr.bf16.mxu0 0
  %3907 = vmatmul.mubr.bf16.gmra.mxu0 %v3869
  %v3908 = vpop.f32.mrf.mxu0
  %v3909 = vadd.f32 0.0, %v3908
  %v3910 = vpop.f32.mrf.mxu0
  %v3911 = vpop.f32.mrf.mxu0
  %v3912 = vadd.f32 0.0, %v3911
  %v3913 = vpop.f32.mrf.mxu0
  %3914 = vmatprep.mubr.bf16.mxu0 0
  %3915 = vmatmul.mubr.bf16.gmra.mxu0 %v3872
  %v3916 = vpop.f32.mrf.mxu0
  %v3917 = vadd.f32 0.0, %v3916
  %v3918 = vpop.f32.mrf.mxu0
  %v3919 = vpop.f32.mrf.mxu0
  %v3920 = vadd.f32 0.0, %v3919
  %v3921 = vpop.f32.mrf.mxu0
  %3922 = vdwg.mxu0
  %v3923 = vadd.f32 %v3846, %v3909
  %v3924 = vadd.f32 %v3847, %v3912
  %v3925 = vadd.f32 %v3848, %v3917
  %v3926 = vadd.f32 %v3849, %v3920
  %s3927 = scalar_lea.vmem %s7, 96
  %v3928 = vld [vmem:[%s3927] sm:$0xf]
  %v3929 = vld [vmem:[%s3927 + $0x4] sm:$0xf]
  %v3930 = vld [vmem:[%s3927 + $0x8] sm:$0xf]
  %v3931 = vld [vmem:[%s3927 + $0xc] sm:$0xf]
  %v3936 = vunpack.c.l.b16 %v3928
  %v3937 = vunpack.c.l.b16 %v3929
  %v3938 = vunpack.c.l.b16 %v3930
  %v3939 = vunpack.c.l.b16 %v3931
  %v3940 = vpack.c.b16 %v3937, %v3936
  %v3941 = vpack.c.b16 %v3939, %v3938
  %3942 = vrot.lane.b32.xlu0 %v3470, 80
  %v3943 = vpop.permute.xlu0 %3942
  %v3946 = vsel %vm3498, %v3940, 0
  %v3949 = vsel %vm3498, %v3941, 0
  %3951 = vmatprep.subr.bf16.mxu0 0
  %3952 = vmatpush1.bf16.msra.mxu0 0
  %3953 = vmatprep.subr.bf16.mxu0 0
  %3954 = vmatpush1.bf16.msra.mxu0 0
  %3955 = vmatprep.subr.bf16.mxu0 0
  %3956 = vmatpush1.bf16.msra.mxu0 0
  %3957 = vmatprep.subr.bf16.mxu0 0
  %3958 = vmatpush1.bf16.msra.mxu0 0
  %3959 = vmatprep.subr.bf16.mxu0 0
  %3960 = vmatpush1.bf16.msra.mxu0 0
  %3961 = vmatprep.subr.bf16.mxu0 0
  %3962 = vmatpush1.bf16.msra.mxu0 0
  %3963 = vmatprep.subr.bf16.mxu0 0
  %3964 = vmatpush1.bf16.msra.mxu0 0
  %3965 = vmatprep.subr.bf16.mxu0 0
  %3966 = vmatpush1.bf16.msra.mxu0 %v3943
  %3967 = vmatprep.subr.bf16.mxu0 0
  %3968 = vmatpush2.bf16.msra.mxu0 0
  %3969 = vmatprep.subr.bf16.mxu0 0
  %3970 = vmatpush2.bf16.msra.mxu0 0
  %3971 = vmatprep.subr.bf16.mxu0 0
  %3972 = vmatpush2.bf16.msra.mxu0 0
  %3973 = vmatprep.subr.bf16.mxu0 0
  %3974 = vmatpush2.bf16.msra.mxu0 0
  %3975 = vmatprep.subr.bf16.mxu0 0
  %3976 = vmatpush2.bf16.msra.mxu0 0
  %3977 = vmatprep.subr.bf16.mxu0 0
  %3978 = vmatpush2.bf16.msra.mxu0 0
  %3979 = vmatprep.subr.bf16.mxu0 0
  %3980 = vmatpush2.bf16.msra.mxu0 0
  %3981 = vmatprep.subr.bf16.mxu0 0
  %3982 = vmatpush2.bf16.msra.mxu0 0
  %3983 = vmatprep.mubr.bf16.mxu0 0
  %3984 = vmatmul.mubr.bf16.gmra.mxu0 %v3946
  %v3985 = vpop.f32.mrf.mxu0
  %v3986 = vadd.f32 0.0, %v3985
  %v3987 = vpop.f32.mrf.mxu0
  %v3988 = vpop.f32.mrf.mxu0
  %v3989 = vadd.f32 0.0, %v3988
  %v3990 = vpop.f32.mrf.mxu0
  %3991 = vmatprep.mubr.bf16.mxu0 0
  %3992 = vmatmul.mubr.bf16.gmra.mxu0 %v3949
  %v3993 = vpop.f32.mrf.mxu0
  %v3994 = vadd.f32 0.0, %v3993
  %v3995 = vpop.f32.mrf.mxu0
  %v3996 = vpop.f32.mrf.mxu0
  %v3997 = vadd.f32 0.0, %v3996
  %v3998 = vpop.f32.mrf.mxu0
  %3999 = vdwg.mxu0
  %v4000 = vadd.f32 %v3923, %v3986
  %v4001 = vadd.f32 %v3924, %v3989
  %v4002 = vadd.f32 %v3925, %v3994
  %v4003 = vadd.f32 %v3926, %v3997
  %s4004 = scalar_lea.vmem %s7, 112
  %v4005 = vld [vmem:[%s4004] sm:$0xf]
  %v4006 = vld [vmem:[%s4004 + $0x4] sm:$0xf]
  %v4007 = vld [vmem:[%s4004 + $0x8] sm:$0xf]
  %v4008 = vld [vmem:[%s4004 + $0xc] sm:$0xf]
  %v4013 = vunpack.c.l.b16 %v4005
  %v4014 = vunpack.c.l.b16 %v4006
  %v4015 = vunpack.c.l.b16 %v4007
  %v4016 = vunpack.c.l.b16 %v4008
  %v4017 = vpack.c.b16 %v4014, %v4013
  %v4018 = vpack.c.b16 %v4016, %v4015
  %4019 = vrot.lane.b32.xlu0 %v3470, 72
  %v4020 = vpop.permute.xlu0 %4019
  %v4023 = vsel %vm3498, %v4017, 0
  %v4026 = vsel %vm3498, %v4018, 0
  %4028 = vmatprep.subr.bf16.mxu0 0
  %4029 = vmatpush1.bf16.msra.mxu0 0
  %4030 = vmatprep.subr.bf16.mxu0 0
  %4031 = vmatpush1.bf16.msra.mxu0 0
  %4032 = vmatprep.subr.bf16.mxu0 0
  %4033 = vmatpush1.bf16.msra.mxu0 0
  %4034 = vmatprep.subr.bf16.mxu0 0
  %4035 = vmatpush1.bf16.msra.mxu0 0
  %4036 = vmatprep.subr.bf16.mxu0 0
  %4037 = vmatpush1.bf16.msra.mxu0 0
  %4038 = vmatprep.subr.bf16.mxu0 0
  %4039 = vmatpush1.bf16.msra.mxu0 0
  %4040 = vmatprep.subr.bf16.mxu0 0
  %4041 = vmatpush1.bf16.msra.mxu0 0
  %4042 = vmatprep.subr.bf16.mxu0 0
  %4043 = vmatpush1.bf16.msra.mxu0 %v4020
  %4044 = vmatprep.subr.bf16.mxu0 0
  %4045 = vmatpush2.bf16.msra.mxu0 0
  %4046 = vmatprep.subr.bf16.mxu0 0
  %4047 = vmatpush2.bf16.msra.mxu0 0
  %4048 = vmatprep.subr.bf16.mxu0 0
  %4049 = vmatpush2.bf16.msra.mxu0 0
  %4050 = vmatprep.subr.bf16.mxu0 0
  %4051 = vmatpush2.bf16.msra.mxu0 0
  %4052 = vmatprep.subr.bf16.mxu0 0
  %4053 = vmatpush2.bf16.msra.mxu0 0
  %4054 = vmatprep.subr.bf16.mxu0 0
  %4055 = vmatpush2.bf16.msra.mxu0 0
  %4056 = vmatprep.subr.bf16.mxu0 0
  %4057 = vmatpush2.bf16.msra.mxu0 0
  %4058 = vmatprep.subr.bf16.mxu0 0
  %4059 = vmatpush2.bf16.msra.mxu0 0
  %4060 = vmatprep.mubr.bf16.mxu0 0
  %4061 = vmatmul.mubr.bf16.gmra.mxu0 %v4023
  %v4062 = vpop.f32.mrf.mxu0
  %v4063 = vadd.f32 0.0, %v4062
  %v4064 = vpop.f32.mrf.mxu0
  %v4065 = vpop.f32.mrf.mxu0
  %v4066 = vadd.f32 0.0, %v4065
  %v4067 = vpop.f32.mrf.mxu0
  %4068 = vmatprep.mubr.bf16.mxu0 0
  %4069 = vmatmul.mubr.bf16.gmra.mxu0 %v4026
  %v4070 = vpop.f32.mrf.mxu0
  %v4071 = vadd.f32 0.0, %v4070
  %v4072 = vpop.f32.mrf.mxu0
  %v4073 = vpop.f32.mrf.mxu0
  %v4074 = vadd.f32 0.0, %v4073
  %v4075 = vpop.f32.mrf.mxu0
  %4076 = vdwg.mxu0
  %v4077 = vadd.f32 %v4000, %v4063
  %v4078 = vadd.f32 %v4001, %v4066
  %v4079 = vadd.f32 %v4002, %v4071
  %v4080 = vadd.f32 %v4003, %v4074
  %s4081 = scalar_lea.vmem %s7, 128
  %v4082 = vld [vmem:[%s4081] sm:$0xf]
  %v4083 = vld [vmem:[%s4081 + $0x4] sm:$0xf]
  %v4084 = vld [vmem:[%s4081 + $0x8] sm:$0xf]
  %v4085 = vld [vmem:[%s4081 + $0xc] sm:$0xf]
  %v4090 = vunpack.c.l.b16 %v4082
  %v4091 = vunpack.c.l.b16 %v4083
  %v4092 = vunpack.c.l.b16 %v4084
  %v4093 = vunpack.c.l.b16 %v4085
  %v4094 = vpack.c.b16 %v4091, %v4090
  %v4095 = vpack.c.b16 %v4093, %v4092
  %4096 = vrot.lane.b32.xlu0 %v3470, 64
  %v4097 = vpop.permute.xlu0 %4096
  %v4100 = vsel %vm3498, %v4094, 0
  %v4103 = vsel %vm3498, %v4095, 0
  %4105 = vmatprep.subr.bf16.mxu0 0
  %4106 = vmatpush1.bf16.msra.mxu0 0
  %4107 = vmatprep.subr.bf16.mxu0 0
  %4108 = vmatpush1.bf16.msra.mxu0 0
  %4109 = vmatprep.subr.bf16.mxu0 0
  %4110 = vmatpush1.bf16.msra.mxu0 0
  %4111 = vmatprep.subr.bf16.mxu0 0
  %4112 = vmatpush1.bf16.msra.mxu0 0
  %4113 = vmatprep.subr.bf16.mxu0 0
  %4114 = vmatpush1.bf16.msra.mxu0 0
  %4115 = vmatprep.subr.bf16.mxu0 0
  %4116 = vmatpush1.bf16.msra.mxu0 0
  %4117 = vmatprep.subr.bf16.mxu0 0
  %4118 = vmatpush1.bf16.msra.mxu0 0
  %4119 = vmatprep.subr.bf16.mxu0 0
  %4120 = vmatpush1.bf16.msra.mxu0 %v4097
  %4121 = vmatprep.subr.bf16.mxu0 0
  %4122 = vmatpush2.bf16.msra.mxu0 0
  %4123 = vmatprep.subr.bf16.mxu0 0
  %4124 = vmatpush2.bf16.msra.mxu0 0
  %4125 = vmatprep.subr.bf16.mxu0 0
  %4126 = vmatpush2.bf16.msra.mxu0 0
  %4127 = vmatprep.subr.bf16.mxu0 0
  %4128 = vmatpush2.bf16.msra.mxu0 0
  %4129 = vmatprep.subr.bf16.mxu0 0
  %4130 = vmatpush2.bf16.msra.mxu0 0
  %4131 = vmatprep.subr.bf16.mxu0 0
  %4132 = vmatpush2.bf16.msra.mxu0 0
  %4133 = vmatprep.subr.bf16.mxu0 0
  %4134 = vmatpush2.bf16.msra.mxu0 0
  %4135 = vmatprep.subr.bf16.mxu0 0
  %4136 = vmatpush2.bf16.msra.mxu0 0
  %4137 = vmatprep.mubr.bf16.mxu0 0
  %4138 = vmatmul.mubr.bf16.gmra.mxu0 %v4100
  %v4139 = vpop.f32.mrf.mxu0
  %v4140 = vadd.f32 0.0, %v4139
  %v4141 = vpop.f32.mrf.mxu0
  %v4142 = vpop.f32.mrf.mxu0
  %v4143 = vadd.f32 0.0, %v4142
  %v4144 = vpop.f32.mrf.mxu0
  %4145 = vmatprep.mubr.bf16.mxu0 0
  %4146 = vmatmul.mubr.bf16.gmra.mxu0 %v4103
  %v4147 = vpop.f32.mrf.mxu0
  %v4148 = vadd.f32 0.0, %v4147
  %v4149 = vpop.f32.mrf.mxu0
  %v4150 = vpop.f32.mrf.mxu0
  %v4151 = vadd.f32 0.0, %v4150
  %v4152 = vpop.f32.mrf.mxu0
  %4153 = vdwg.mxu0
  %v4154 = vadd.f32 %v4077, %v4140
  %v4155 = vadd.f32 %v4078, %v4143
  %v4156 = vadd.f32 %v4079, %v4148
  %v4157 = vadd.f32 %v4080, %v4151
  %4159 = vset.pattern.permute.xlu0 0
  %4160 = vperm.xlu0 %4159, %v3471
  %v4161 = vpop.permute.xlu0 %4160
  %4164 = vset.pattern.permute.xlu0 0
  %4165 = vperm.xlu0 %4164, %v3472
  %v4166 = vpop.permute.xlu0 %4165
  %4169 = vset.pattern.permute.xlu0 0
  %4170 = vperm.xlu0 %4169, %v3473
  %v4171 = vpop.permute.xlu0 %4170
  %4174 = vset.pattern.permute.xlu0 0
  %4175 = vperm.xlu0 %4174, %v3474
  %v4176 = vpop.permute.xlu0 %4175
  %v4178 = vadd.f32 %v4154, %v4161
  %v4179 = vadd.f32 %v4155, %v4166
  %v4180 = vadd.f32 %v4156, %v4171
  %v4181 = vadd.f32 %v4157, %v4176
  %v4182 = vmax.f32 %v4178, 0.0
  %v4183 = vmax.f32 %v4179, 0.0
  %v4184 = vmax.f32 %v4180, 0.0
  %v4185 = vmax.f32 %v4181, 0.0
  %4190 = vrot.lane.b32.xlu0 %v4182, 126
  %v4191 = vpop.permute.xlu0 %4190
  %4192 = vrot.lane.b32.xlu0 %v4183, 126
  %v4193 = vpop.permute.xlu0 %4192
  %4194 = vrot.lane.b32.xlu0 %v4184, 126
  %v4195 = vpop.permute.xlu0 %4194
  %4196 = vrot.lane.b32.xlu0 %v4185, 126
  %v4197 = vpop.permute.xlu0 %4196
  %v4202 = vmax.f32 %v4182, %v4191
  %v4203 = vmax.f32 %v4183, %v4193
  %v4204 = vmax.f32 %v4184, %v4195
  %v4205 = vmax.f32 %v4185, %v4197
  %4206 = vrot.lane.b32.xlu0 %v4182, 124
  %v4207 = vpop.permute.xlu0 %4206
  %4208 = vrot.lane.b32.xlu0 %v4183, 124
  %v4209 = vpop.permute.xlu0 %4208
  %4210 = vrot.lane.b32.xlu0 %v4184, 124
  %v4211 = vpop.permute.xlu0 %4210
  %4212 = vrot.lane.b32.xlu0 %v4185, 124
  %v4213 = vpop.permute.xlu0 %4212
  %v4218 = vmax.f32 %v4202, %v4207
  %v4219 = vmax.f32 %v4203, %v4209
  %v4220 = vmax.f32 %v4204, %v4211
  %v4221 = vmax.f32 %v4205, %v4213
  %4222 = vrot.lane.b32.xlu0 %v4182, 122
  %v4223 = vpop.permute.xlu0 %4222
  %4224 = vrot.lane.b32.xlu0 %v4183, 122
  %v4225 = vpop.permute.xlu0 %4224
  %4226 = vrot.lane.b32.xlu0 %v4184, 122
  %v4227 = vpop.permute.xlu0 %4226
  %4228 = vrot.lane.b32.xlu0 %v4185, 122
  %v4229 = vpop.permute.xlu0 %4228
  %v4234 = vmax.f32 %v4218, %v4223
  %v4235 = vmax.f32 %v4219, %v4225
  %v4236 = vmax.f32 %v4220, %v4227
  %v4237 = vmax.f32 %v4221, %v4229
  %v4238 = vld [vmem:[%s9] sm:$0xf]
  %v4239 = vld [vmem:[%s9 + $0x4] sm:$0xf]
  %v4240 = vld [vmem:[%s9 + $0x8] sm:$0xf]
  %v4241 = vld [vmem:[%s9 + $0xc] sm:$0xf]
  %v4242 = vld [vmem:[%s9 + $0x10] sm:$0xf]
  %v4243 = vld [vmem:[%s9 + $0x14] sm:$0xf]
  %v4244 = vld [vmem:[%s9 + $0x18] sm:$0xf]
  %v4245 = vld [vmem:[%s9 + $0x1c] sm:$0xf]
  %v4246 = vld [vmem:[%s9 + $0x20] sm:$0xf]
  %v4247 = vld [vmem:[%s9 + $0x24] sm:$0xf]
  %v4248 = vld [vmem:[%s9 + $0x28] sm:$0xf]
  %v4249 = vld [vmem:[%s9 + $0x2c] sm:$0xf]
  %v4250 = vld [vmem:[%s9 + $0x30] sm:$0xf]
  %v4251 = vld [vmem:[%s9 + $0x34] sm:$0xf]
  %v4252 = vld [vmem:[%s9 + $0x38] sm:$0xf]
  %v4253 = vld [vmem:[%s9 + $0x3c] sm:$0xf]
  %v4254 = vld [vmem:[%s9 + $0x40] sm:$0xf]
  %v4255 = vld [vmem:[%s9 + $0x44] sm:$0xf]
  %v4256 = vld [vmem:[%s9 + $0x48] sm:$0xf]
  %v4257 = vld [vmem:[%s9 + $0x4c] sm:$0xf]
  %v4258 = vld [vmem:[%s9 + $0x50] sm:$0xf]
  %v4259 = vld [vmem:[%s9 + $0x54] sm:$0xf]
  %v4260 = vld [vmem:[%s9 + $0x58] sm:$0xf]
  %v4261 = vld [vmem:[%s9 + $0x5c] sm:$0xf]
  %v4262 = vld [vmem:[%s9 + $0x60] sm:$0xf]
  %v4263 = vld [vmem:[%s9 + $0x64] sm:$0xf]
  %v4264 = vld [vmem:[%s9 + $0x68] sm:$0xf]
  %v4265 = vld [vmem:[%s9 + $0x6c] sm:$0xf]
  %v4266 = vld [vmem:[%s9 + $0x70] sm:$0xf]
  %v4267 = vld [vmem:[%s9 + $0x74] sm:$0xf]
  %v4268 = vld [vmem:[%s9 + $0x78] sm:$0xf]
  %v4269 = vld [vmem:[%s9 + $0x7c] sm:$0xf]
  %v4270 = vld [vmem:[%s9 + $0x80] sm:$0xf]
  %v4271 = vld [vmem:[%s9 + $0x84] sm:$0xf]
  %v4272 = vld [vmem:[%s9 + $0x88] sm:$0xf]
  %v4273 = vld [vmem:[%s9 + $0x8c] sm:$0xf]
  %v4274 = vld [vmem:[%s9 + $0x90] sm:$0xf]
  %v4275 = vld [vmem:[%s9 + $0x94] sm:$0xf]
  %v4276 = vld [vmem:[%s9 + $0x98] sm:$0xf]
  %v4277 = vld [vmem:[%s9 + $0x9c] sm:$0xf]
  %v4278 = vld [vmem:[%s9 + $0xa0] sm:$0xf]
  %v4279 = vld [vmem:[%s9 + $0xa4] sm:$0xf]
  %v4280 = vld [vmem:[%s9 + $0xa8] sm:$0xf]
  %v4281 = vld [vmem:[%s9 + $0xac] sm:$0xf]
  %v4282 = vld [vmem:[%s9 + $0xb0] sm:$0xf]
  %v4283 = vld [vmem:[%s9 + $0xb4] sm:$0xf]
  %v4284 = vld [vmem:[%s9 + $0xb8] sm:$0xf]
  %v4285 = vld [vmem:[%s9 + $0xbc] sm:$0xf]
  %v4286 = vld [vmem:[%s9 + $0xc0] sm:$0xf]
  %v4287 = vld [vmem:[%s9 + $0xc4] sm:$0xf]
  %v4288 = vld [vmem:[%s9 + $0xc8] sm:$0xf]
  %v4289 = vld [vmem:[%s9 + $0xcc] sm:$0xf]
  %v4290 = vld [vmem:[%s9 + $0xd0] sm:$0xf]
  %v4291 = vld [vmem:[%s9 + $0xd4] sm:$0xf]
  %v4292 = vld [vmem:[%s9 + $0xd8] sm:$0xf]
  %v4293 = vld [vmem:[%s9 + $0xdc] sm:$0xf]
  %v4294 = vld [vmem:[%s9 + $0xe0] sm:$0xf]
  %v4295 = vld [vmem:[%s9 + $0xe4] sm:$0xf]
  %v4296 = vld [vmem:[%s9 + $0xe8] sm:$0xf]
  %v4297 = vld [vmem:[%s9 + $0xec] sm:$0xf]
  %v4298 = vld [vmem:[%s9 + $0xf0] sm:$0xf]
  %v4299 = vld [vmem:[%s9 + $0xf4] sm:$0xf]
  %v4300 = vld [vmem:[%s9 + $0xf8] sm:$0xf]
  %v4301 = vld [vmem:[%s9 + $0xfc] sm:$0xf]
  %v4302 = vld [vmem:[%s9 + $0x100] sm:$0xf]
  %v4303 = vld [vmem:[%s9 + $0x104] sm:$0xf]
  %v4304 = vld [vmem:[%s9 + $0x108] sm:$0xf]
  %v4305 = vld [vmem:[%s9 + $0x10c] sm:$0xf]
  %v4306 = vld [vmem:[%s9 + $0x110] sm:$0xf]
  %v4307 = vld [vmem:[%s9 + $0x114] sm:$0xf]
  %v4308 = vld [vmem:[%s9 + $0x118] sm:$0xf]
  %v4309 = vld [vmem:[%s9 + $0x11c] sm:$0xf]
  %v4310 = vld [vmem:[%s9 + $0x120] sm:$0xf]
  %v4311 = vld [vmem:[%s9 + $0x124] sm:$0xf]
  %v4312 = vld [vmem:[%s9 + $0x128] sm:$0xf]
  %v4313 = vld [vmem:[%s9 + $0x12c] sm:$0xf]
  %v4314 = vld [vmem:[%s9 + $0x130] sm:$0xf]
  %v4315 = vld [vmem:[%s9 + $0x134] sm:$0xf]
  %v4316 = vld [vmem:[%s9 + $0x138] sm:$0xf]
  %v4317 = vld [vmem:[%s9 + $0x13c] sm:$0xf]
  %v4318 = vld [vmem:[%s9 + $0x140] sm:$0xf]
  %v4319 = vld [vmem:[%s9 + $0x144] sm:$0xf]
  %v4320 = vld [vmem:[%s9 + $0x148] sm:$0xf]
  %v4321 = vld [vmem:[%s9 + $0x14c] sm:$0xf]
  %v4322 = vld [vmem:[%s9 + $0x150] sm:$0xf]
  %v4323 = vld [vmem:[%s9 + $0x154] sm:$0xf]
  %v4324 = vld [vmem:[%s9 + $0x158] sm:$0xf]
  %v4325 = vld [vmem:[%s9 + $0x15c] sm:$0xf]
  %v4326 = vld [vmem:[%s9 + $0x160] sm:$0xf]
  %v4327 = vld [vmem:[%s9 + $0x164] sm:$0xf]
  %v4328 = vld [vmem:[%s9 + $0x168] sm:$0xf]
  %v4329 = vld [vmem:[%s9 + $0x16c] sm:$0xf]
  %v4330 = vld [vmem:[%s9 + $0x170] sm:$0xf]
  %v4331 = vld [vmem:[%s9 + $0x174] sm:$0xf]
  %v4332 = vld [vmem:[%s9 + $0x178] sm:$0xf]
  %v4333 = vld [vmem:[%s9 + $0x17c] sm:$0xf]
  %v4334 = vld [vmem:[%s9 + $0x180] sm:$0xf]
  %v4335 = vld [vmem:[%s9 + $0x184] sm:$0xf]
  %v4336 = vld [vmem:[%s9 + $0x188] sm:$0xf]
  %v4337 = vld [vmem:[%s9 + $0x18c] sm:$0xf]
  %v4338 = vld [vmem:[%s9 + $0x190] sm:$0xf]
  %v4339 = vld [vmem:[%s9 + $0x194] sm:$0xf]
  %v4340 = vld [vmem:[%s9 + $0x198] sm:$0xf]
  %v4341 = vld [vmem:[%s9 + $0x19c] sm:$0xf]
  %v4342 = vld [vmem:[%s9 + $0x1a0] sm:$0xf]
  %v4343 = vld [vmem:[%s9 + $0x1a4] sm:$0xf]
  %v4344 = vld [vmem:[%s9 + $0x1a8] sm:$0xf]
  %v4345 = vld [vmem:[%s9 + $0x1ac] sm:$0xf]
  %v4346 = vld [vmem:[%s9 + $0x1b0] sm:$0xf]
  %v4347 = vld [vmem:[%s9 + $0x1b4] sm:$0xf]
  %v4348 = vld [vmem:[%s9 + $0x1b8] sm:$0xf]
  %v4349 = vld [vmem:[%s9 + $0x1bc] sm:$0xf]
  %v4350 = vld [vmem:[%s9 + $0x1c0] sm:$0xf]
  %v4351 = vld [vmem:[%s9 + $0x1c4] sm:$0xf]
  %v4352 = vld [vmem:[%s9 + $0x1c8] sm:$0xf]
  %v4353 = vld [vmem:[%s9 + $0x1cc] sm:$0xf]
  %v4354 = vld [vmem:[%s9 + $0x1d0] sm:$0xf]
  %v4355 = vld [vmem:[%s9 + $0x1d4] sm:$0xf]
  %v4356 = vld [vmem:[%s9 + $0x1d8] sm:$0xf]
  %v4357 = vld [vmem:[%s9 + $0x1dc] sm:$0xf]
  %v4358 = vld [vmem:[%s9 + $0x1e0] sm:$0xf]
  %v4359 = vld [vmem:[%s9 + $0x1e4] sm:$0xf]
  %v4360 = vld [vmem:[%s9 + $0x1e8] sm:$0xf]
  %v4361 = vld [vmem:[%s9 + $0x1ec] sm:$0xf]
  %v4362 = vld [vmem:[%s9 + $0x1f0] sm:$0xf]
  %v4363 = vld [vmem:[%s9 + $0x1f4] sm:$0xf]
  %v4364 = vld [vmem:[%s9 + $0x1f8] sm:$0xf]
  %v4365 = vld [vmem:[%s9 + $0x1fc] sm:$0xf]
  %v4366 = vpack.c.bf16 %v4235, %v4234
  %v4367 = vpack.c.bf16 %v4237, %v4236
  %v4368 = vld [vmem:[%s10] sm:$0xff]
  %v4369 = vld [vmem:[%s10 + $0x8] sm:$0xff]
  %v4370 = vld [vmem:[%s10 + $0x10] sm:$0xff]
  %v4371 = vld [vmem:[%s10 + $0x18] sm:$0xff]
  %v4372 = vld [vmem:[%s10 + $0x20] sm:$0xff]
  %v4373 = vld [vmem:[%s10 + $0x28] sm:$0xff]
  %v4374 = vld [vmem:[%s10 + $0x30] sm:$0xff]
  %v4375 = vld [vmem:[%s10 + $0x38] sm:$0xff]
  %v4376 = vld [vmem:[%s10 + $0x40] sm:$0xff]
  %v4377 = vld [vmem:[%s10 + $0x48] sm:$0xff]
  %v4378 = vld [vmem:[%s10 + $0x50] sm:$0xff]
  %v4379 = vld [vmem:[%s10 + $0x58] sm:$0xff]
  %v4380 = vld [vmem:[%s10 + $0x60] sm:$0xff]
  %v4381 = vld [vmem:[%s10 + $0x68] sm:$0xff]
  %v4382 = vld [vmem:[%s10 + $0x70] sm:$0xff]
  %v4383 = vld [vmem:[%s10 + $0x78] sm:$0xff]
  %v4384 = vld [vmem:[%s10 + $0x80] sm:$0xff]
  %v4385 = vld [vmem:[%s10 + $0x88] sm:$0xff]
  %v4386 = vld [vmem:[%s10 + $0x90] sm:$0xff]
  %v4387 = vld [vmem:[%s10 + $0x98] sm:$0xff]
  %v4388 = vld [vmem:[%s10 + $0xa0] sm:$0xff]
  %v4389 = vld [vmem:[%s10 + $0xa8] sm:$0xff]
  %v4390 = vld [vmem:[%s10 + $0xb0] sm:$0xff]
  %v4391 = vld [vmem:[%s10 + $0xb8] sm:$0xff]
  %v4392 = vld [vmem:[%s10 + $0xc0] sm:$0xff]
  %v4393 = vld [vmem:[%s10 + $0xc8] sm:$0xff]
  %v4394 = vld [vmem:[%s10 + $0xd0] sm:$0xff]
  %v4395 = vld [vmem:[%s10 + $0xd8] sm:$0xff]
  %v4396 = vld [vmem:[%s10 + $0xe0] sm:$0xff]
  %v4397 = vld [vmem:[%s10 + $0xe8] sm:$0xff]
  %v4398 = vld [vmem:[%s10 + $0xf0] sm:$0xff]
  %v4399 = vld [vmem:[%s10 + $0xf8] sm:$0xff]
  %v4400 = vld [vmem:[%s10 + $0x100] sm:$0xff]
  %v4401 = vld [vmem:[%s10 + $0x108] sm:$0xff]
  %v4402 = vld [vmem:[%s10 + $0x110] sm:$0xff]
  %v4403 = vld [vmem:[%s10 + $0x118] sm:$0xff]
  %v4404 = vld [vmem:[%s10 + $0x120] sm:$0xff]
  %v4405 = vld [vmem:[%s10 + $0x128] sm:$0xff]
  %v4406 = vld [vmem:[%s10 + $0x130] sm:$0xff]
  %v4407 = vld [vmem:[%s10 + $0x138] sm:$0xff]
  %v4408 = vld [vmem:[%s10 + $0x140] sm:$0xff]
  %v4409 = vld [vmem:[%s10 + $0x148] sm:$0xff]
  %v4410 = vld [vmem:[%s10 + $0x150] sm:$0xff]
  %v4411 = vld [vmem:[%s10 + $0x158] sm:$0xff]
  %v4412 = vld [vmem:[%s10 + $0x160] sm:$0xff]
  %v4413 = vld [vmem:[%s10 + $0x168] sm:$0xff]
  %v4414 = vld [vmem:[%s10 + $0x170] sm:$0xff]
  %v4415 = vld [vmem:[%s10 + $0x178] sm:$0xff]
  %v4416 = vld [vmem:[%s10 + $0x180] sm:$0xff]
  %v4417 = vld [vmem:[%s10 + $0x188] sm:$0xff]
  %v4418 = vld [vmem:[%s10 + $0x190] sm:$0xff]
  %v4419 = vld [vmem:[%s10 + $0x198] sm:$0xff]
  %v4420 = vld [vmem:[%s10 + $0x1a0] sm:$0xff]
  %v4421 = vld [vmem:[%s10 + $0x1a8] sm:$0xff]
  %v4422 = vld [vmem:[%s10 + $0x1b0] sm:$0xff]
  %v4423 = vld [vmem:[%s10 + $0x1b8] sm:$0xff]
  %v4424 = vld [vmem:[%s10 + $0x1c0] sm:$0xff]
  %v4425 = vld [vmem:[%s10 + $0x1c8] sm:$0xff]
  %v4426 = vld [vmem:[%s10 + $0x1d0] sm:$0xff]
  %v4427 = vld [vmem:[%s10 + $0x1d8] sm:$0xff]
  %v4428 = vld [vmem:[%s10 + $0x1e0] sm:$0xff]
  %v4429 = vld [vmem:[%s10 + $0x1e8] sm:$0xff]
  %v4430 = vld [vmem:[%s10 + $0x1f0] sm:$0xff]
  %v4431 = vld [vmem:[%s10 + $0x1f8] sm:$0xff]
  %v4432 = vld [vmem:[%s10 + $0x200] sm:$0xff]
  %v4433 = vld [vmem:[%s10 + $0x208] sm:$0xff]
  %v4434 = vld [vmem:[%s10 + $0x210] sm:$0xff]
  %v4435 = vld [vmem:[%s10 + $0x218] sm:$0xff]
  %v4436 = vld [vmem:[%s10 + $0x220] sm:$0xff]
  %v4437 = vld [vmem:[%s10 + $0x228] sm:$0xff]
  %v4438 = vld [vmem:[%s10 + $0x230] sm:$0xff]
  %v4439 = vld [vmem:[%s10 + $0x238] sm:$0xff]
  %v4440 = vld [vmem:[%s10 + $0x240] sm:$0xff]
  %v4441 = vld [vmem:[%s10 + $0x248] sm:$0xff]
  %v4442 = vld [vmem:[%s10 + $0x250] sm:$0xff]
  %v4443 = vld [vmem:[%s10 + $0x258] sm:$0xff]
  %v4444 = vld [vmem:[%s10 + $0x260] sm:$0xff]
  %v4445 = vld [vmem:[%s10 + $0x268] sm:$0xff]
  %v4446 = vld [vmem:[%s10 + $0x270] sm:$0xff]
  %v4447 = vld [vmem:[%s10 + $0x278] sm:$0xff]
  %v4448 = vld [vmem:[%s10 + $0x280] sm:$0xff]
  %v4449 = vld [vmem:[%s10 + $0x288] sm:$0xff]
  %v4450 = vld [vmem:[%s10 + $0x290] sm:$0xff]
  %v4451 = vld [vmem:[%s10 + $0x298] sm:$0xff]
  %v4452 = vld [vmem:[%s10 + $0x2a0] sm:$0xff]
  %v4453 = vld [vmem:[%s10 + $0x2a8] sm:$0xff]
  %v4454 = vld [vmem:[%s10 + $0x2b0] sm:$0xff]
  %v4455 = vld [vmem:[%s10 + $0x2b8] sm:$0xff]
  %v4456 = vld [vmem:[%s10 + $0x2c0] sm:$0xff]
  %v4457 = vld [vmem:[%s10 + $0x2c8] sm:$0xff]
  %v4458 = vld [vmem:[%s10 + $0x2d0] sm:$0xff]
  %v4459 = vld [vmem:[%s10 + $0x2d8] sm:$0xff]
  %v4460 = vld [vmem:[%s10 + $0x2e0] sm:$0xff]
  %v4461 = vld [vmem:[%s10 + $0x2e8] sm:$0xff]
  %v4462 = vld [vmem:[%s10 + $0x2f0] sm:$0xff]
  %v4463 = vld [vmem:[%s10 + $0x2f8] sm:$0xff]
  %v4464 = vld [vmem:[%s10 + $0x300] sm:$0xff]
  %v4465 = vld [vmem:[%s10 + $0x308] sm:$0xff]
  %v4466 = vld [vmem:[%s10 + $0x310] sm:$0xff]
  %v4467 = vld [vmem:[%s10 + $0x318] sm:$0xff]
  %v4468 = vld [vmem:[%s10 + $0x320] sm:$0xff]
  %v4469 = vld [vmem:[%s10 + $0x328] sm:$0xff]
  %v4470 = vld [vmem:[%s10 + $0x330] sm:$0xff]
  %v4471 = vld [vmem:[%s10 + $0x338] sm:$0xff]
  %v4472 = vld [vmem:[%s10 + $0x340] sm:$0xff]
  %v4473 = vld [vmem:[%s10 + $0x348] sm:$0xff]
  %v4474 = vld [vmem:[%s10 + $0x350] sm:$0xff]
  %v4475 = vld [vmem:[%s10 + $0x358] sm:$0xff]
  %v4476 = vld [vmem:[%s10 + $0x360] sm:$0xff]
  %v4477 = vld [vmem:[%s10 + $0x368] sm:$0xff]
  %v4478 = vld [vmem:[%s10 + $0x370] sm:$0xff]
  %v4479 = vld [vmem:[%s10 + $0x378] sm:$0xff]
  %v4480 = vld [vmem:[%s10 + $0x380] sm:$0xff]
  %v4481 = vld [vmem:[%s10 + $0x388] sm:$0xff]
  %v4482 = vld [vmem:[%s10 + $0x390] sm:$0xff]
  %v4483 = vld [vmem:[%s10 + $0x398] sm:$0xff]
  %v4484 = vld [vmem:[%s10 + $0x3a0] sm:$0xff]
  %v4485 = vld [vmem:[%s10 + $0x3a8] sm:$0xff]
  %v4486 = vld [vmem:[%s10 + $0x3b0] sm:$0xff]
  %v4487 = vld [vmem:[%s10 + $0x3b8] sm:$0xff]
  %v4488 = vld [vmem:[%s10 + $0x3c0] sm:$0xff]
  %v4489 = vld [vmem:[%s10 + $0x3c8] sm:$0xff]
  %v4490 = vld [vmem:[%s10 + $0x3d0] sm:$0xff]
  %v4491 = vld [vmem:[%s10 + $0x3d8] sm:$0xff]
  %v4492 = vld [vmem:[%s10 + $0x3e0] sm:$0xff]
  %v4493 = vld [vmem:[%s10 + $0x3e8] sm:$0xff]
  %v4494 = vld [vmem:[%s10 + $0x3f0] sm:$0xff]
  %v4495 = vld [vmem:[%s10 + $0x3f8] sm:$0xff]
  %4497 = vset.pattern.permute.xlu0 0
  %4498 = vperm.xlu0 %4497, %v4368
  %v4499 = vpop.permute.xlu0 %4498
  %4502 = vset.pattern.permute.xlu0 0
  %4503 = vperm.xlu0 %4502, %v4369
  %v4504 = vpop.permute.xlu0 %4503
  %4507 = vset.pattern.permute.xlu0 0
  %4508 = vperm.xlu0 %4507, %v4370
  %v4509 = vpop.permute.xlu0 %4508
  %4512 = vset.pattern.permute.xlu0 0
  %4513 = vperm.xlu0 %4512, %v4371
  %v4514 = vpop.permute.xlu0 %4513
  %4517 = vset.pattern.permute.xlu0 0
  %4518 = vperm.xlu0 %4517, %v4372
  %v4519 = vpop.permute.xlu0 %4518
  %4522 = vset.pattern.permute.xlu0 0
  %4523 = vperm.xlu0 %4522, %v4373
  %v4524 = vpop.permute.xlu0 %4523
  %4527 = vset.pattern.permute.xlu0 0
  %4528 = vperm.xlu0 %4527, %v4374
  %v4529 = vpop.permute.xlu0 %4528
  %4532 = vset.pattern.permute.xlu0 0
  %4533 = vperm.xlu0 %4532, %v4375
  %v4534 = vpop.permute.xlu0 %4533
  %4537 = vset.pattern.permute.xlu0 0
  %4538 = vperm.xlu0 %4537, %v4376
  %v4539 = vpop.permute.xlu0 %4538
  %4542 = vset.pattern.permute.xlu0 0
  %4543 = vperm.xlu0 %4542, %v4377
  %v4544 = vpop.permute.xlu0 %4543
  %4547 = vset.pattern.permute.xlu0 0
  %4548 = vperm.xlu0 %4547, %v4378
  %v4549 = vpop.permute.xlu0 %4548
  %4552 = vset.pattern.permute.xlu0 0
  %4553 = vperm.xlu0 %4552, %v4379
  %v4554 = vpop.permute.xlu0 %4553
  %4557 = vset.pattern.permute.xlu0 0
  %4558 = vperm.xlu0 %4557, %v4380
  %v4559 = vpop.permute.xlu0 %4558
  %4562 = vset.pattern.permute.xlu0 0
  %4563 = vperm.xlu0 %4562, %v4381
  %v4564 = vpop.permute.xlu0 %4563
  %4567 = vset.pattern.permute.xlu0 0
  %4568 = vperm.xlu0 %4567, %v4382
  %v4569 = vpop.permute.xlu0 %4568
  %4572 = vset.pattern.permute.xlu0 0
  %4573 = vperm.xlu0 %4572, %v4383
  %v4574 = vpop.permute.xlu0 %4573
  %4577 = vset.pattern.permute.xlu0 0
  %4578 = vperm.xlu0 %4577, %v4384
  %v4579 = vpop.permute.xlu0 %4578
  %4582 = vset.pattern.permute.xlu0 0
  %4583 = vperm.xlu0 %4582, %v4385
  %v4584 = vpop.permute.xlu0 %4583
  %4587 = vset.pattern.permute.xlu0 0
  %4588 = vperm.xlu0 %4587, %v4386
  %v4589 = vpop.permute.xlu0 %4588
  %4592 = vset.pattern.permute.xlu0 0
  %4593 = vperm.xlu0 %4592, %v4387
  %v4594 = vpop.permute.xlu0 %4593
  %4597 = vset.pattern.permute.xlu0 0
  %4598 = vperm.xlu0 %4597, %v4388
  %v4599 = vpop.permute.xlu0 %4598
  %4602 = vset.pattern.permute.xlu0 0
  %4603 = vperm.xlu0 %4602, %v4389
  %v4604 = vpop.permute.xlu0 %4603
  %4607 = vset.pattern.permute.xlu0 0
  %4608 = vperm.xlu0 %4607, %v4390
  %v4609 = vpop.permute.xlu0 %4608
  %4612 = vset.pattern.permute.xlu0 0
  %4613 = vperm.xlu0 %4612, %v4391
  %v4614 = vpop.permute.xlu0 %4613
  %4617 = vset.pattern.permute.xlu0 0
  %4618 = vperm.xlu0 %4617, %v4392
  %v4619 = vpop.permute.xlu0 %4618
  %4622 = vset.pattern.permute.xlu0 0
  %4623 = vperm.xlu0 %4622, %v4393
  %v4624 = vpop.permute.xlu0 %4623
  %4627 = vset.pattern.permute.xlu0 0
  %4628 = vperm.xlu0 %4627, %v4394
  %v4629 = vpop.permute.xlu0 %4628
  %4632 = vset.pattern.permute.xlu0 0
  %4633 = vperm.xlu0 %4632, %v4395
  %v4634 = vpop.permute.xlu0 %4633
  %4637 = vset.pattern.permute.xlu0 0
  %4638 = vperm.xlu0 %4637, %v4396
  %v4639 = vpop.permute.xlu0 %4638
  %4642 = vset.pattern.permute.xlu0 0
  %4643 = vperm.xlu0 %4642, %v4397
  %v4644 = vpop.permute.xlu0 %4643
  %4647 = vset.pattern.permute.xlu0 0
  %4648 = vperm.xlu0 %4647, %v4398
  %v4649 = vpop.permute.xlu0 %4648
  %4652 = vset.pattern.permute.xlu0 0
  %4653 = vperm.xlu0 %4652, %v4399
  %v4654 = vpop.permute.xlu0 %4653
  %4657 = vset.pattern.permute.xlu0 0
  %4658 = vperm.xlu0 %4657, %v4400
  %v4659 = vpop.permute.xlu0 %4658
  %4662 = vset.pattern.permute.xlu0 0
  %4663 = vperm.xlu0 %4662, %v4401
  %v4664 = vpop.permute.xlu0 %4663
  %4667 = vset.pattern.permute.xlu0 0
  %4668 = vperm.xlu0 %4667, %v4402
  %v4669 = vpop.permute.xlu0 %4668
  %4672 = vset.pattern.permute.xlu0 0
  %4673 = vperm.xlu0 %4672, %v4403
  %v4674 = vpop.permute.xlu0 %4673
  %4677 = vset.pattern.permute.xlu0 0
  %4678 = vperm.xlu0 %4677, %v4404
  %v4679 = vpop.permute.xlu0 %4678
  %4682 = vset.pattern.permute.xlu0 0
  %4683 = vperm.xlu0 %4682, %v4405
  %v4684 = vpop.permute.xlu0 %4683
  %4687 = vset.pattern.permute.xlu0 0
  %4688 = vperm.xlu0 %4687, %v4406
  %v4689 = vpop.permute.xlu0 %4688
  %4692 = vset.pattern.permute.xlu0 0
  %4693 = vperm.xlu0 %4692, %v4407
  %v4694 = vpop.permute.xlu0 %4693
  %4697 = vset.pattern.permute.xlu0 0
  %4698 = vperm.xlu0 %4697, %v4408
  %v4699 = vpop.permute.xlu0 %4698
  %4702 = vset.pattern.permute.xlu0 0
  %4703 = vperm.xlu0 %4702, %v4409
  %v4704 = vpop.permute.xlu0 %4703
  %4707 = vset.pattern.permute.xlu0 0
  %4708 = vperm.xlu0 %4707, %v4410
  %v4709 = vpop.permute.xlu0 %4708
  %4712 = vset.pattern.permute.xlu0 0
  %4713 = vperm.xlu0 %4712, %v4411
  %v4714 = vpop.permute.xlu0 %4713
  %4717 = vset.pattern.permute.xlu0 0
  %4718 = vperm.xlu0 %4717, %v4412
  %v4719 = vpop.permute.xlu0 %4718
  %4722 = vset.pattern.permute.xlu0 0
  %4723 = vperm.xlu0 %4722, %v4413
  %v4724 = vpop.permute.xlu0 %4723
  %4727 = vset.pattern.permute.xlu0 0
  %4728 = vperm.xlu0 %4727, %v4414
  %v4729 = vpop.permute.xlu0 %4728
  %4732 = vset.pattern.permute.xlu0 0
  %4733 = vperm.xlu0 %4732, %v4415
  %v4734 = vpop.permute.xlu0 %4733
  %4737 = vset.pattern.permute.xlu0 0
  %4738 = vperm.xlu0 %4737, %v4416
  %v4739 = vpop.permute.xlu0 %4738
  %4742 = vset.pattern.permute.xlu0 0
  %4743 = vperm.xlu0 %4742, %v4417
  %v4744 = vpop.permute.xlu0 %4743
  %4747 = vset.pattern.permute.xlu0 0
  %4748 = vperm.xlu0 %4747, %v4418
  %v4749 = vpop.permute.xlu0 %4748
  %4752 = vset.pattern.permute.xlu0 0
  %4753 = vperm.xlu0 %4752, %v4419
  %v4754 = vpop.permute.xlu0 %4753
  %4757 = vset.pattern.permute.xlu0 0
  %4758 = vperm.xlu0 %4757, %v4420
  %v4759 = vpop.permute.xlu0 %4758
  %4762 = vset.pattern.permute.xlu0 0
  %4763 = vperm.xlu0 %4762, %v4421
  %v4764 = vpop.permute.xlu0 %4763
  %4767 = vset.pattern.permute.xlu0 0
  %4768 = vperm.xlu0 %4767, %v4422
  %v4769 = vpop.permute.xlu0 %4768
  %4772 = vset.pattern.permute.xlu0 0
  %4773 = vperm.xlu0 %4772, %v4423
  %v4774 = vpop.permute.xlu0 %4773
  %4777 = vset.pattern.permute.xlu0 0
  %4778 = vperm.xlu0 %4777, %v4424
  %v4779 = vpop.permute.xlu0 %4778
  %4782 = vset.pattern.permute.xlu0 0
  %4783 = vperm.xlu0 %4782, %v4425
  %v4784 = vpop.permute.xlu0 %4783
  %4787 = vset.pattern.permute.xlu0 0
  %4788 = vperm.xlu0 %4787, %v4426
  %v4789 = vpop.permute.xlu0 %4788
  %4792 = vset.pattern.permute.xlu0 0
  %4793 = vperm.xlu0 %4792, %v4427
  %v4794 = vpop.permute.xlu0 %4793
  %4797 = vset.pattern.permute.xlu0 0
  %4798 = vperm.xlu0 %4797, %v4428
  %v4799 = vpop.permute.xlu0 %4798
  %4802 = vset.pattern.permute.xlu0 0
  %4803 = vperm.xlu0 %4802, %v4429
  %v4804 = vpop.permute.xlu0 %4803
  %4807 = vset.pattern.permute.xlu0 0
  %4808 = vperm.xlu0 %4807, %v4430
  %v4809 = vpop.permute.xlu0 %4808
  %4812 = vset.pattern.permute.xlu0 0
  %4813 = vperm.xlu0 %4812, %v4431
  %v4814 = vpop.permute.xlu0 %4813
  %4817 = vset.pattern.permute.xlu0 0
  %4818 = vperm.xlu0 %4817, %v4432
  %v4819 = vpop.permute.xlu0 %4818
  %4822 = vset.pattern.permute.xlu0 0
  %4823 = vperm.xlu0 %4822, %v4433
  %v4824 = vpop.permute.xlu0 %4823
  %4827 = vset.pattern.permute.xlu0 0
  %4828 = vperm.xlu0 %4827, %v4434
  %v4829 = vpop.permute.xlu0 %4828
  %4832 = vset.pattern.permute.xlu0 0
  %4833 = vperm.xlu0 %4832, %v4435
  %v4834 = vpop.permute.xlu0 %4833
  %4837 = vset.pattern.permute.xlu0 0
  %4838 = vperm.xlu0 %4837, %v4436
  %v4839 = vpop.permute.xlu0 %4838
  %4842 = vset.pattern.permute.xlu0 0
  %4843 = vperm.xlu0 %4842, %v4437
  %v4844 = vpop.permute.xlu0 %4843
  %4847 = vset.pattern.permute.xlu0 0
  %4848 = vperm.xlu0 %4847, %v4438
  %v4849 = vpop.permute.xlu0 %4848
  %4852 = vset.pattern.permute.xlu0 0
  %4853 = vperm.xlu0 %4852, %v4439
  %v4854 = vpop.permute.xlu0 %4853
  %4857 = vset.pattern.permute.xlu0 0
  %4858 = vperm.xlu0 %4857, %v4440
  %v4859 = vpop.permute.xlu0 %4858
  %4862 = vset.pattern.permute.xlu0 0
  %4863 = vperm.xlu0 %4862, %v4441
  %v4864 = vpop.permute.xlu0 %4863
  %4867 = vset.pattern.permute.xlu0 0
  %4868 = vperm.xlu0 %4867, %v4442
  %v4869 = vpop.permute.xlu0 %4868
  %4872 = vset.pattern.permute.xlu0 0
  %4873 = vperm.xlu0 %4872, %v4443
  %v4874 = vpop.permute.xlu0 %4873
  %4877 = vset.pattern.permute.xlu0 0
  %4878 = vperm.xlu0 %4877, %v4444
  %v4879 = vpop.permute.xlu0 %4878
  %4882 = vset.pattern.permute.xlu0 0
  %4883 = vperm.xlu0 %4882, %v4445
  %v4884 = vpop.permute.xlu0 %4883
  %4887 = vset.pattern.permute.xlu0 0
  %4888 = vperm.xlu0 %4887, %v4446
  %v4889 = vpop.permute.xlu0 %4888
  %4892 = vset.pattern.permute.xlu0 0
  %4893 = vperm.xlu0 %4892, %v4447
  %v4894 = vpop.permute.xlu0 %4893
  %4897 = vset.pattern.permute.xlu0 0
  %4898 = vperm.xlu0 %4897, %v4448
  %v4899 = vpop.permute.xlu0 %4898
  %4902 = vset.pattern.permute.xlu0 0
  %4903 = vperm.xlu0 %4902, %v4449
  %v4904 = vpop.permute.xlu0 %4903
  %4907 = vset.pattern.permute.xlu0 0
  %4908 = vperm.xlu0 %4907, %v4450
  %v4909 = vpop.permute.xlu0 %4908
  %4912 = vset.pattern.permute.xlu0 0
  %4913 = vperm.xlu0 %4912, %v4451
  %v4914 = vpop.permute.xlu0 %4913
  %4917 = vset.pattern.permute.xlu0 0
  %4918 = vperm.xlu0 %4917, %v4452
  %v4919 = vpop.permute.xlu0 %4918
  %4922 = vset.pattern.permute.xlu0 0
  %4923 = vperm.xlu0 %4922, %v4453
  %v4924 = vpop.permute.xlu0 %4923
  %4927 = vset.pattern.permute.xlu0 0
  %4928 = vperm.xlu0 %4927, %v4454
  %v4929 = vpop.permute.xlu0 %4928
  %4932 = vset.pattern.permute.xlu0 0
  %4933 = vperm.xlu0 %4932, %v4455
  %v4934 = vpop.permute.xlu0 %4933
  %4937 = vset.pattern.permute.xlu0 0
  %4938 = vperm.xlu0 %4937, %v4456
  %v4939 = vpop.permute.xlu0 %4938
  %4942 = vset.pattern.permute.xlu0 0
  %4943 = vperm.xlu0 %4942, %v4457
  %v4944 = vpop.permute.xlu0 %4943
  %4947 = vset.pattern.permute.xlu0 0
  %4948 = vperm.xlu0 %4947, %v4458
  %v4949 = vpop.permute.xlu0 %4948
  %4952 = vset.pattern.permute.xlu0 0
  %4953 = vperm.xlu0 %4952, %v4459
  %v4954 = vpop.permute.xlu0 %4953
  %4957 = vset.pattern.permute.xlu0 0
  %4958 = vperm.xlu0 %4957, %v4460
  %v4959 = vpop.permute.xlu0 %4958
  %4962 = vset.pattern.permute.xlu0 0
  %4963 = vperm.xlu0 %4962, %v4461
  %v4964 = vpop.permute.xlu0 %4963
  %4967 = vset.pattern.permute.xlu0 0
  %4968 = vperm.xlu0 %4967, %v4462
  %v4969 = vpop.permute.xlu0 %4968
  %4972 = vset.pattern.permute.xlu0 0
  %4973 = vperm.xlu0 %4972, %v4463
  %v4974 = vpop.permute.xlu0 %4973
  %4977 = vset.pattern.permute.xlu0 0
  %4978 = vperm.xlu0 %4977, %v4464
  %v4979 = vpop.permute.xlu0 %4978
  %4982 = vset.pattern.permute.xlu0 0
  %4983 = vperm.xlu0 %4982, %v4465
  %v4984 = vpop.permute.xlu0 %4983
  %4987 = vset.pattern.permute.xlu0 0
  %4988 = vperm.xlu0 %4987, %v4466
  %v4989 = vpop.permute.xlu0 %4988
  %4992 = vset.pattern.permute.xlu0 0
  %4993 = vperm.xlu0 %4992, %v4467
  %v4994 = vpop.permute.xlu0 %4993
  %4997 = vset.pattern.permute.xlu0 0
  %4998 = vperm.xlu0 %4997, %v4468
  %v4999 = vpop.permute.xlu0 %4998
  %5002 = vset.pattern.permute.xlu0 0
  %5003 = vperm.xlu0 %5002, %v4469
  %v5004 = vpop.permute.xlu0 %5003
  %5007 = vset.pattern.permute.xlu0 0
  %5008 = vperm.xlu0 %5007, %v4470
  %v5009 = vpop.permute.xlu0 %5008
  %5012 = vset.pattern.permute.xlu0 0
  %5013 = vperm.xlu0 %5012, %v4471
  %v5014 = vpop.permute.xlu0 %5013
  %5017 = vset.pattern.permute.xlu0 0
  %5018 = vperm.xlu0 %5017, %v4472
  %v5019 = vpop.permute.xlu0 %5018
  %5022 = vset.pattern.permute.xlu0 0
  %5023 = vperm.xlu0 %5022, %v4473
  %v5024 = vpop.permute.xlu0 %5023
  %5027 = vset.pattern.permute.xlu0 0
  %5028 = vperm.xlu0 %5027, %v4474
  %v5029 = vpop.permute.xlu0 %5028
  %5032 = vset.pattern.permute.xlu0 0
  %5033 = vperm.xlu0 %5032, %v4475
  %v5034 = vpop.permute.xlu0 %5033
  %5037 = vset.pattern.permute.xlu0 0
  %5038 = vperm.xlu0 %5037, %v4476
  %v5039 = vpop.permute.xlu0 %5038
  %5042 = vset.pattern.permute.xlu0 0
  %5043 = vperm.xlu0 %5042, %v4477
  %v5044 = vpop.permute.xlu0 %5043
  %5047 = vset.pattern.permute.xlu0 0
  %5048 = vperm.xlu0 %5047, %v4478
  %v5049 = vpop.permute.xlu0 %5048
  %5052 = vset.pattern.permute.xlu0 0
  %5053 = vperm.xlu0 %5052, %v4479
  %v5054 = vpop.permute.xlu0 %5053
  %5057 = vset.pattern.permute.xlu0 0
  %5058 = vperm.xlu0 %5057, %v4480
  %v5059 = vpop.permute.xlu0 %5058
  %5062 = vset.pattern.permute.xlu0 0
  %5063 = vperm.xlu0 %5062, %v4481
  %v5064 = vpop.permute.xlu0 %5063
  %5067 = vset.pattern.permute.xlu0 0
  %5068 = vperm.xlu0 %5067, %v4482
  %v5069 = vpop.permute.xlu0 %5068
  %5072 = vset.pattern.permute.xlu0 0
  %5073 = vperm.xlu0 %5072, %v4483
  %v5074 = vpop.permute.xlu0 %5073
  %5077 = vset.pattern.permute.xlu0 0
  %5078 = vperm.xlu0 %5077, %v4484
  %v5079 = vpop.permute.xlu0 %5078
  %5082 = vset.pattern.permute.xlu0 0
  %5083 = vperm.xlu0 %5082, %v4485
  %v5084 = vpop.permute.xlu0 %5083
  %5087 = vset.pattern.permute.xlu0 0
  %5088 = vperm.xlu0 %5087, %v4486
  %v5089 = vpop.permute.xlu0 %5088
  %5092 = vset.pattern.permute.xlu0 0
  %5093 = vperm.xlu0 %5092, %v4487
  %v5094 = vpop.permute.xlu0 %5093
  %5097 = vset.pattern.permute.xlu0 0
  %5098 = vperm.xlu0 %5097, %v4488
  %v5099 = vpop.permute.xlu0 %5098
  %5102 = vset.pattern.permute.xlu0 0
  %5103 = vperm.xlu0 %5102, %v4489
  %v5104 = vpop.permute.xlu0 %5103
  %5107 = vset.pattern.permute.xlu0 0
  %5108 = vperm.xlu0 %5107, %v4490
  %v5109 = vpop.permute.xlu0 %5108
  %5112 = vset.pattern.permute.xlu0 0
  %5113 = vperm.xlu0 %5112, %v4491
  %v5114 = vpop.permute.xlu0 %5113
  %5117 = vset.pattern.permute.xlu0 0
  %5118 = vperm.xlu0 %5117, %v4492
  %v5119 = vpop.permute.xlu0 %5118
  %5122 = vset.pattern.permute.xlu0 0
  %5123 = vperm.xlu0 %5122, %v4493
  %v5124 = vpop.permute.xlu0 %5123
  %5127 = vset.pattern.permute.xlu0 0
  %5128 = vperm.xlu0 %5127, %v4494
  %v5129 = vpop.permute.xlu0 %5128
  %5132 = vset.pattern.permute.xlu0 0
  %5133 = vperm.xlu0 %5132, %v4495
  %v5134 = vpop.permute.xlu0 %5133
  %v5264 = vunpack.c.l.b16 %v4238
  %v5265 = vunpack.c.l.b16 %v4239
  %v5266 = vunpack.c.l.b16 %v4240
  %v5267 = vunpack.c.l.b16 %v4241
  %v5268 = vunpack.c.l.b16 %v4242
  %v5269 = vunpack.c.l.b16 %v4243
  %v5270 = vunpack.c.l.b16 %v4244
  %v5271 = vunpack.c.l.b16 %v4245
  %v5272 = vunpack.c.l.b16 %v4246
  %v5273 = vunpack.c.l.b16 %v4247
  %v5274 = vunpack.c.l.b16 %v4248
  %v5275 = vunpack.c.l.b16 %v4249
  %v5276 = vunpack.c.l.b16 %v4250
  %v5277 = vunpack.c.l.b16 %v4251
  %v5278 = vunpack.c.l.b16 %v4252
  %v5279 = vunpack.c.l.b16 %v4253
  %v5280 = vunpack.c.l.b16 %v4254
  %v5281 = vunpack.c.l.b16 %v4255
  %v5282 = vunpack.c.l.b16 %v4256
  %v5283 = vunpack.c.l.b16 %v4257
  %v5284 = vunpack.c.l.b16 %v4258
  %v5285 = vunpack.c.l.b16 %v4259
  %v5286 = vunpack.c.l.b16 %v4260
  %v5287 = vunpack.c.l.b16 %v4261
  %v5288 = vunpack.c.l.b16 %v4262
  %v5289 = vunpack.c.l.b16 %v4263
  %v5290 = vunpack.c.l.b16 %v4264
  %v5291 = vunpack.c.l.b16 %v4265
  %v5292 = vunpack.c.l.b16 %v4266
  %v5293 = vunpack.c.l.b16 %v4267
  %v5294 = vunpack.c.l.b16 %v4268
  %v5295 = vunpack.c.l.b16 %v4269
  %v5296 = vunpack.c.l.b16 %v4270
  %v5297 = vunpack.c.l.b16 %v4271
  %v5298 = vunpack.c.l.b16 %v4272
  %v5299 = vunpack.c.l.b16 %v4273
  %v5300 = vunpack.c.l.b16 %v4274
  %v5301 = vunpack.c.l.b16 %v4275
  %v5302 = vunpack.c.l.b16 %v4276
  %v5303 = vunpack.c.l.b16 %v4277
  %v5304 = vunpack.c.l.b16 %v4278
  %v5305 = vunpack.c.l.b16 %v4279
  %v5306 = vunpack.c.l.b16 %v4280
  %v5307 = vunpack.c.l.b16 %v4281
  %v5308 = vunpack.c.l.b16 %v4282
  %v5309 = vunpack.c.l.b16 %v4283
  %v5310 = vunpack.c.l.b16 %v4284
  %v5311 = vunpack.c.l.b16 %v4285
  %v5312 = vunpack.c.l.b16 %v4286
  %v5313 = vunpack.c.l.b16 %v4287
  %v5314 = vunpack.c.l.b16 %v4288
  %v5315 = vunpack.c.l.b16 %v4289
  %v5316 = vunpack.c.l.b16 %v4290
  %v5317 = vunpack.c.l.b16 %v4291
  %v5318 = vunpack.c.l.b16 %v4292
  %v5319 = vunpack.c.l.b16 %v4293
  %v5320 = vunpack.c.l.b16 %v4294
  %v5321 = vunpack.c.l.b16 %v4295
  %v5322 = vunpack.c.l.b16 %v4296
  %v5323 = vunpack.c.l.b16 %v4297
  %v5324 = vunpack.c.l.b16 %v4298
  %v5325 = vunpack.c.l.b16 %v4299
  %v5326 = vunpack.c.l.b16 %v4300
  %v5327 = vunpack.c.l.b16 %v4301
  %v5328 = vunpack.c.l.b16 %v4302
  %v5329 = vunpack.c.l.b16 %v4303
  %v5330 = vunpack.c.l.b16 %v4304
  %v5331 = vunpack.c.l.b16 %v4305
  %v5332 = vunpack.c.l.b16 %v4306
  %v5333 = vunpack.c.l.b16 %v4307
  %v5334 = vunpack.c.l.b16 %v4308
  %v5335 = vunpack.c.l.b16 %v4309
  %v5336 = vunpack.c.l.b16 %v4310
  %v5337 = vunpack.c.l.b16 %v4311
  %v5338 = vunpack.c.l.b16 %v4312
  %v5339 = vunpack.c.l.b16 %v4313
  %v5340 = vunpack.c.l.b16 %v4314
  %v5341 = vunpack.c.l.b16 %v4315
  %v5342 = vunpack.c.l.b16 %v4316
  %v5343 = vunpack.c.l.b16 %v4317
  %v5344 = vunpack.c.l.b16 %v4318
  %v5345 = vunpack.c.l.b16 %v4319
  %v5346 = vunpack.c.l.b16 %v4320
  %v5347 = vunpack.c.l.b16 %v4321
  %v5348 = vunpack.c.l.b16 %v4322
  %v5349 = vunpack.c.l.b16 %v4323
  %v5350 = vunpack.c.l.b16 %v4324
  %v5351 = vunpack.c.l.b16 %v4325
  %v5352 = vunpack.c.l.b16 %v4326
  %v5353 = vunpack.c.l.b16 %v4327
  %v5354 = vunpack.c.l.b16 %v4328
  %v5355 = vunpack.c.l.b16 %v4329
  %v5356 = vunpack.c.l.b16 %v4330
  %v5357 = vunpack.c.l.b16 %v4331
  %v5358 = vunpack.c.l.b16 %v4332
  %v5359 = vunpack.c.l.b16 %v4333
  %v5360 = vunpack.c.l.b16 %v4334
  %v5361 = vunpack.c.l.b16 %v4335
  %v5362 = vunpack.c.l.b16 %v4336
  %v5363 = vunpack.c.l.b16 %v4337
  %v5364 = vunpack.c.l.b16 %v4338
  %v5365 = vunpack.c.l.b16 %v4339
  %v5366 = vunpack.c.l.b16 %v4340
  %v5367 = vunpack.c.l.b16 %v4341
  %v5368 = vunpack.c.l.b16 %v4342
  %v5369 = vunpack.c.l.b16 %v4343
  %v5370 = vunpack.c.l.b16 %v4344
  %v5371 = vunpack.c.l.b16 %v4345
  %v5372 = vunpack.c.l.b16 %v4346
  %v5373 = vunpack.c.l.b16 %v4347
  %v5374 = vunpack.c.l.b16 %v4348
  %v5375 = vunpack.c.l.b16 %v4349
  %v5376 = vunpack.c.l.b16 %v4350
  %v5377 = vunpack.c.l.b16 %v4351
  %v5378 = vunpack.c.l.b16 %v4352
  %v5379 = vunpack.c.l.b16 %v4353
  %v5380 = vunpack.c.l.b16 %v4354
  %v5381 = vunpack.c.l.b16 %v4355
  %v5382 = vunpack.c.l.b16 %v4356
  %v5383 = vunpack.c.l.b16 %v4357
  %v5384 = vunpack.c.l.b16 %v4358
  %v5385 = vunpack.c.l.b16 %v4359
  %v5386 = vunpack.c.l.b16 %v4360
  %v5387 = vunpack.c.l.b16 %v4361
  %v5388 = vunpack.c.l.b16 %v4362
  %v5389 = vunpack.c.l.b16 %v4363
  %v5390 = vunpack.c.l.b16 %v4364
  %v5391 = vunpack.c.l.b16 %v4365
  %v5392 = vpack.c.b16 %v5265, %v5264
  %v5393 = vpack.c.b16 %v5267, %v5266
  %v5394 = vpack.c.b16 %v5269, %v5268
  %v5395 = vpack.c.b16 %v5271, %v5270
  %v5396 = vpack.c.b16 %v5273, %v5272
  %v5397 = vpack.c.b16 %v5275, %v5274
  %v5398 = vpack.c.b16 %v5277, %v5276
  %v5399 = vpack.c.b16 %v5279, %v5278
  %v5400 = vpack.c.b16 %v5281, %v5280
  %v5401 = vpack.c.b16 %v5283, %v5282
  %v5402 = vpack.c.b16 %v5285, %v5284
  %v5403 = vpack.c.b16 %v5287, %v5286
  %v5404 = vpack.c.b16 %v5289, %v5288
  %v5405 = vpack.c.b16 %v5291, %v5290
  %v5406 = vpack.c.b16 %v5293, %v5292
  %v5407 = vpack.c.b16 %v5295, %v5294
  %v5408 = vpack.c.b16 %v5297, %v5296
  %v5409 = vpack.c.b16 %v5299, %v5298
  %v5410 = vpack.c.b16 %v5301, %v5300
  %v5411 = vpack.c.b16 %v5303, %v5302
  %v5412 = vpack.c.b16 %v5305, %v5304
  %v5413 = vpack.c.b16 %v5307, %v5306
  %v5414 = vpack.c.b16 %v5309, %v5308
  %v5415 = vpack.c.b16 %v5311, %v5310
  %v5416 = vpack.c.b16 %v5313, %v5312
  %v5417 = vpack.c.b16 %v5315, %v5314
  %v5418 = vpack.c.b16 %v5317, %v5316
  %v5419 = vpack.c.b16 %v5319, %v5318
  %v5420 = vpack.c.b16 %v5321, %v5320
  %v5421 = vpack.c.b16 %v5323, %v5322
  %v5422 = vpack.c.b16 %v5325, %v5324
  %v5423 = vpack.c.b16 %v5327, %v5326
  %v5424 = vpack.c.b16 %v5329, %v5328
  %v5425 = vpack.c.b16 %v5331, %v5330
  %v5426 = vpack.c.b16 %v5333, %v5332
  %v5427 = vpack.c.b16 %v5335, %v5334
  %v5428 = vpack.c.b16 %v5337, %v5336
  %v5429 = vpack.c.b16 %v5339, %v5338
  %v5430 = vpack.c.b16 %v5341, %v5340
  %v5431 = vpack.c.b16 %v5343, %v5342
  %v5432 = vpack.c.b16 %v5345, %v5344
  %v5433 = vpack.c.b16 %v5347, %v5346
  %v5434 = vpack.c.b16 %v5349, %v5348
  %v5435 = vpack.c.b16 %v5351, %v5350
  %v5436 = vpack.c.b16 %v5353, %v5352
  %v5437 = vpack.c.b16 %v5355, %v5354
  %v5438 = vpack.c.b16 %v5357, %v5356
  %v5439 = vpack.c.b16 %v5359, %v5358
  %v5440 = vpack.c.b16 %v5361, %v5360
  %v5441 = vpack.c.b16 %v5363, %v5362
  %v5442 = vpack.c.b16 %v5365, %v5364
  %v5443 = vpack.c.b16 %v5367, %v5366
  %v5444 = vpack.c.b16 %v5369, %v5368
  %v5445 = vpack.c.b16 %v5371, %v5370
  %v5446 = vpack.c.b16 %v5373, %v5372
  %v5447 = vpack.c.b16 %v5375, %v5374
  %v5448 = vpack.c.b16 %v5377, %v5376
  %v5449 = vpack.c.b16 %v5379, %v5378
  %v5450 = vpack.c.b16 %v5381, %v5380
  %v5451 = vpack.c.b16 %v5383, %v5382
  %v5452 = vpack.c.b16 %v5385, %v5384
  %v5453 = vpack.c.b16 %v5387, %v5386
  %v5454 = vpack.c.b16 %v5389, %v5388
  %v5455 = vpack.c.b16 %v5391, %v5390
  %v5457 = vsel %vm3425, %v5392, 0
  %v5460 = vsel %vm3425, %v5393, 0
  %v5463 = vsel %vm3425, %v5394, 0
  %v5466 = vsel %vm3425, %v5395, 0
  %v5469 = vsel %vm3425, %v5396, 0
  %v5472 = vsel %vm3425, %v5397, 0
  %v5475 = vsel %vm3425, %v5398, 0
  %v5478 = vsel %vm3425, %v5399, 0
  %v5481 = vsel %vm3425, %v5400, 0
  %v5484 = vsel %vm3425, %v5401, 0
  %v5487 = vsel %vm3425, %v5402, 0
  %v5490 = vsel %vm3425, %v5403, 0
  %v5493 = vsel %vm3425, %v5404, 0
  %v5496 = vsel %vm3425, %v5405, 0
  %v5499 = vsel %vm3425, %v5406, 0
  %v5502 = vsel %vm3425, %v5407, 0
  %v5505 = vsel %vm3425, %v5408, 0
  %v5508 = vsel %vm3425, %v5409, 0
  %v5511 = vsel %vm3425, %v5410, 0
  %v5514 = vsel %vm3425, %v5411, 0
  %v5517 = vsel %vm3425, %v5412, 0
  %v5520 = vsel %vm3425, %v5413, 0
  %v5523 = vsel %vm3425, %v5414, 0
  %v5526 = vsel %vm3425, %v5415, 0
  %v5529 = vsel %vm3425, %v5416, 0
  %v5532 = vsel %vm3425, %v5417, 0
  %v5535 = vsel %vm3425, %v5418, 0
  %v5538 = vsel %vm3425, %v5419, 0
  %v5541 = vsel %vm3425, %v5420, 0
  %v5544 = vsel %vm3425, %v5421, 0
  %v5547 = vsel %vm3425, %v5422, 0
  %v5550 = vsel %vm3425, %v5423, 0
  %v5553 = vsel %vm3425, %v5424, 0
  %v5556 = vsel %vm3425, %v5425, 0
  %v5559 = vsel %vm3425, %v5426, 0
  %v5562 = vsel %vm3425, %v5427, 0
  %v5565 = vsel %vm3425, %v5428, 0
  %v5568 = vsel %vm3425, %v5429, 0
  %v5571 = vsel %vm3425, %v5430, 0
  %v5574 = vsel %vm3425, %v5431, 0
  %v5577 = vsel %vm3425, %v5432, 0
  %v5580 = vsel %vm3425, %v5433, 0
  %v5583 = vsel %vm3425, %v5434, 0
  %v5586 = vsel %vm3425, %v5435, 0
  %v5589 = vsel %vm3425, %v5436, 0
  %v5592 = vsel %vm3425, %v5437, 0
  %v5595 = vsel %vm3425, %v5438, 0
  %v5598 = vsel %vm3425, %v5439, 0
  %v5601 = vsel %vm3425, %v5440, 0
  %v5604 = vsel %vm3425, %v5441, 0
  %v5607 = vsel %vm3425, %v5442, 0
  %v5610 = vsel %vm3425, %v5443, 0
  %v5613 = vsel %vm3425, %v5444, 0
  %v5616 = vsel %vm3425, %v5445, 0
  %v5619 = vsel %vm3425, %v5446, 0
  %v5622 = vsel %vm3425, %v5447, 0
  %v5625 = vsel %vm3425, %v5448, 0
  %v5628 = vsel %vm3425, %v5449, 0
  %v5631 = vsel %vm3425, %v5450, 0
  %v5634 = vsel %vm3425, %v5451, 0
  %v5637 = vsel %vm3425, %v5452, 0
  %v5640 = vsel %vm3425, %v5453, 0
  %v5643 = vsel %vm3425, %v5454, 0
  %v5646 = vsel %vm3425, %v5455, 0
  %5648 = vmatprep.subr.bf16.mxu0 0
  %5649 = vmatpush1.bf16.msra.mxu0 0
  %5650 = vmatprep.subr.bf16.mxu0 0
  %5651 = vmatpush1.bf16.msra.mxu0 0
  %5652 = vmatprep.subr.bf16.mxu0 0
  %5653 = vmatpush1.bf16.msra.mxu0 0
  %5654 = vmatprep.subr.bf16.mxu0 0
  %5655 = vmatpush1.bf16.msra.mxu0 0
  %5656 = vmatprep.subr.bf16.mxu0 0
  %5657 = vmatpush1.bf16.msra.mxu0 0
  %5658 = vmatprep.subr.bf16.mxu0 0
  %5659 = vmatpush1.bf16.msra.mxu0 0
  %5660 = vmatprep.subr.bf16.mxu0 0
  %5661 = vmatpush1.bf16.msra.mxu0 %v4367
  %5662 = vmatprep.subr.bf16.mxu0 0
  %5663 = vmatpush1.bf16.msra.mxu0 %v4366
  %5664 = vmatprep.subr.bf16.mxu0 0
  %5665 = vmatpush2.bf16.msra.mxu0 0
  %5666 = vmatprep.subr.bf16.mxu0 0
  %5667 = vmatpush2.bf16.msra.mxu0 0
  %5668 = vmatprep.subr.bf16.mxu0 0
  %5669 = vmatpush2.bf16.msra.mxu0 0
  %5670 = vmatprep.subr.bf16.mxu0 0
  %5671 = vmatpush2.bf16.msra.mxu0 0
  %5672 = vmatprep.subr.bf16.mxu0 0
  %5673 = vmatpush2.bf16.msra.mxu0 0
  %5674 = vmatprep.subr.bf16.mxu0 0
  %5675 = vmatpush2.bf16.msra.mxu0 0
  %5676 = vmatprep.subr.bf16.mxu0 0
  %5677 = vmatpush2.bf16.msra.mxu0 0
  %5678 = vmatprep.subr.bf16.mxu0 0
  %5679 = vmatpush2.bf16.msra.mxu0 0
  %5680 = vmatprep.mubr.bf16.mxu0 0
  %5681 = vmatmul.mubr.bf16.gmra.mxu0 %v5457
  %v5682 = vpop.f32.mrf.mxu0
  %v5683 = vadd.f32 %v4499, %v5682
  %v5684 = vpop.f32.mrf.mxu0
  %v5685 = vpop.f32.mrf.mxu0
  %v5686 = vadd.f32 %v4504, %v5685
  %v5687 = vpop.f32.mrf.mxu0
  %5688 = vmatprep.mubr.bf16.mxu0 0
  %5689 = vmatmul.mubr.bf16.gmra.mxu0 %v5460
  %v5690 = vpop.f32.mrf.mxu0
  %v5691 = vadd.f32 %v4509, %v5690
  %v5692 = vpop.f32.mrf.mxu0
  %v5693 = vpop.f32.mrf.mxu0
  %v5694 = vadd.f32 %v4514, %v5693
  %v5695 = vpop.f32.mrf.mxu0
  %5696 = vmatprep.mubr.bf16.mxu0 0
  %5697 = vmatmul.mubr.bf16.gmra.mxu0 %v5463
  %v5698 = vpop.f32.mrf.mxu0
  %v5699 = vadd.f32 %v4519, %v5698
  %v5700 = vpop.f32.mrf.mxu0
  %v5701 = vpop.f32.mrf.mxu0
  %v5702 = vadd.f32 %v4524, %v5701
  %v5703 = vpop.f32.mrf.mxu0
  %5704 = vmatprep.mubr.bf16.mxu0 0
  %5705 = vmatmul.mubr.bf16.gmra.mxu0 %v5466
  %v5706 = vpop.f32.mrf.mxu0
  %v5707 = vadd.f32 %v4529, %v5706
  %v5708 = vpop.f32.mrf.mxu0
  %v5709 = vpop.f32.mrf.mxu0
  %v5710 = vadd.f32 %v4534, %v5709
  %v5711 = vpop.f32.mrf.mxu0
  %5712 = vmatprep.mubr.bf16.mxu0 0
  %5713 = vmatmul.mubr.bf16.gmra.mxu0 %v5469
  %v5714 = vpop.f32.mrf.mxu0
  %v5715 = vadd.f32 %v4539, %v5714
  %v5716 = vpop.f32.mrf.mxu0
  %v5717 = vpop.f32.mrf.mxu0
  %v5718 = vadd.f32 %v4544, %v5717
  %v5719 = vpop.f32.mrf.mxu0
  %5720 = vmatprep.mubr.bf16.mxu0 0
  %5721 = vmatmul.mubr.bf16.gmra.mxu0 %v5472
  %v5722 = vpop.f32.mrf.mxu0
  %v5723 = vadd.f32 %v4549, %v5722
  %v5724 = vpop.f32.mrf.mxu0
  %v5725 = vpop.f32.mrf.mxu0
  %v5726 = vadd.f32 %v4554, %v5725
  %v5727 = vpop.f32.mrf.mxu0
  %5728 = vmatprep.mubr.bf16.mxu0 0
  %5729 = vmatmul.mubr.bf16.gmra.mxu0 %v5475
  %v5730 = vpop.f32.mrf.mxu0
  %v5731 = vadd.f32 %v4559, %v5730
  %v5732 = vpop.f32.mrf.mxu0
  %v5733 = vpop.f32.mrf.mxu0
  %v5734 = vadd.f32 %v4564, %v5733
  %v5735 = vpop.f32.mrf.mxu0
  %5736 = vmatprep.mubr.bf16.mxu0 0
  %5737 = vmatmul.mubr.bf16.gmra.mxu0 %v5478
  %v5738 = vpop.f32.mrf.mxu0
  %v5739 = vadd.f32 %v4569, %v5738
  %v5740 = vpop.f32.mrf.mxu0
  %v5741 = vpop.f32.mrf.mxu0
  %v5742 = vadd.f32 %v4574, %v5741
  %v5743 = vpop.f32.mrf.mxu0
  %5744 = vmatprep.mubr.bf16.mxu0 0
  %5745 = vmatmul.mubr.bf16.gmra.mxu0 %v5481
  %v5746 = vpop.f32.mrf.mxu0
  %v5747 = vadd.f32 %v4579, %v5746
  %v5748 = vpop.f32.mrf.mxu0
  %v5749 = vpop.f32.mrf.mxu0
  %v5750 = vadd.f32 %v4584, %v5749
  %v5751 = vpop.f32.mrf.mxu0
  %5752 = vmatprep.mubr.bf16.mxu0 0
  %5753 = vmatmul.mubr.bf16.gmra.mxu0 %v5484
  %v5754 = vpop.f32.mrf.mxu0
  %v5755 = vadd.f32 %v4589, %v5754
  %v5756 = vpop.f32.mrf.mxu0
  %v5757 = vpop.f32.mrf.mxu0
  %v5758 = vadd.f32 %v4594, %v5757
  %v5759 = vpop.f32.mrf.mxu0
  %5760 = vmatprep.mubr.bf16.mxu0 0
  %5761 = vmatmul.mubr.bf16.gmra.mxu0 %v5487
  %v5762 = vpop.f32.mrf.mxu0
  %v5763 = vadd.f32 %v4599, %v5762
  %v5764 = vpop.f32.mrf.mxu0
  %v5765 = vpop.f32.mrf.mxu0
  %v5766 = vadd.f32 %v4604, %v5765
  %v5767 = vpop.f32.mrf.mxu0
  %5768 = vmatprep.mubr.bf16.mxu0 0
  %5769 = vmatmul.mubr.bf16.gmra.mxu0 %v5490
  %v5770 = vpop.f32.mrf.mxu0
  %v5771 = vadd.f32 %v4609, %v5770
  %v5772 = vpop.f32.mrf.mxu0
  %v5773 = vpop.f32.mrf.mxu0
  %v5774 = vadd.f32 %v4614, %v5773
  %v5775 = vpop.f32.mrf.mxu0
  %5776 = vmatprep.mubr.bf16.mxu0 0
  %5777 = vmatmul.mubr.bf16.gmra.mxu0 %v5493
  %v5778 = vpop.f32.mrf.mxu0
  %v5779 = vadd.f32 %v4619, %v5778
  %v5780 = vpop.f32.mrf.mxu0
  %v5781 = vpop.f32.mrf.mxu0
  %v5782 = vadd.f32 %v4624, %v5781
  %v5783 = vpop.f32.mrf.mxu0
  %5784 = vmatprep.mubr.bf16.mxu0 0
  %5785 = vmatmul.mubr.bf16.gmra.mxu0 %v5496
  %v5786 = vpop.f32.mrf.mxu0
  %v5787 = vadd.f32 %v4629, %v5786
  %v5788 = vpop.f32.mrf.mxu0
  %v5789 = vpop.f32.mrf.mxu0
  %v5790 = vadd.f32 %v4634, %v5789
  %v5791 = vpop.f32.mrf.mxu0
  %5792 = vmatprep.mubr.bf16.mxu0 0
  %5793 = vmatmul.mubr.bf16.gmra.mxu0 %v5499
  %v5794 = vpop.f32.mrf.mxu0
  %v5795 = vadd.f32 %v4639, %v5794
  %v5796 = vpop.f32.mrf.mxu0
  %v5797 = vpop.f32.mrf.mxu0
  %v5798 = vadd.f32 %v4644, %v5797
  %v5799 = vpop.f32.mrf.mxu0
  %5800 = vmatprep.mubr.bf16.mxu0 0
  %5801 = vmatmul.mubr.bf16.gmra.mxu0 %v5502
  %v5802 = vpop.f32.mrf.mxu0
  %v5803 = vadd.f32 %v4649, %v5802
  %v5804 = vpop.f32.mrf.mxu0
  %v5805 = vpop.f32.mrf.mxu0
  %v5806 = vadd.f32 %v4654, %v5805
  %v5807 = vpop.f32.mrf.mxu0
  %5808 = vmatprep.mubr.bf16.mxu0 0
  %5809 = vmatmul.mubr.bf16.gmra.mxu0 %v5505
  %v5810 = vpop.f32.mrf.mxu0
  %v5811 = vadd.f32 %v4659, %v5810
  %v5812 = vpop.f32.mrf.mxu0
  %v5813 = vpop.f32.mrf.mxu0
  %v5814 = vadd.f32 %v4664, %v5813
  %v5815 = vpop.f32.mrf.mxu0
  %5816 = vmatprep.mubr.bf16.mxu0 0
  %5817 = vmatmul.mubr.bf16.gmra.mxu0 %v5508
  %v5818 = vpop.f32.mrf.mxu0
  %v5819 = vadd.f32 %v4669, %v5818
  %v5820 = vpop.f32.mrf.mxu0
  %v5821 = vpop.f32.mrf.mxu0
  %v5822 = vadd.f32 %v4674, %v5821
  %v5823 = vpop.f32.mrf.mxu0
  %5824 = vmatprep.mubr.bf16.mxu0 0
  %5825 = vmatmul.mubr.bf16.gmra.mxu0 %v5511
  %v5826 = vpop.f32.mrf.mxu0
  %v5827 = vadd.f32 %v4679, %v5826
  %v5828 = vpop.f32.mrf.mxu0
  %v5829 = vpop.f32.mrf.mxu0
  %v5830 = vadd.f32 %v4684, %v5829
  %v5831 = vpop.f32.mrf.mxu0
  %5832 = vmatprep.mubr.bf16.mxu0 0
  %5833 = vmatmul.mubr.bf16.gmra.mxu0 %v5514
  %v5834 = vpop.f32.mrf.mxu0
  %v5835 = vadd.f32 %v4689, %v5834
  %v5836 = vpop.f32.mrf.mxu0
  %v5837 = vpop.f32.mrf.mxu0
  %v5838 = vadd.f32 %v4694, %v5837
  %v5839 = vpop.f32.mrf.mxu0
  %5840 = vmatprep.mubr.bf16.mxu0 0
  %5841 = vmatmul.mubr.bf16.gmra.mxu0 %v5517
  %v5842 = vpop.f32.mrf.mxu0
  %v5843 = vadd.f32 %v4699, %v5842
  %v5844 = vpop.f32.mrf.mxu0
  %v5845 = vpop.f32.mrf.mxu0
  %v5846 = vadd.f32 %v4704, %v5845
  %v5847 = vpop.f32.mrf.mxu0
  %5848 = vmatprep.mubr.bf16.mxu0 0
  %5849 = vmatmul.mubr.bf16.gmra.mxu0 %v5520
  %v5850 = vpop.f32.mrf.mxu0
  %v5851 = vadd.f32 %v4709, %v5850
  %v5852 = vpop.f32.mrf.mxu0
  %v5853 = vpop.f32.mrf.mxu0
  %v5854 = vadd.f32 %v4714, %v5853
  %v5855 = vpop.f32.mrf.mxu0
  %5856 = vmatprep.mubr.bf16.mxu0 0
  %5857 = vmatmul.mubr.bf16.gmra.mxu0 %v5523
  %v5858 = vpop.f32.mrf.mxu0
  %v5859 = vadd.f32 %v4719, %v5858
  %v5860 = vpop.f32.mrf.mxu0
  %v5861 = vpop.f32.mrf.mxu0
  %v5862 = vadd.f32 %v4724, %v5861
  %v5863 = vpop.f32.mrf.mxu0
  %5864 = vmatprep.mubr.bf16.mxu0 0
  %5865 = vmatmul.mubr.bf16.gmra.mxu0 %v5526
  %v5866 = vpop.f32.mrf.mxu0
  %v5867 = vadd.f32 %v4729, %v5866
  %v5868 = vpop.f32.mrf.mxu0
  %v5869 = vpop.f32.mrf.mxu0
  %v5870 = vadd.f32 %v4734, %v5869
  %v5871 = vpop.f32.mrf.mxu0
  %5872 = vmatprep.mubr.bf16.mxu0 0
  %5873 = vmatmul.mubr.bf16.gmra.mxu0 %v5529
  %v5874 = vpop.f32.mrf.mxu0
  %v5875 = vadd.f32 %v4739, %v5874
  %v5876 = vpop.f32.mrf.mxu0
  %v5877 = vpop.f32.mrf.mxu0
  %v5878 = vadd.f32 %v4744, %v5877
  %v5879 = vpop.f32.mrf.mxu0
  %5880 = vmatprep.mubr.bf16.mxu0 0
  %5881 = vmatmul.mubr.bf16.gmra.mxu0 %v5532
  %v5882 = vpop.f32.mrf.mxu0
  %v5883 = vadd.f32 %v4749, %v5882
  %v5884 = vpop.f32.mrf.mxu0
  %v5885 = vpop.f32.mrf.mxu0
  %v5886 = vadd.f32 %v4754, %v5885
  %v5887 = vpop.f32.mrf.mxu0
  %5888 = vmatprep.mubr.bf16.mxu0 0
  %5889 = vmatmul.mubr.bf16.gmra.mxu0 %v5535
  %v5890 = vpop.f32.mrf.mxu0
  %v5891 = vadd.f32 %v4759, %v5890
  %v5892 = vpop.f32.mrf.mxu0
  %v5893 = vpop.f32.mrf.mxu0
  %v5894 = vadd.f32 %v4764, %v5893
  %v5895 = vpop.f32.mrf.mxu0
  %5896 = vmatprep.mubr.bf16.mxu0 0
  %5897 = vmatmul.mubr.bf16.gmra.mxu0 %v5538
  %v5898 = vpop.f32.mrf.mxu0
  %v5899 = vadd.f32 %v4769, %v5898
  %v5900 = vpop.f32.mrf.mxu0
  %v5901 = vpop.f32.mrf.mxu0
  %v5902 = vadd.f32 %v4774, %v5901
  %v5903 = vpop.f32.mrf.mxu0
  %5904 = vmatprep.mubr.bf16.mxu0 0
  %5905 = vmatmul.mubr.bf16.gmra.mxu0 %v5541
  %v5906 = vpop.f32.mrf.mxu0
  %v5907 = vadd.f32 %v4779, %v5906
  %v5908 = vpop.f32.mrf.mxu0
  %v5909 = vpop.f32.mrf.mxu0
  %v5910 = vadd.f32 %v4784, %v5909
  %v5911 = vpop.f32.mrf.mxu0
  %5912 = vmatprep.mubr.bf16.mxu0 0
  %5913 = vmatmul.mubr.bf16.gmra.mxu0 %v5544
  %v5914 = vpop.f32.mrf.mxu0
  %v5915 = vadd.f32 %v4789, %v5914
  %v5916 = vpop.f32.mrf.mxu0
  %v5917 = vpop.f32.mrf.mxu0
  %v5918 = vadd.f32 %v4794, %v5917
  %v5919 = vpop.f32.mrf.mxu0
  %5920 = vmatprep.mubr.bf16.mxu0 0
  %5921 = vmatmul.mubr.bf16.gmra.mxu0 %v5547
  %v5922 = vpop.f32.mrf.mxu0
  %v5923 = vadd.f32 %v4799, %v5922
  %v5924 = vpop.f32.mrf.mxu0
  %v5925 = vpop.f32.mrf.mxu0
  %v5926 = vadd.f32 %v4804, %v5925
  %v5927 = vpop.f32.mrf.mxu0
  %5928 = vmatprep.mubr.bf16.mxu0 0
  %5929 = vmatmul.mubr.bf16.gmra.mxu0 %v5550
  %v5930 = vpop.f32.mrf.mxu0
  %v5931 = vadd.f32 %v4809, %v5930
  %v5932 = vpop.f32.mrf.mxu0
  %v5933 = vpop.f32.mrf.mxu0
  %v5934 = vadd.f32 %v4814, %v5933
  %v5935 = vpop.f32.mrf.mxu0
  %5936 = vmatprep.mubr.bf16.mxu0 0
  %5937 = vmatmul.mubr.bf16.gmra.mxu0 %v5553
  %v5938 = vpop.f32.mrf.mxu0
  %v5939 = vadd.f32 %v4819, %v5938
  %v5940 = vpop.f32.mrf.mxu0
  %v5941 = vpop.f32.mrf.mxu0
  %v5942 = vadd.f32 %v4824, %v5941
  %v5943 = vpop.f32.mrf.mxu0
  %5944 = vmatprep.mubr.bf16.mxu0 0
  %5945 = vmatmul.mubr.bf16.gmra.mxu0 %v5556
  %v5946 = vpop.f32.mrf.mxu0
  %v5947 = vadd.f32 %v4829, %v5946
  %v5948 = vpop.f32.mrf.mxu0
  %v5949 = vpop.f32.mrf.mxu0
  %v5950 = vadd.f32 %v4834, %v5949
  %v5951 = vpop.f32.mrf.mxu0
  %5952 = vmatprep.mubr.bf16.mxu0 0
  %5953 = vmatmul.mubr.bf16.gmra.mxu0 %v5559
  %v5954 = vpop.f32.mrf.mxu0
  %v5955 = vadd.f32 %v4839, %v5954
  %v5956 = vpop.f32.mrf.mxu0
  %v5957 = vpop.f32.mrf.mxu0
  %v5958 = vadd.f32 %v4844, %v5957
  %v5959 = vpop.f32.mrf.mxu0
  %5960 = vmatprep.mubr.bf16.mxu0 0
  %5961 = vmatmul.mubr.bf16.gmra.mxu0 %v5562
  %v5962 = vpop.f32.mrf.mxu0
  %v5963 = vadd.f32 %v4849, %v5962
  %v5964 = vpop.f32.mrf.mxu0
  %v5965 = vpop.f32.mrf.mxu0
  %v5966 = vadd.f32 %v4854, %v5965
  %v5967 = vpop.f32.mrf.mxu0
  %5968 = vmatprep.mubr.bf16.mxu0 0
  %5969 = vmatmul.mubr.bf16.gmra.mxu0 %v5565
  %v5970 = vpop.f32.mrf.mxu0
  %v5971 = vadd.f32 %v4859, %v5970
  %v5972 = vpop.f32.mrf.mxu0
  %v5973 = vpop.f32.mrf.mxu0
  %v5974 = vadd.f32 %v4864, %v5973
  %v5975 = vpop.f32.mrf.mxu0
  %5976 = vmatprep.mubr.bf16.mxu0 0
  %5977 = vmatmul.mubr.bf16.gmra.mxu0 %v5568
  %v5978 = vpop.f32.mrf.mxu0
  %v5979 = vadd.f32 %v4869, %v5978
  %v5980 = vpop.f32.mrf.mxu0
  %v5981 = vpop.f32.mrf.mxu0
  %v5982 = vadd.f32 %v4874, %v5981
  %v5983 = vpop.f32.mrf.mxu0
  %5984 = vmatprep.mubr.bf16.mxu0 0
  %5985 = vmatmul.mubr.bf16.gmra.mxu0 %v5571
  %v5986 = vpop.f32.mrf.mxu0
  %v5987 = vadd.f32 %v4879, %v5986
  %v5988 = vpop.f32.mrf.mxu0
  %v5989 = vpop.f32.mrf.mxu0
  %v5990 = vadd.f32 %v4884, %v5989
  %v5991 = vpop.f32.mrf.mxu0
  %5992 = vmatprep.mubr.bf16.mxu0 0
  %5993 = vmatmul.mubr.bf16.gmra.mxu0 %v5574
  %v5994 = vpop.f32.mrf.mxu0
  %v5995 = vadd.f32 %v4889, %v5994
  %v5996 = vpop.f32.mrf.mxu0
  %v5997 = vpop.f32.mrf.mxu0
  %v5998 = vadd.f32 %v4894, %v5997
  %v5999 = vpop.f32.mrf.mxu0
  %6000 = vmatprep.mubr.bf16.mxu0 0
  %6001 = vmatmul.mubr.bf16.gmra.mxu0 %v5577
  %v6002 = vpop.f32.mrf.mxu0
  %v6003 = vadd.f32 %v4899, %v6002
  %v6004 = vpop.f32.mrf.mxu0
  %v6005 = vpop.f32.mrf.mxu0
  %v6006 = vadd.f32 %v4904, %v6005
  %v6007 = vpop.f32.mrf.mxu0
  %6008 = vmatprep.mubr.bf16.mxu0 0
  %6009 = vmatmul.mubr.bf16.gmra.mxu0 %v5580
  %v6010 = vpop.f32.mrf.mxu0
  %v6011 = vadd.f32 %v4909, %v6010
  %v6012 = vpop.f32.mrf.mxu0
  %v6013 = vpop.f32.mrf.mxu0
  %v6014 = vadd.f32 %v4914, %v6013
  %v6015 = vpop.f32.mrf.mxu0
  %6016 = vmatprep.mubr.bf16.mxu0 0
  %6017 = vmatmul.mubr.bf16.gmra.mxu0 %v5583
  %v6018 = vpop.f32.mrf.mxu0
  %v6019 = vadd.f32 %v4919, %v6018
  %v6020 = vpop.f32.mrf.mxu0
  %v6021 = vpop.f32.mrf.mxu0
  %v6022 = vadd.f32 %v4924, %v6021
  %v6023 = vpop.f32.mrf.mxu0
  %6024 = vmatprep.mubr.bf16.mxu0 0
  %6025 = vmatmul.mubr.bf16.gmra.mxu0 %v5586
  %v6026 = vpop.f32.mrf.mxu0
  %v6027 = vadd.f32 %v4929, %v6026
  %v6028 = vpop.f32.mrf.mxu0
  %v6029 = vpop.f32.mrf.mxu0
  %v6030 = vadd.f32 %v4934, %v6029
  %v6031 = vpop.f32.mrf.mxu0
  %6032 = vmatprep.mubr.bf16.mxu0 0
  %6033 = vmatmul.mubr.bf16.gmra.mxu0 %v5589
  %v6034 = vpop.f32.mrf.mxu0
  %v6035 = vadd.f32 %v4939, %v6034
  %v6036 = vpop.f32.mrf.mxu0
  %v6037 = vpop.f32.mrf.mxu0
  %v6038 = vadd.f32 %v4944, %v6037
  %v6039 = vpop.f32.mrf.mxu0
  %6040 = vmatprep.mubr.bf16.mxu0 0
  %6041 = vmatmul.mubr.bf16.gmra.mxu0 %v5592
  %v6042 = vpop.f32.mrf.mxu0
  %v6043 = vadd.f32 %v4949, %v6042
  %v6044 = vpop.f32.mrf.mxu0
  %v6045 = vpop.f32.mrf.mxu0
  %v6046 = vadd.f32 %v4954, %v6045
  %v6047 = vpop.f32.mrf.mxu0
  %6048 = vmatprep.mubr.bf16.mxu0 0
  %6049 = vmatmul.mubr.bf16.gmra.mxu0 %v5595
  %v6050 = vpop.f32.mrf.mxu0
  %v6051 = vadd.f32 %v4959, %v6050
  %v6052 = vpop.f32.mrf.mxu0
  %v6053 = vpop.f32.mrf.mxu0
  %v6054 = vadd.f32 %v4964, %v6053
  %v6055 = vpop.f32.mrf.mxu0
  %6056 = vmatprep.mubr.bf16.mxu0 0
  %6057 = vmatmul.mubr.bf16.gmra.mxu0 %v5598
  %v6058 = vpop.f32.mrf.mxu0
  %v6059 = vadd.f32 %v4969, %v6058
  %v6060 = vpop.f32.mrf.mxu0
  %v6061 = vpop.f32.mrf.mxu0
  %v6062 = vadd.f32 %v4974, %v6061
  %v6063 = vpop.f32.mrf.mxu0
  %6064 = vmatprep.mubr.bf16.mxu0 0
  %6065 = vmatmul.mubr.bf16.gmra.mxu0 %v5601
  %v6066 = vpop.f32.mrf.mxu0
  %v6067 = vadd.f32 %v4979, %v6066
  %v6068 = vpop.f32.mrf.mxu0
  %v6069 = vpop.f32.mrf.mxu0
  %v6070 = vadd.f32 %v4984, %v6069
  %v6071 = vpop.f32.mrf.mxu0
  %6072 = vmatprep.mubr.bf16.mxu0 0
  %6073 = vmatmul.mubr.bf16.gmra.mxu0 %v5604
  %v6074 = vpop.f32.mrf.mxu0
  %v6075 = vadd.f32 %v4989, %v6074
  %v6076 = vpop.f32.mrf.mxu0
  %v6077 = vpop.f32.mrf.mxu0
  %v6078 = vadd.f32 %v4994, %v6077
  %v6079 = vpop.f32.mrf.mxu0
  %6080 = vmatprep.mubr.bf16.mxu0 0
  %6081 = vmatmul.mubr.bf16.gmra.mxu0 %v5607
  %v6082 = vpop.f32.mrf.mxu0
  %v6083 = vadd.f32 %v4999, %v6082
  %v6084 = vpop.f32.mrf.mxu0
  %v6085 = vpop.f32.mrf.mxu0
  %v6086 = vadd.f32 %v5004, %v6085
  %v6087 = vpop.f32.mrf.mxu0
  %6088 = vmatprep.mubr.bf16.mxu0 0
  %6089 = vmatmul.mubr.bf16.gmra.mxu0 %v5610
  %v6090 = vpop.f32.mrf.mxu0
  %v6091 = vadd.f32 %v5009, %v6090
  %v6092 = vpop.f32.mrf.mxu0
  %v6093 = vpop.f32.mrf.mxu0
  %v6094 = vadd.f32 %v5014, %v6093
  %v6095 = vpop.f32.mrf.mxu0
  %6096 = vmatprep.mubr.bf16.mxu0 0
  %6097 = vmatmul.mubr.bf16.gmra.mxu0 %v5613
  %v6098 = vpop.f32.mrf.mxu0
  %v6099 = vadd.f32 %v5019, %v6098
  %v6100 = vpop.f32.mrf.mxu0
  %v6101 = vpop.f32.mrf.mxu0
  %v6102 = vadd.f32 %v5024, %v6101
  %v6103 = vpop.f32.mrf.mxu0
  %6104 = vmatprep.mubr.bf16.mxu0 0
  %6105 = vmatmul.mubr.bf16.gmra.mxu0 %v5616
  %v6106 = vpop.f32.mrf.mxu0
  %v6107 = vadd.f32 %v5029, %v6106
  %v6108 = vpop.f32.mrf.mxu0
  %v6109 = vpop.f32.mrf.mxu0
  %v6110 = vadd.f32 %v5034, %v6109
  %v6111 = vpop.f32.mrf.mxu0
  %6112 = vmatprep.mubr.bf16.mxu0 0
  %6113 = vmatmul.mubr.bf16.gmra.mxu0 %v5619
  %v6114 = vpop.f32.mrf.mxu0
  %v6115 = vadd.f32 %v5039, %v6114
  %v6116 = vpop.f32.mrf.mxu0
  %v6117 = vpop.f32.mrf.mxu0
  %v6118 = vadd.f32 %v5044, %v6117
  %v6119 = vpop.f32.mrf.mxu0
  %6120 = vmatprep.mubr.bf16.mxu0 0
  %6121 = vmatmul.mubr.bf16.gmra.mxu0 %v5622
  %v6122 = vpop.f32.mrf.mxu0
  %v6123 = vadd.f32 %v5049, %v6122
  %v6124 = vpop.f32.mrf.mxu0
  %v6125 = vpop.f32.mrf.mxu0
  %v6126 = vadd.f32 %v5054, %v6125
  %v6127 = vpop.f32.mrf.mxu0
  %6128 = vmatprep.mubr.bf16.mxu0 0
  %6129 = vmatmul.mubr.bf16.gmra.mxu0 %v5625
  %v6130 = vpop.f32.mrf.mxu0
  %v6131 = vadd.f32 %v5059, %v6130
  %v6132 = vpop.f32.mrf.mxu0
  %v6133 = vpop.f32.mrf.mxu0
  %v6134 = vadd.f32 %v5064, %v6133
  %v6135 = vpop.f32.mrf.mxu0
  %6136 = vmatprep.mubr.bf16.mxu0 0
  %6137 = vmatmul.mubr.bf16.gmra.mxu0 %v5628
  %v6138 = vpop.f32.mrf.mxu0
  %v6139 = vadd.f32 %v5069, %v6138
  %v6140 = vpop.f32.mrf.mxu0
  %v6141 = vpop.f32.mrf.mxu0
  %v6142 = vadd.f32 %v5074, %v6141
  %v6143 = vpop.f32.mrf.mxu0
  %6144 = vmatprep.mubr.bf16.mxu0 0
  %6145 = vmatmul.mubr.bf16.gmra.mxu0 %v5631
  %v6146 = vpop.f32.mrf.mxu0
  %v6147 = vadd.f32 %v5079, %v6146
  %v6148 = vpop.f32.mrf.mxu0
  %v6149 = vpop.f32.mrf.mxu0
  %v6150 = vadd.f32 %v5084, %v6149
  %v6151 = vpop.f32.mrf.mxu0
  %6152 = vmatprep.mubr.bf16.mxu0 0
  %6153 = vmatmul.mubr.bf16.gmra.mxu0 %v5634
  %v6154 = vpop.f32.mrf.mxu0
  %v6155 = vadd.f32 %v5089, %v6154
  %v6156 = vpop.f32.mrf.mxu0
  %v6157 = vpop.f32.mrf.mxu0
  %v6158 = vadd.f32 %v5094, %v6157
  %v6159 = vpop.f32.mrf.mxu0
  %6160 = vmatprep.mubr.bf16.mxu0 0
  %6161 = vmatmul.mubr.bf16.gmra.mxu0 %v5637
  %v6162 = vpop.f32.mrf.mxu0
  %v6163 = vadd.f32 %v5099, %v6162
  %v6164 = vpop.f32.mrf.mxu0
  %v6165 = vpop.f32.mrf.mxu0
  %v6166 = vadd.f32 %v5104, %v6165
  %v6167 = vpop.f32.mrf.mxu0
  %6168 = vmatprep.mubr.bf16.mxu0 0
  %6169 = vmatmul.mubr.bf16.gmra.mxu0 %v5640
  %v6170 = vpop.f32.mrf.mxu0
  %v6171 = vadd.f32 %v5109, %v6170
  %v6172 = vpop.f32.mrf.mxu0
  %v6173 = vpop.f32.mrf.mxu0
  %v6174 = vadd.f32 %v5114, %v6173
  %v6175 = vpop.f32.mrf.mxu0
  %6176 = vmatprep.mubr.bf16.mxu0 0
  %6177 = vmatmul.mubr.bf16.gmra.mxu0 %v5643
  %v6178 = vpop.f32.mrf.mxu0
  %v6179 = vadd.f32 %v5119, %v6178
  %v6180 = vpop.f32.mrf.mxu0
  %v6181 = vpop.f32.mrf.mxu0
  %v6182 = vadd.f32 %v5124, %v6181
  %v6183 = vpop.f32.mrf.mxu0
  %6184 = vmatprep.mubr.bf16.mxu0 0
  %6185 = vmatmul.mubr.bf16.gmra.mxu0 %v5646
  %v6186 = vpop.f32.mrf.mxu0
  %v6187 = vadd.f32 %v5129, %v6186
  %v6188 = vpop.f32.mrf.mxu0
  %v6189 = vpop.f32.mrf.mxu0
  %v6190 = vadd.f32 %v5134, %v6189
  %v6191 = vpop.f32.mrf.mxu0
  %6192 = vdwg.mxu0
  %v6193 = vmax.f32 %v5683, 0.0
  %v6194 = vmax.f32 %v5686, 0.0
  %v6195 = vmax.f32 %v5691, 0.0
  %v6196 = vmax.f32 %v5694, 0.0
  %v6197 = vmax.f32 %v5699, 0.0
  %v6198 = vmax.f32 %v5702, 0.0
  %v6199 = vmax.f32 %v5707, 0.0
  %v6200 = vmax.f32 %v5710, 0.0
  %v6201 = vmax.f32 %v5715, 0.0
  %v6202 = vmax.f32 %v5718, 0.0
  %v6203 = vmax.f32 %v5723, 0.0
  %v6204 = vmax.f32 %v5726, 0.0
  %v6205 = vmax.f32 %v5731, 0.0
  %v6206 = vmax.f32 %v5734, 0.0
  %v6207 = vmax.f32 %v5739, 0.0
  %v6208 = vmax.f32 %v5742, 0.0
  %v6209 = vmax.f32 %v5747, 0.0
  %v6210 = vmax.f32 %v5750, 0.0
  %v6211 = vmax.f32 %v5755, 0.0
  %v6212 = vmax.f32 %v5758, 0.0
  %v6213 = vmax.f32 %v5763, 0.0
  %v6214 = vmax.f32 %v5766, 0.0
  %v6215 = vmax.f32 %v5771, 0.0
  %v6216 = vmax.f32 %v5774, 0.0
  %v6217 = vmax.f32 %v5779, 0.0
  %v6218 = vmax.f32 %v5782, 0.0
  %v6219 = vmax.f32 %v5787, 0.0
  %v6220 = vmax.f32 %v5790, 0.0
  %v6221 = vmax.f32 %v5795, 0.0
  %v6222 = vmax.f32 %v5798, 0.0
  %v6223 = vmax.f32 %v5803, 0.0
  %v6224 = vmax.f32 %v5806, 0.0
  %v6225 = vmax.f32 %v5811, 0.0
  %v6226 = vmax.f32 %v5814, 0.0
  %v6227 = vmax.f32 %v5819, 0.0
  %v6228 = vmax.f32 %v5822, 0.0
  %v6229 = vmax.f32 %v5827, 0.0
  %v6230 = vmax.f32 %v5830, 0.0
  %v6231 = vmax.f32 %v5835, 0.0
  %v6232 = vmax.f32 %v5838, 0.0
  %v6233 = vmax.f32 %v5843, 0.0
  %v6234 = vmax.f32 %v5846, 0.0
  %v6235 = vmax.f32 %v5851, 0.0
  %v6236 = vmax.f32 %v5854, 0.0
  %v6237 = vmax.f32 %v5859, 0.0
  %v6238 = vmax.f32 %v5862, 0.0
  %v6239 = vmax.f32 %v5867, 0.0
  %v6240 = vmax.f32 %v5870, 0.0
  %v6241 = vmax.f32 %v5875, 0.0
  %v6242 = vmax.f32 %v5878, 0.0
  %v6243 = vmax.f32 %v5883, 0.0
  %v6244 = vmax.f32 %v5886, 0.0
  %v6245 = vmax.f32 %v5891, 0.0
  %v6246 = vmax.f32 %v5894, 0.0
  %v6247 = vmax.f32 %v5899, 0.0
  %v6248 = vmax.f32 %v5902, 0.0
  %v6249 = vmax.f32 %v5907, 0.0
  %v6250 = vmax.f32 %v5910, 0.0
  %v6251 = vmax.f32 %v5915, 0.0
  %v6252 = vmax.f32 %v5918, 0.0
  %v6253 = vmax.f32 %v5923, 0.0
  %v6254 = vmax.f32 %v5926, 0.0
  %v6255 = vmax.f32 %v5931, 0.0
  %v6256 = vmax.f32 %v5934, 0.0
  %v6257 = vmax.f32 %v5939, 0.0
  %v6258 = vmax.f32 %v5942, 0.0
  %v6259 = vmax.f32 %v5947, 0.0
  %v6260 = vmax.f32 %v5950, 0.0
  %v6261 = vmax.f32 %v5955, 0.0
  %v6262 = vmax.f32 %v5958, 0.0
  %v6263 = vmax.f32 %v5963, 0.0
  %v6264 = vmax.f32 %v5966, 0.0
  %v6265 = vmax.f32 %v5971, 0.0
  %v6266 = vmax.f32 %v5974, 0.0
  %v6267 = vmax.f32 %v5979, 0.0
  %v6268 = vmax.f32 %v5982, 0.0
  %v6269 = vmax.f32 %v5987, 0.0
  %v6270 = vmax.f32 %v5990, 0.0
  %v6271 = vmax.f32 %v5995, 0.0
  %v6272 = vmax.f32 %v5998, 0.0
  %v6273 = vmax.f32 %v6003, 0.0
  %v6274 = vmax.f32 %v6006, 0.0
  %v6275 = vmax.f32 %v6011, 0.0
  %v6276 = vmax.f32 %v6014, 0.0
  %v6277 = vmax.f32 %v6019, 0.0
  %v6278 = vmax.f32 %v6022, 0.0
  %v6279 = vmax.f32 %v6027, 0.0
  %v6280 = vmax.f32 %v6030, 0.0
  %v6281 = vmax.f32 %v6035, 0.0
  %v6282 = vmax.f32 %v6038, 0.0
  %v6283 = vmax.f32 %v6043, 0.0
  %v6284 = vmax.f32 %v6046, 0.0
  %v6285 = vmax.f32 %v6051, 0.0
  %v6286 = vmax.f32 %v6054, 0.0
  %v6287 = vmax.f32 %v6059, 0.0
  %v6288 = vmax.f32 %v6062, 0.0
  %v6289 = vmax.f32 %v6067, 0.0
  %v6290 = vmax.f32 %v6070, 0.0
  %v6291 = vmax.f32 %v6075, 0.0
  %v6292 = vmax.f32 %v6078, 0.0
  %v6293 = vmax.f32 %v6083, 0.0
  %v6294 = vmax.f32 %v6086, 0.0
  %v6295 = vmax.f32 %v6091, 0.0
  %v6296 = vmax.f32 %v6094, 0.0
  %v6297 = vmax.f32 %v6099, 0.0
  %v6298 = vmax.f32 %v6102, 0.0
  %v6299 = vmax.f32 %v6107, 0.0
  %v6300 = vmax.f32 %v6110, 0.0
  %v6301 = vmax.f32 %v6115, 0.0
  %v6302 = vmax.f32 %v6118, 0.0
  %v6303 = vmax.f32 %v6123, 0.0
  %v6304 = vmax.f32 %v6126, 0.0
  %v6305 = vmax.f32 %v6131, 0.0
  %v6306 = vmax.f32 %v6134, 0.0
  %v6307 = vmax.f32 %v6139, 0.0
  %v6308 = vmax.f32 %v6142, 0.0
  %v6309 = vmax.f32 %v6147, 0.0
  %v6310 = vmax.f32 %v6150, 0.0
  %v6311 = vmax.f32 %v6155, 0.0
  %v6312 = vmax.f32 %v6158, 0.0
  %v6313 = vmax.f32 %v6163, 0.0
  %v6314 = vmax.f32 %v6166, 0.0
  %v6315 = vmax.f32 %v6171, 0.0
  %v6316 = vmax.f32 %v6174, 0.0
  %v6317 = vmax.f32 %v6179, 0.0
  %v6318 = vmax.f32 %v6182, 0.0
  %v6319 = vmax.f32 %v6187, 0.0
  %v6320 = vmax.f32 %v6190, 0.0
  %v6321 = vld [vmem:[%s11] sm:$0xff]
  %v6322 = vld [vmem:[%s11 + $0x8] sm:$0xff]
  %v6323 = vpack.c.bf16 %v6194, %v6193
  %v6324 = vpack.c.bf16 %v6196, %v6195
  %v6325 = vpack.c.bf16 %v6198, %v6197
  %v6326 = vpack.c.bf16 %v6200, %v6199
  %v6327 = vpack.c.bf16 %v6202, %v6201
  %v6328 = vpack.c.bf16 %v6204, %v6203
  %v6329 = vpack.c.bf16 %v6206, %v6205
  %v6330 = vpack.c.bf16 %v6208, %v6207
  %v6331 = vpack.c.bf16 %v6210, %v6209
  %v6332 = vpack.c.bf16 %v6212, %v6211
  %v6333 = vpack.c.bf16 %v6214, %v6213
  %v6334 = vpack.c.bf16 %v6216, %v6215
  %v6335 = vpack.c.bf16 %v6218, %v6217
  %v6336 = vpack.c.bf16 %v6220, %v6219
  %v6337 = vpack.c.bf16 %v6222, %v6221
  %v6338 = vpack.c.bf16 %v6224, %v6223
  %v6339 = vpack.c.bf16 %v6226, %v6225
  %v6340 = vpack.c.bf16 %v6228, %v6227
  %v6341 = vpack.c.bf16 %v6230, %v6229
  %v6342 = vpack.c.bf16 %v6232, %v6231
  %v6343 = vpack.c.bf16 %v6234, %v6233
  %v6344 = vpack.c.bf16 %v6236, %v6235
  %v6345 = vpack.c.bf16 %v6238, %v6237
  %v6346 = vpack.c.bf16 %v6240, %v6239
  %v6347 = vpack.c.bf16 %v6242, %v6241
  %v6348 = vpack.c.bf16 %v6244, %v6243
  %v6349 = vpack.c.bf16 %v6246, %v6245
  %v6350 = vpack.c.bf16 %v6248, %v6247
  %v6351 = vpack.c.bf16 %v6250, %v6249
  %v6352 = vpack.c.bf16 %v6252, %v6251
  %v6353 = vpack.c.bf16 %v6254, %v6253
  %v6354 = vpack.c.bf16 %v6256, %v6255
  %v6355 = vpack.c.bf16 %v6258, %v6257
  %v6356 = vpack.c.bf16 %v6260, %v6259
  %v6357 = vpack.c.bf16 %v6262, %v6261
  %v6358 = vpack.c.bf16 %v6264, %v6263
  %v6359 = vpack.c.bf16 %v6266, %v6265
  %v6360 = vpack.c.bf16 %v6268, %v6267
  %v6361 = vpack.c.bf16 %v6270, %v6269
  %v6362 = vpack.c.bf16 %v6272, %v6271
  %v6363 = vpack.c.bf16 %v6274, %v6273
  %v6364 = vpack.c.bf16 %v6276, %v6275
  %v6365 = vpack.c.bf16 %v6278, %v6277
  %v6366 = vpack.c.bf16 %v6280, %v6279
  %v6367 = vpack.c.bf16 %v6282, %v6281
  %v6368 = vpack.c.bf16 %v6284, %v6283
  %v6369 = vpack.c.bf16 %v6286, %v6285
  %v6370 = vpack.c.bf16 %v6288, %v6287
  %v6371 = vpack.c.bf16 %v6290, %v6289
  %v6372 = vpack.c.bf16 %v6292, %v6291
  %v6373 = vpack.c.bf16 %v6294, %v6293
  %v6374 = vpack.c.bf16 %v6296, %v6295
  %v6375 = vpack.c.bf16 %v6298, %v6297
  %v6376 = vpack.c.bf16 %v6300, %v6299
  %v6377 = vpack.c.bf16 %v6302, %v6301
  %v6378 = vpack.c.bf16 %v6304, %v6303
  %v6379 = vpack.c.bf16 %v6306, %v6305
  %v6380 = vpack.c.bf16 %v6308, %v6307
  %v6381 = vpack.c.bf16 %v6310, %v6309
  %v6382 = vpack.c.bf16 %v6312, %v6311
  %v6383 = vpack.c.bf16 %v6314, %v6313
  %v6384 = vpack.c.bf16 %v6316, %v6315
  %v6385 = vpack.c.bf16 %v6318, %v6317
  %v6386 = vpack.c.bf16 %v6320, %v6319
  %v6387 = vld [vmem:[%s12] sm:$0xf]
  %6389 = vset.pattern.permute.xlu0 0
  %6390 = vperm.xlu0 %6389, %v6387
  %v6391 = vpop.permute.xlu0 %6390
  %v6395 = vcombine.high %v6321, %v6321
  %v6397 = vunpack.c.l.s4 1983009808
  %v6398 = vunpack.c.0.s8 %v6397
  %v6399 = vlaneseq
  %v6400 = vshrl.u32 %v6399, 7
  %v6401 = vsub.s32 %v6398, %v6400
  %v6402 = vrot.slane %v6321, %v6401
  %v6404 = vunpack.c.l.s4 1983009808
  %v6405 = vunpack.c.0.s8 %v6404
  %v6406 = vlaneseq
  %v6407 = vshrl.u32 %v6406, 7
  %v6408 = vsub.s32 %v6405, %v6407
  %v6409 = vrot.slane %v6395, %v6408
  %v6410 = vcombine.high %v6402, %v6402
  %v6411 = vcombine.high %v6409, %v6409
  %v6412 = vcombine.high %v6322, %v6322
  %v6414 = vunpack.c.l.s4 1983009808
  %v6415 = vunpack.c.0.s8 %v6414
  %v6416 = vlaneseq
  %v6417 = vshrl.u32 %v6416, 7
  %v6418 = vsub.s32 %v6415, %v6417
  %v6419 = vrot.slane %v6322, %v6418
  %v6421 = vunpack.c.l.s4 1983009808
  %v6422 = vunpack.c.0.s8 %v6421
  %v6423 = vlaneseq
  %v6424 = vshrl.u32 %v6423, 7
  %v6425 = vsub.s32 %v6422, %v6424
  %v6426 = vrot.slane %v6412, %v6425
  %v6427 = vcombine.high %v6419, %v6419
  %v6428 = vcombine.high %v6426, %v6426
  %6437 = vmatprep.subr.bf16.mxu0 0
  %6438 = vmatpush1.bf16.msra.mxu0 %v6330
  %6439 = vmatprep.subr.bf16.mxu0 0
  %6440 = vmatpush1.bf16.msra.mxu0 %v6329
  %6441 = vmatprep.subr.bf16.mxu0 0
  %6442 = vmatpush1.bf16.msra.mxu0 %v6328
  %6443 = vmatprep.subr.bf16.mxu0 0
  %6444 = vmatpush1.bf16.msra.mxu0 %v6327
  %6445 = vmatprep.subr.bf16.mxu0 0
  %6446 = vmatpush1.bf16.msra.mxu0 %v6326
  %6447 = vmatprep.subr.bf16.mxu0 0
  %6448 = vmatpush1.bf16.msra.mxu0 %v6325
  %6449 = vmatprep.subr.bf16.mxu0 0
  %6450 = vmatpush1.bf16.msra.mxu0 %v6324
  %6451 = vmatprep.subr.bf16.mxu0 0
  %6452 = vmatpush1.bf16.msra.mxu0 %v6323
  %6453 = vmatprep.subr.bf16.mxu0 0
  %6454 = vmatpush2.bf16.msra.mxu0 %v6338
  %6455 = vmatprep.subr.bf16.mxu0 0
  %6456 = vmatpush2.bf16.msra.mxu0 %v6337
  %6457 = vmatprep.subr.bf16.mxu0 0
  %6458 = vmatpush2.bf16.msra.mxu0 %v6336
  %6459 = vmatprep.subr.bf16.mxu0 0
  %6460 = vmatpush2.bf16.msra.mxu0 %v6335
  %6461 = vmatprep.subr.bf16.mxu0 0
  %6462 = vmatpush2.bf16.msra.mxu0 %v6334
  %6463 = vmatprep.subr.bf16.mxu0 0
  %6464 = vmatpush2.bf16.msra.mxu0 %v6333
  %6465 = vmatprep.subr.bf16.mxu0 0
  %6466 = vmatpush2.bf16.msra.mxu0 %v6332
  %6467 = vmatprep.subr.bf16.mxu0 0
  %6468 = vmatpush2.bf16.msra.mxu0 %v6331
  %6469 = vmatprep.mubr.bf16.mxu0 %v6410
  %6470 = vmatmul.mubr.bf16.gmra.mxu0 %v6402
  %v6471 = vpop.f32.mrf.mxu0
  %v6472 = vadd.f32 %v6391, %v6471
  %v6473 = vpop.f32.mrf.mxu0
  %v6474 = vpop.f32.mrf.mxu0
  %v6475 = vpop.f32.mrf.mxu0
  %6476 = vdwg.mxu0
  %6477 = vmatprep.subr.bf16.mxu0 0
  %6478 = vmatpush1.bf16.msra.mxu0 %v6346
  %6479 = vmatprep.subr.bf16.mxu0 0
  %6480 = vmatpush1.bf16.msra.mxu0 %v6345
  %6481 = vmatprep.subr.bf16.mxu0 0
  %6482 = vmatpush1.bf16.msra.mxu0 %v6344
  %6483 = vmatprep.subr.bf16.mxu0 0
  %6484 = vmatpush1.bf16.msra.mxu0 %v6343
  %6485 = vmatprep.subr.bf16.mxu0 0
  %6486 = vmatpush1.bf16.msra.mxu0 %v6342
  %6487 = vmatprep.subr.bf16.mxu0 0
  %6488 = vmatpush1.bf16.msra.mxu0 %v6341
  %6489 = vmatprep.subr.bf16.mxu0 0
  %6490 = vmatpush1.bf16.msra.mxu0 %v6340
  %6491 = vmatprep.subr.bf16.mxu0 0
  %6492 = vmatpush1.bf16.msra.mxu0 %v6339
  %6493 = vmatprep.subr.bf16.mxu0 0
  %6494 = vmatpush2.bf16.msra.mxu0 %v6354
  %6495 = vmatprep.subr.bf16.mxu0 0
  %6496 = vmatpush2.bf16.msra.mxu0 %v6353
  %6497 = vmatprep.subr.bf16.mxu0 0
  %6498 = vmatpush2.bf16.msra.mxu0 %v6352
  %6499 = vmatprep.subr.bf16.mxu0 0
  %6500 = vmatpush2.bf16.msra.mxu0 %v6351
  %6501 = vmatprep.subr.bf16.mxu0 0
  %6502 = vmatpush2.bf16.msra.mxu0 %v6350
  %6503 = vmatprep.subr.bf16.mxu0 0
  %6504 = vmatpush2.bf16.msra.mxu0 %v6349
  %6505 = vmatprep.subr.bf16.mxu0 0
  %6506 = vmatpush2.bf16.msra.mxu0 %v6348
  %6507 = vmatprep.subr.bf16.mxu0 0
  %6508 = vmatpush2.bf16.msra.mxu0 %v6347
  %6509 = vmatprep.mubr.bf16.mxu0 %v6411
  %6510 = vmatmul.mubr.bf16.gmra.mxu0 %v6409
  %v6511 = vpop.f32.mrf.mxu0
  %v6512 = vadd.f32 %v6472, %v6511
  %v6513 = vpop.f32.mrf.mxu0
  %v6514 = vpop.f32.mrf.mxu0
  %v6515 = vpop.f32.mrf.mxu0
  %6516 = vdwg.mxu0
  %6517 = vmatprep.subr.bf16.mxu0 0
  %6518 = vmatpush1.bf16.msra.mxu0 %v6362
  %6519 = vmatprep.subr.bf16.mxu0 0
  %6520 = vmatpush1.bf16.msra.mxu0 %v6361
  %6521 = vmatprep.subr.bf16.mxu0 0
  %6522 = vmatpush1.bf16.msra.mxu0 %v6360
  %6523 = vmatprep.subr.bf16.mxu0 0
  %6524 = vmatpush1.bf16.msra.mxu0 %v6359
  %6525 = vmatprep.subr.bf16.mxu0 0
  %6526 = vmatpush1.bf16.msra.mxu0 %v6358
  %6527 = vmatprep.subr.bf16.mxu0 0
  %6528 = vmatpush1.bf16.msra.mxu0 %v6357
  %6529 = vmatprep.subr.bf16.mxu0 0
  %6530 = vmatpush1.bf16.msra.mxu0 %v6356
  %6531 = vmatprep.subr.bf16.mxu0 0
  %6532 = vmatpush1.bf16.msra.mxu0 %v6355
  %6533 = vmatprep.subr.bf16.mxu0 0
  %6534 = vmatpush2.bf16.msra.mxu0 %v6370
  %6535 = vmatprep.subr.bf16.mxu0 0
  %6536 = vmatpush2.bf16.msra.mxu0 %v6369
  %6537 = vmatprep.subr.bf16.mxu0 0
  %6538 = vmatpush2.bf16.msra.mxu0 %v6368
  %6539 = vmatprep.subr.bf16.mxu0 0
  %6540 = vmatpush2.bf16.msra.mxu0 %v6367
  %6541 = vmatprep.subr.bf16.mxu0 0
  %6542 = vmatpush2.bf16.msra.mxu0 %v6366
  %6543 = vmatprep.subr.bf16.mxu0 0
  %6544 = vmatpush2.bf16.msra.mxu0 %v6365
  %6545 = vmatprep.subr.bf16.mxu0 0
  %6546 = vmatpush2.bf16.msra.mxu0 %v6364
  %6547 = vmatprep.subr.bf16.mxu0 0
  %6548 = vmatpush2.bf16.msra.mxu0 %v6363
  %6549 = vmatprep.mubr.bf16.mxu0 %v6427
  %6550 = vmatmul.mubr.bf16.gmra.mxu0 %v6419
  %v6551 = vpop.f32.mrf.mxu0
  %v6552 = vadd.f32 %v6512, %v6551
  %v6553 = vpop.f32.mrf.mxu0
  %v6554 = vpop.f32.mrf.mxu0
  %v6555 = vpop.f32.mrf.mxu0
  %6556 = vdwg.mxu0
  %6557 = vmatprep.subr.bf16.mxu0 0
  %6558 = vmatpush1.bf16.msra.mxu0 %v6378
  %6559 = vmatprep.subr.bf16.mxu0 0
  %6560 = vmatpush1.bf16.msra.mxu0 %v6377
  %6561 = vmatprep.subr.bf16.mxu0 0
  %6562 = vmatpush1.bf16.msra.mxu0 %v6376
  %6563 = vmatprep.subr.bf16.mxu0 0
  %6564 = vmatpush1.bf16.msra.mxu0 %v6375
  %6565 = vmatprep.subr.bf16.mxu0 0
  %6566 = vmatpush1.bf16.msra.mxu0 %v6374
  %6567 = vmatprep.subr.bf16.mxu0 0
  %6568 = vmatpush1.bf16.msra.mxu0 %v6373
  %6569 = vmatprep.subr.bf16.mxu0 0
  %6570 = vmatpush1.bf16.msra.mxu0 %v6372
  %6571 = vmatprep.subr.bf16.mxu0 0
  %6572 = vmatpush1.bf16.msra.mxu0 %v6371
  %6573 = vmatprep.subr.bf16.mxu0 0
  %6574 = vmatpush2.bf16.msra.mxu0 %v6386
  %6575 = vmatprep.subr.bf16.mxu0 0
  %6576 = vmatpush2.bf16.msra.mxu0 %v6385
  %6577 = vmatprep.subr.bf16.mxu0 0
  %6578 = vmatpush2.bf16.msra.mxu0 %v6384
  %6579 = vmatprep.subr.bf16.mxu0 0
  %6580 = vmatpush2.bf16.msra.mxu0 %v6383
  %6581 = vmatprep.subr.bf16.mxu0 0
  %6582 = vmatpush2.bf16.msra.mxu0 %v6382
  %6583 = vmatprep.subr.bf16.mxu0 0
  %6584 = vmatpush2.bf16.msra.mxu0 %v6381
  %6585 = vmatprep.subr.bf16.mxu0 0
  %6586 = vmatpush2.bf16.msra.mxu0 %v6380
  %6587 = vmatprep.subr.bf16.mxu0 0
  %6588 = vmatpush2.bf16.msra.mxu0 %v6379
  %6589 = vmatprep.mubr.bf16.mxu0 %v6428
  %6590 = vmatmul.mubr.bf16.gmra.mxu0 %v6426
  %v6591 = vpop.f32.mrf.mxu0
  %v6592 = vadd.f32 %v6552, %v6591
  %v6593 = vpop.f32.mrf.mxu0
  %v6594 = vpop.f32.mrf.mxu0
  %v6595 = vpop.f32.mrf.mxu0
  %6596 = vdwg.mxu0
  %vm6597 = vcmask 11264
  %6598 = vst.msk [vmem:[%s13] sm:$0xf] %vm6597, %v6592
  // Predicated region
  $region54: #{convnet_forward.1} parent=0 // pred_check
    _
  $region55: #{convnet_forward.1} parent=0 // pred_check_branch
    %6600 = sbr.rel (0) target = $region57
  $region56: #{convnet_forward.1} parent=0 // pred_region
    _
  $region57: #{convnet_forward.1} parent=0 // pred_fallthru
    _
  // Predicated region
  $region58: #{convnet_forward.1} parent=0 // pred_check
    _
  $region59: #{convnet_forward.1} parent=0 // pred_check_branch
    %6602 = sbr.rel (0) target = $region61
  $region60: #{convnet_forward.1} parent=0 // pred_region
    _
  $region61: #{convnet_forward.1} parent=0 // pred_fallthru
    _

</llo_original>
